<compile_context>
chip_gen: v6e
topology: v6e:2x2x1
jax: 0.10.0
libtpu: 0.0.40
codegen_flags: <defaults>
</compile_context>

<pallas_src>
import functools

import jax
import jax.numpy as jnp
import numpy as np
from jax import lax
from jax.experimental import pallas as pl
from jax.experimental.pallas import tpu as pltpu


# ---------------------------------------------------------------------------
# In-kernel helpers
# ---------------------------------------------------------------------------

def _silu(x):
    return x * jax.nn.sigmoid(x)


def _layernorm_f32(x, g, b, eps=1e-5):
    mu = jnp.mean(x, axis=-1, keepdims=True)
    var = jnp.mean(jnp.square(x - mu), axis=-1, keepdims=True)
    return (x - mu) * lax.rsqrt(var + eps) * g + b


# ---------------------------------------------------------------------------
# Pallas kernels
# ---------------------------------------------------------------------------

def _mm_kernel(x_ref, w_ref, b_ref, o_ref, *, act):
    """o = act(x @ w + b). x/w in bf16, accumulate f32."""
    y = jnp.dot(x_ref[...], w_ref[...], preferred_element_type=jnp.float32)
    y = y + b_ref[...]
    if act == "silu":
        y = _silu(y)
    o_ref[...] = y.astype(o_ref.dtype)


def _ln_mm_kernel(x_ref, g_ref, beta_ref, w_ref, b_ref, o_ref, *, act):
    """o = act(LayerNorm(x) @ w + b). LN in f32, matmul operands bf16."""
    xn = _layernorm_f32(x_ref[...].astype(jnp.float32), g_ref[...], beta_ref[...])
    y = jnp.dot(xn.astype(w_ref.dtype), w_ref[...], preferred_element_type=jnp.float32)
    y = y + b_ref[...]
    if act == "silu":
        y = _silu(y)
    o_ref[...] = y.astype(o_ref.dtype)


def _ln_mm_glu_kernel(x_ref, g_ref, beta_ref, wa_ref, ba_ref, wb_ref, bb_ref, o_ref):
    """o = (LN(x) @ wa + ba) * sigmoid(LN(x) @ wb + bb)  (pointwise conv + GLU)."""
    xn = _layernorm_f32(x_ref[...].astype(jnp.float32), g_ref[...], beta_ref[...])
    xn_c = xn.astype(wa_ref.dtype)
    ya = jnp.dot(xn_c, wa_ref[...], preferred_element_type=jnp.float32) + ba_ref[...]
    yb = jnp.dot(xn_c, wb_ref[...], preferred_element_type=jnp.float32) + bb_ref[...]
    o_ref[...] = (ya * jax.nn.sigmoid(yb)).astype(o_ref.dtype)


def _mm_res_kernel(x_ref, w_ref, b_ref, r_ref, o_ref, *, scale):
    """o = r + scale * (x @ w + b)   (second linear / out-proj fused with residual)."""
    y = jnp.dot(x_ref[...], w_ref[...], preferred_element_type=jnp.float32)
    y = y + b_ref[...]
    o_ref[...] = (r_ref[...].astype(jnp.float32) + scale * y).astype(o_ref.dtype)


def _ln_kernel(x_ref, g_ref, b_ref, o_ref):
    o_ref[...] = _layernorm_f32(
        x_ref[...].astype(jnp.float32), g_ref[...], b_ref[...]
    ).astype(o_ref.dtype)


def _attn_kernel(q_ref, k_ref, v_ref, bias_ref, o_ref, *, scale):
    """One (batch, head): softmax(q k^T * scale + key_bias) v."""
    q = q_ref[0, 0]                       # (T, dh) bf16
    k = k_ref[0, 0]
    v = v_ref[0, 0]
    s = lax.dot_general(q, k, (((1,), (1,)), ((), ())),
                        preferred_element_type=jnp.float32) * scale
    s = s + bias_ref[0]                   # (1, T) key-padding additive bias
    s = s - jnp.max(s, axis=-1, keepdims=True)
    p = jnp.exp(s)
    p = p / jnp.sum(p, axis=-1, keepdims=True)
    o = jnp.dot(p.astype(v.dtype), v, preferred_element_type=jnp.float32)
    o_ref[0, 0] = o.astype(o_ref.dtype)


def _dwconv_bn_silu_kernel(x_ref, w_ref, b_ref, scale_ref, shift_ref, o_ref):
    """Depthwise conv over time (+bias) -> BatchNorm(eval affine) -> SiLU."""
    t_out = o_ref.shape[1]
    d = o_ref.shape[2]
    k = x_ref.shape[1] - t_out + 1
    w = w_ref[...].astype(jnp.float32)    # (K, D)
    acc = jnp.zeros((t_out, d), jnp.float32)
    for tap in range(k):                  # K is small and static -> unrolled
        acc = acc + x_ref[0, tap:tap + t_out, :].astype(jnp.float32) * w[tap:tap + 1, :]
    y = acc + b_ref[...]
    y = y * scale_ref[...] + shift_ref[...]
    o_ref[0] = _silu(y).astype(o_ref.dtype)


# ---------------------------------------------------------------------------
# pallas_call wrappers
# ---------------------------------------------------------------------------

def _choose_tm(m):
    for tm in (512, 256, 128):
        if m % tm == 0:
            return tm
    return m  # small M (kept as a single block; M is a multiple of 8)


def _matmul(x, w, b, *, act, out_dtype):
    m, k = x.shape
    n = w.shape[1]
    tm = _choose_tm(m)
    return pl.pallas_call(
        functools.partial(_mm_kernel, act=act),
        out_shape=jax.ShapeDtypeStruct((m, n), out_dtype),
        grid_spec=pltpu.PrefetchScalarGridSpec(
            num_scalar_prefetch=0,
            grid=(m // tm,),
            in_specs=[
                pl.BlockSpec((tm, k), lambda i: (i, 0)),
                pl.BlockSpec((k, n), lambda i: (0, 0)),
                pl.BlockSpec((1, n), lambda i: (0, 0)),
            ],
            out_specs=pl.BlockSpec((tm, n), lambda i: (i, 0)),
        ),
        compiler_params=pltpu.CompilerParams(dimension_semantics=("parallel",)),
    )(x, w, b.reshape(1, n).astype(jnp.float32))


def _ln_matmul(x, g, beta, w, b, *, act, out_dtype):
    m, d = x.shape
    n = w.shape[1]
    tm = _choose_tm(m)
    return pl.pallas_call(
        functools.partial(_ln_mm_kernel, act=act),
        out_shape=jax.ShapeDtypeStruct((m, n), out_dtype),
        grid_spec=pltpu.PrefetchScalarGridSpec(
            num_scalar_prefetch=0,
            grid=(m // tm,),
            in_specs=[
                pl.BlockSpec((tm, d), lambda i: (i, 0)),
                pl.BlockSpec((1, d), lambda i: (0, 0)),
                pl.BlockSpec((1, d), lambda i: (0, 0)),
                pl.BlockSpec((d, n), lambda i: (0, 0)),
                pl.BlockSpec((1, n), lambda i: (0, 0)),
            ],
            out_specs=pl.BlockSpec((tm, n), lambda i: (i, 0)),
        ),
        compiler_params=pltpu.CompilerParams(dimension_semantics=("parallel",)),
    )(x,
      g.reshape(1, d).astype(jnp.float32),
      beta.reshape(1, d).astype(jnp.float32),
      w,
      b.reshape(1, n).astype(jnp.float32))


def _ln_matmul_glu(x, g, beta, wa, ba, wb, bb, *, out_dtype):
    m, d = x.shape
    n = wa.shape[1]
    tm = _choose_tm(m)
    return pl.pallas_call(
        _ln_mm_glu_kernel,
        out_shape=jax.ShapeDtypeStruct((m, n), out_dtype),
        grid_spec=pltpu.PrefetchScalarGridSpec(
            num_scalar_prefetch=0,
            grid=(m // tm,),
            in_specs=[
                pl.BlockSpec((tm, d), lambda i: (i, 0)),
                pl.BlockSpec((1, d), lambda i: (0, 0)),
                pl.BlockSpec((1, d), lambda i: (0, 0)),
                pl.BlockSpec((d, n), lambda i: (0, 0)),
                pl.BlockSpec((1, n), lambda i: (0, 0)),
                pl.BlockSpec((d, n), lambda i: (0, 0)),
                pl.BlockSpec((1, n), lambda i: (0, 0)),
            ],
            out_specs=pl.BlockSpec((tm, n), lambda i: (i, 0)),
        ),
        compiler_params=pltpu.CompilerParams(dimension_semantics=("parallel",)),
    )(x,
      g.reshape(1, d).astype(jnp.float32),
      beta.reshape(1, d).astype(jnp.float32),
      wa, ba.reshape(1, n).astype(jnp.float32),
      wb, bb.reshape(1, n).astype(jnp.float32))


def _matmul_residual(x, w, b, res, *, scale, out_dtype):
    m, k = x.shape
    n = w.shape[1]
    tm = _choose_tm(m)
    return pl.pallas_call(
        functools.partial(_mm_res_kernel, scale=scale),
        out_shape=jax.ShapeDtypeStruct((m, n), out_dtype),
        grid_spec=pltpu.PrefetchScalarGridSpec(
            num_scalar_prefetch=0,
            grid=(m // tm,),
            in_specs=[
                pl.BlockSpec((tm, k), lambda i: (i, 0)),
                pl.BlockSpec((k, n), lambda i: (0, 0)),
                pl.BlockSpec((1, n), lambda i: (0, 0)),
                pl.BlockSpec((tm, n), lambda i: (i, 0)),
            ],
            out_specs=pl.BlockSpec((tm, n), lambda i: (i, 0)),
        ),
        compiler_params=pltpu.CompilerParams(dimension_semantics=("parallel",)),
    )(x, w, b.reshape(1, n).astype(jnp.float32), res)


def _layernorm_op(x, g, b):
    m, d = x.shape
    tm = _choose_tm(m)
    return pl.pallas_call(
        _ln_kernel,
        out_shape=jax.ShapeDtypeStruct((m, d), jnp.float32),
        grid_spec=pltpu.PrefetchScalarGridSpec(
            num_scalar_prefetch=0,
            grid=(m // tm,),
            in_specs=[
                pl.BlockSpec((tm, d), lambda i: (i, 0)),
                pl.BlockSpec((1, d), lambda i: (0, 0)),
                pl.BlockSpec((1, d), lambda i: (0, 0)),
            ],
            out_specs=pl.BlockSpec((tm, d), lambda i: (i, 0)),
        ),
        compiler_params=pltpu.CompilerParams(dimension_semantics=("parallel",)),
    )(x, g.reshape(1, d).astype(jnp.float32), b.reshape(1, d).astype(jnp.float32))


def _attention(q, k, v, bias, *, scale, out_dtype):
    bsz, h, t, dh = q.shape
    return pl.pallas_call(
        functools.partial(_attn_kernel, scale=scale),
        out_shape=jax.ShapeDtypeStruct((bsz, h, t, dh), out_dtype),
        grid_spec=pltpu.PrefetchScalarGridSpec(
            num_scalar_prefetch=0,
            grid=(bsz, h),
            in_specs=[
                pl.BlockSpec((1, 1, t, dh), lambda b, hh: (b, hh, 0, 0)),
                pl.BlockSpec((1, 1, t, dh), lambda b, hh: (b, hh, 0, 0)),
                pl.BlockSpec((1, 1, t, dh), lambda b, hh: (b, hh, 0, 0)),
                pl.BlockSpec((1, 1, t), lambda b, hh: (b, 0, 0)),
            ],
            out_specs=pl.BlockSpec((1, 1, t, dh), lambda b, hh: (b, hh, 0, 0)),
        ),
        compiler_params=pltpu.CompilerParams(
            dimension_semantics=("parallel", "parallel")),
    )(q, k, v, bias)


def _dwconv_bn_silu(x_pad, w_dw, b_dw, bn_scale, bn_shift, *, t_out, out_dtype):
    bsz, t_pad, d = x_pad.shape
    kk = w_dw.shape[0]
    return pl.pallas_call(
        _dwconv_bn_silu_kernel,
        out_shape=jax.ShapeDtypeStruct((bsz, t_out, d), out_dtype),
        grid_spec=pltpu.PrefetchScalarGridSpec(
            num_scalar_prefetch=0,
            grid=(bsz,),
            in_specs=[
                pl.BlockSpec((1, t_pad, d), lambda b: (b, 0, 0)),
                pl.BlockSpec((kk, d), lambda b: (0, 0)),
                pl.BlockSpec((1, d), lambda b: (0, 0)),
                pl.BlockSpec((1, d), lambda b: (0, 0)),
                pl.BlockSpec((1, d), lambda b: (0, 0)),
            ],
            out_specs=pl.BlockSpec((1, t_out, d), lambda b: (b, 0, 0)),
        ),
        compiler_params=pltpu.CompilerParams(dimension_semantics=("parallel",)),
    )(x_pad, w_dw.astype(jnp.float32), b_dw.reshape(1, d).astype(jnp.float32),
      bn_scale.reshape(1, d).astype(jnp.float32),
      bn_shift.reshape(1, d).astype(jnp.float32))


# ---------------------------------------------------------------------------
# Full ConformerEncoder forward
# ---------------------------------------------------------------------------

@functools.partial(jax.jit, static_argnums=(3,))
def _conformer_forward_jit(x, lengths, params, num_heads):
    BF = jnp.bfloat16
    B, T, c_in = x.shape
    D = params["sub_w"].shape[0]
    H = num_heads
    dh = D // H
    M = B * T
    assert D % H == 0
    assert T % 8 == 0 and M % 8 == 0  # TODO(synk): pad/mask ragged T

    # ---- subsample Conv1d (kernel k, same padding) as im2col + one matmul ----
    k_sub = params["sub_w"].shape[2]
    pad_s = k_sub // 2
    xp = jnp.pad(x, ((0, 0), (pad_s, pad_s), (0, 0)))
    cols = jnp.concatenate([xp[:, i:i + T, :] for i in range(k_sub)], axis=-1)
    cols2 = cols.reshape(M, k_sub * c_in).astype(BF)
    w_sub = jnp.transpose(params["sub_w"], (2, 1, 0)).reshape(k_sub * c_in, D).astype(BF)
    h = _matmul(cols2, w_sub, params["sub_b"], act="none", out_dtype=BF)

    # ---- linear_layer ----
    xs = _matmul(h, jnp.transpose(params["lin_w"]).astype(BF), params["lin_b"],
                 act="none", out_dtype=jnp.float32)          # f32 residual stream

    # key-padding additive bias for attention: 0 valid, -1e30 padded
    valid = jnp.arange(T)[None, :] < lengths[:, None]
    attn_bias = jnp.where(valid, 0.0, -1e30).astype(jnp.float32)[:, None, :]

    for lp in params["layers"]:
        # ---------------- FFN1 (half-step) ----------------
        f = lp["ffn1"]
        hid = _ln_matmul(xs, f["ln_g"], f["ln_b"],
                         jnp.transpose(f["w1"]).astype(BF), f["b1"],
                         act="silu", out_dtype=BF)
        xs = _matmul_residual(hid, jnp.transpose(f["w2"]).astype(BF), f["b2"],
                              xs, scale=0.5, out_dtype=jnp.float32)

        # ---------------- multi-head self-attention ----------------
        a = lp["attn"]
        qkv = _ln_matmul(xs, a["ln_g"], a["ln_b"],
                         jnp.transpose(a["w_qkv"]).astype(BF), a["b_qkv"],
                         act="none", out_dtype=BF)           # [M, 3D]
        q, k, v = jnp.split(qkv.reshape(B, T, 3 * D), 3, axis=-1)

        def to_heads(t):
            return t.reshape(B, T, H, dh).transpose(0, 2, 1, 3)   # [B, H, T, dh]

        ao = _attention(to_heads(q), to_heads(k), to_heads(v), attn_bias,
                        scale=float(1.0 / np.sqrt(dh)), out_dtype=BF)
        ao = ao.transpose(0, 2, 1, 3).reshape(M, D)
        xs = _matmul_residual(ao, jnp.transpose(a["w_out"]).astype(BF), a["b_out"],
                              xs, scale=1.0, out_dtype=jnp.float32)

        # ---------------- convolution module ----------------
        c = lp["conv"]
        w_pw1 = c["pw1_w"][:, :, 0]                               # [2D, D]
        wa = jnp.transpose(w_pw1[:D]).astype(BF)
        wb = jnp.transpose(w_pw1[D:]).astype(BF)
        glu = _ln_matmul_glu(xs, c["ln_g"], c["ln_b"],
                             wa, c["pw1_b"][:D], wb, c["pw1_b"][D:],
                             out_dtype=BF)                        # [M, D]
        k_dw = c["dw_w"].shape[2]
        pad_d = (k_dw - 1) // 2
        gpad = jnp.pad(glu.reshape(B, T, D), ((0, 0), (pad_d, pad_d), (0, 0)))
        w_dw = jnp.transpose(c["dw_w"][:, 0, :])                  # [K, D]
        bn_scale = c["bn_g"] * lax.rsqrt(c["bn_var"] + 1e-5)
        bn_shift = c["bn_b"] - c["bn_mean"] * bn_scale
        dwo = _dwconv_bn_silu(gpad, w_dw, c["dw_b"], bn_scale, bn_shift,
                              t_out=T, out_dtype=BF)              # [B, T, D]
        xs = _matmul_residual(dwo.reshape(M, D),
                              jnp.transpose(c["pw2_w"][:, :, 0]).astype(BF),
                              c["pw2_b"], xs, scale=1.0, out_dtype=jnp.float32)

        # ---------------- FFN2 (half-step) ----------------
        f = lp["ffn2"]
        hid = _ln_matmul(xs, f["ln_g"], f["ln_b"],
                         jnp.transpose(f["w1"]).astype(BF), f["b1"],
                         act="silu", out_dtype=BF)
        xs = _matmul_residual(hid, jnp.transpose(f["w2"]).astype(BF), f["b2"],
                              xs, scale=0.5, out_dtype=jnp.float32)

        # ---------------- final layer norm ----------------
        xs = _layernorm_op(xs, lp["final_ln_g"], lp["final_ln_b"])

    return xs.reshape(B, T, D)


def conformer_encoder_forward(x, lengths, params, num_heads):
    # PyTorch: x = x[:, :torch.max(lengths), :]  (host scalar slice)
    t_max = int(jax.device_get(jnp.max(lengths)))
    x = x[:, :t_max, :]
    return _conformer_forward_jit(x, lengths, params, num_heads)


# ---------------------------------------------------------------------------
# Pure-JAX float32 reference (mirrors the PyTorch module, eval mode)
# ---------------------------------------------------------------------------

def _ln_ref(x, g, b, eps=1e-5):
    mu = jnp.mean(x, axis=-1, keepdims=True)
    var = jnp.mean(jnp.square(x - mu), axis=-1, keepdims=True)
    return (x - mu) / jnp.sqrt(var + eps) * g + b


def _reference_forward(x, lengths, params, num_heads):
    t_max = int(jax.device_get(jnp.max(lengths)))
    x = x[:, :t_max, :]
    B, T, _ = x.shape
    D = params["sub_w"].shape[0]
    k_sub = params["sub_w"].shape[2]

    xp = jnp.pad(x, ((0, 0), (k_sub // 2, k_sub // 2), (0, 0)))
    cols = jnp.stack([xp[:, i:i + T, :] for i in range(k_sub)], axis=-1)
    h = jnp.einsum("btck,ock->bto", cols, params["sub_w"]) + params["sub_b"]
    h = h @ params["lin_w"].T + params["lin_b"]

    valid = jnp.arange(T)[None, :] < lengths[:, None]
    H = num_heads
    dh = D // H

    for lp in params["layers"]:
        f = lp["ffn1"]
        y = _ln_ref(h, f["ln_g"], f["ln_b"])
        y = _silu(y @ f["w1"].T + f["b1"]) @ f["w2"].T + f["b2"]
        h = h + 0.5 * y

        a = lp["attn"]
        y = _ln_ref(h, a["ln_g"], a["ln_b"])
        qkv = y @ a["w_qkv"].T + a["b_qkv"]
        q, k, v = jnp.split(qkv, 3, axis=-1)

        def heads(t):
            return t.reshape(B, T, H, dh).transpose(0, 2, 1, 3)

        q, k, v = heads(q), heads(k), heads(v)
        s = jnp.einsum("bhqd,bhkd->bhqk", q, k) / np.sqrt(dh)
        s = jnp.where(valid[:, None, None, :], s, -1e30)
        p = jax.nn.softmax(s, axis=-1)
        o = jnp.einsum("bhqk,bhkd->bhqd", p, v).transpose(0, 2, 1, 3).reshape(B, T, D)
        h = h + (o @ a["w_out"].T + a["b_out"])

        c = lp["conv"]
        y = _ln_ref(h, c["ln_g"], c["ln_b"])
        y = y @ c["pw1_w"][:, :, 0].T + c["pw1_b"]
        y = y[..., :D] * jax.nn.sigmoid(y[..., D:])
        k_dw = c["dw_w"].shape[2]
        pad_d = (k_dw - 1) // 2
        yp = jnp.pad(y, ((0, 0), (pad_d, pad_d), (0, 0)))
        y = sum(yp[:, i:i + T, :] * c["dw_w"][:, 0, i] for i in range(k_dw)) + c["dw_b"]
        scale = c["bn_g"] / jnp.sqrt(c["bn_var"] + 1e-5)
        y = (y - c["bn_mean"]) * scale + c["bn_b"]
        y = _silu(y)
        y = y @ c["pw2_w"][:, :, 0].T + c["pw2_b"]
        h = h + y

        f = lp["ffn2"]
        y = _ln_ref(h, f["ln_g"], f["ln_b"])
        y = _silu(y @ f["w1"].T + f["b1"]) @ f["w2"].T + f["b2"]
        h = h + 0.5 * y

        h = _ln_ref(h, lp["final_ln_g"], lp["final_ln_b"])
    return h


# ---------------------------------------------------------------------------
# Parameter construction (PyTorch-style init, deterministic)
# ---------------------------------------------------------------------------

def _uniform(key, shape, bound):
    return jax.random.uniform(key, shape, jnp.float32, -bound, bound)


def init_params(key, input_dim, D, ffn_dim, k_conv, num_layers):
    keys = iter(jax.random.split(key, 512))

    def nk():
        return next(keys)

    p = {}
    b = 1.0 / np.sqrt(input_dim * k_conv)
    p["sub_w"] = _uniform(nk(), (D, input_dim, k_conv), b)
    p["sub_b"] = _uniform(nk(), (D,), b)
    b = 1.0 / np.sqrt(D)
    p["lin_w"] = _uniform(nk(), (D, D), b)
    p["lin_b"] = _uniform(nk(), (D,), b)

    layers = []
    for _ in range(num_layers):
        l = {}
        for name in ("ffn1", "ffn2"):
            l[name] = {
                "ln_g": 1.0 + 0.1 * _uniform(nk(), (D,), 1.0),
                "ln_b": 0.1 * _uniform(nk(), (D,), 1.0),
                "w1": _uniform(nk(), (ffn_dim, D), 1.0 / np.sqrt(D)),
                "b1": _uniform(nk(), (ffn_dim,), 1.0 / np.sqrt(D)),
                "w2": _uniform(nk(), (D, ffn_dim), 1.0 / np.sqrt(ffn_dim)),
                "b2": _uniform(nk(), (D,), 1.0 / np.sqrt(ffn_dim)),
            }
        l["attn"] = {
            "ln_g": 1.0 + 0.1 * _uniform(nk(), (D,), 1.0),
            "ln_b": 0.1 * _uniform(nk(), (D,), 1.0),
            "w_qkv": _uniform(nk(), (3 * D, D), 1.0 / np.sqrt(D)),
            "b_qkv": _uniform(nk(), (3 * D,), 1.0 / np.sqrt(D)),
            "w_out": _uniform(nk(), (D, D), 1.0 / np.sqrt(D)),
            "b_out": _uniform(nk(), (D,), 1.0 / np.sqrt(D)),
        }
        l["conv"] = {
            "ln_g": 1.0 + 0.1 * _uniform(nk(), (D,), 1.0),
            "ln_b": 0.1 * _uniform(nk(), (D,), 1.0),
            "pw1_w": _uniform(nk(), (2 * D, D, 1), 1.0 / np.sqrt(D)),
            "pw1_b": _uniform(nk(), (2 * D,), 1.0 / np.sqrt(D)),
            "dw_w": _uniform(nk(), (D, 1, k_conv), 1.0 / np.sqrt(k_conv)),
            "dw_b": _uniform(nk(), (D,), 1.0 / np.sqrt(k_conv)),
            "bn_g": 1.0 + 0.1 * _uniform(nk(), (D,), 1.0),
            "bn_b": 0.1 * _uniform(nk(), (D,), 1.0),
            "bn_mean": 0.1 * _uniform(nk(), (D,), 1.0),
            "bn_var": 1.0 + 0.5 * _uniform(nk(), (D,), 1.0),
            "pw2_w": _uniform(nk(), (D, D, 1), 1.0 / np.sqrt(D)),
            "pw2_b": _uniform(nk(), (D,), 1.0 / np.sqrt(D)),
        }
        l["final_ln_g"] = 1.0 + 0.1 * _uniform(nk(), (D,), 1.0)
        l["final_ln_b"] = 0.1 * _uniform(nk(), (D,), 1.0)
        layers.append(l)
    p["layers"] = layers
    return p


# ---------------------------------------------------------------------------
# Demo / self-check
# ---------------------------------------------------------------------------

if __name__ == "__main__":
    input_dim, embed_dim, ffn_dim = 16, 32, 64
    depthwise_conv_kernel_size = 3
    num_heads, num_layers = 4, 2
    batch, seq = 2, 16

    key = jax.random.PRNGKey(0)
    k_params, k_x = jax.random.split(key)
    params = init_params(k_params, input_dim, embed_dim, ffn_dim,
                         depthwise_conv_kernel_size, num_layers)

    x = jax.random.normal(k_x, (batch, seq, input_dim), jnp.float32)
    lengths = jnp.array([seq, seq], dtype=jnp.int32)

    out = conformer_encoder_forward(x, lengths, params, num_heads)
    out = jax.block_until_ready(out)

    ref = _reference_forward(x, lengths, params, num_heads)
    assert out.shape == (batch, seq, embed_dim), out.shape
    err = float(np.max(np.abs(np.asarray(out) - np.asarray(ref))))
    assert np.allclose(np.asarray(out), np.asarray(ref), atol=5e-2, rtol=5e-2), err

    print("KERNEL_OK")
</pallas_src>

<mosaic_0001>
module attributes {stable_mosaic.version = 11 : i64} {
  func.func @_mm_res_kernel(%arg0: i32, %arg1: memref<32x64xbf16, #tpu.memory_space<vmem>>, %arg2: memref<64x32xbf16, #tpu.memory_space<vmem>>, %arg3: memref<1x32xf32, #tpu.memory_space<vmem>>, %arg4: memref<32x32xf32, #tpu.memory_space<vmem>>, %arg5: memref<32x32xf32, #tpu.memory_space<vmem>>) attributes {dimension_semantics = [#tpu.dimension_semantics<parallel>], iteration_bounds = array<i64: 1>, scalar_prefetch = 0 : i64, scratch_operands = 0 : i64, tpu.core_type = #tpu.core_type<tc>, window_params = [{transform_indices = @transform_0, window_bounds = array<i64: 32, 64>}, {pipeline_mode = #tpu.pipeline_mode<synchronous>, transform_indices = @transform_1, window_bounds = array<i64: 64, 32>}, {pipeline_mode = #tpu.pipeline_mode<synchronous>, transform_indices = @transform_2, window_bounds = array<i64: 1, 32>}, {transform_indices = @transform_3, window_bounds = array<i64: 32, 32>}, {transform_indices = @transform_4, window_bounds = array<i64: 32, 32>}]} {
    %c0 = arith.constant 0 : index
    %c0_0 = arith.constant 0 : index
    %0 = vector.load %arg1[%c0, %c0_0] : memref<32x64xbf16, #tpu.memory_space<vmem>>, vector<32x64xbf16>
    %c0_1 = arith.constant 0 : index
    %c0_2 = arith.constant 0 : index
    %1 = vector.load %arg2[%c0_1, %c0_2] : memref<64x32xbf16, #tpu.memory_space<vmem>>, vector<64x32xbf16>
    %cst = arith.constant dense<0.000000e+00> : vector<32x32xf32>
    %2 = tpu.matmul %0, %1, %cst {dimension_numbers = #tpu.dot_dimension_numbers<[1], [0], [0], [1], [0, 0, 1, 1], [], []>} : vector<32x64xbf16>, vector<64x32xbf16>, vector<32x32xf32> -> vector<32x32xf32>
    %c0_3 = arith.constant 0 : index
    %c0_4 = arith.constant 0 : index
    %3 = vector.load %arg3[%c0_3, %c0_4] : memref<1x32xf32, #tpu.memory_space<vmem>>, vector<1x32xf32>
    %4 = vector.broadcast %3 : vector<1x32xf32> to vector<32x32xf32>
    %5 = arith.addf %2, %4 : vector<32x32xf32>
    %c0_5 = arith.constant 0 : index
    %c0_6 = arith.constant 0 : index
    %6 = vector.load %arg4[%c0_5, %c0_6] : memref<32x32xf32, #tpu.memory_space<vmem>>, vector<32x32xf32>
    %cst_7 = arith.constant 5.000000e-01 : f32
    %7 = vector.broadcast %cst_7 : f32 to vector<32x32xf32>
    %8 = arith.mulf %7, %5 : vector<32x32xf32>
    %9 = arith.addf %6, %8 : vector<32x32xf32>
    %c0_8 = arith.constant 0 : index
    %c0_9 = arith.constant 0 : index
    %10 = vector.load %arg5[%c0_8, %c0_9] : memref<32x32xf32, #tpu.memory_space<vmem>>, vector<32x32xf32>
    tpu.vector_store %arg5[%c0_8, %c0_9], %9 {strides = array<i32>} : memref<32x32xf32, #tpu.memory_space<vmem>>, vector<32x32xf32>,
    return
  }
  func.func @transform_0(%arg0: i32) -> (i32, i32) {
    %c0_i32 = arith.constant 0 : i32
    %c0_i32_0 = arith.constant 0 : i32
    return %arg0, %c0_i32 : i32, i32
  }
  func.func @transform_1(%arg0: i32) -> (i32, i32) {
    %c0_i32 = arith.constant 0 : i32
    %c0_i32_0 = arith.constant 0 : i32
    %c0_i32_1 = arith.constant 0 : i32
    return %c0_i32, %c0_i32_0 : i32, i32
  }
  func.func @transform_2(%arg0: i32) -> (i32, i32) {
    %c0_i32 = arith.constant 0 : i32
    %c0_i32_0 = arith.constant 0 : i32
    %c0_i32_1 = arith.constant 0 : i32
    return %c0_i32, %c0_i32_0 : i32, i32
  }
  func.func @transform_3(%arg0: i32) -> (i32, i32) {
    %c0_i32 = arith.constant 0 : i32
    %c0_i32_0 = arith.constant 0 : i32
    return %arg0, %c0_i32 : i32, i32
  }
  func.func @transform_4(%arg0: i32) -> (i32, i32) {
    %c0_i32 = arith.constant 0 : i32
    %c0_i32_0 = arith.constant 0 : i32
    return %arg0, %c0_i32 : i32, i32
  }
}

module attributes {stable_mosaic.version = 11 : i64} {
  func.func @_mm_kernel(%arg0: i32, %arg1: memref<32x48xbf16, #tpu.memory_space<vmem>>, %arg2: memref<48x32xbf16, #tpu.memory_space<vmem>>, %arg3: memref<1x32xf32, #tpu.memory_space<vmem>>, %arg4: memref<32x32xbf16, #tpu.memory_space<vmem>>) attributes {dimension_semantics = [#tpu.dimension_semantics<parallel>], iteration_bounds = array<i64: 1>, scalar_prefetch = 0 : i64, scratch_operands = 0 : i64, tpu.core_type = #tpu.core_type<tc>, window_params = [{transform_indices = @transform_0, window_bounds = array<i64: 32, 48>}, {pipeline_mode = #tpu.pipeline_mode<synchronous>, transform_indices = @transform_1, window_bounds = array<i64: 48, 32>}, {pipeline_mode = #tpu.pipeline_mode<synchronous>, transform_indices = @transform_2, window_bounds = array<i64: 1, 32>}, {transform_indices = @transform_3, window_bounds = array<i64: 32, 32>}]} {
    %c0 = arith.constant 0 : index
    %c0_0 = arith.constant 0 : index
    %0 = vector.load %arg1[%c0, %c0_0] : memref<32x48xbf16, #tpu.memory_space<vmem>>, vector<32x48xbf16>
    %c0_1 = arith.constant 0 : index
    %c0_2 = arith.constant 0 : index
    %1 = vector.load %arg2[%c0_1, %c0_2] : memref<48x32xbf16, #tpu.memory_space<vmem>>, vector<48x32xbf16>
    %cst = arith.constant dense<0.000000e+00> : vector<32x32xf32>
    %2 = tpu.matmul %0, %1, %cst {dimension_numbers = #tpu.dot_dimension_numbers<[1], [0], [0], [1], [0, 0, 1, 1], [], []>} : vector<32x48xbf16>, vector<48x32xbf16>, vector<32x32xf32> -> vector<32x32xf32>
    %c0_3 = arith.constant 0 : index
    %c0_4 = arith.constant 0 : index
    %3 = vector.load %arg3[%c0_3, %c0_4] : memref<1x32xf32, #tpu.memory_space<vmem>>, vector<1x32xf32>
    %4 = vector.broadcast %3 : vector<1x32xf32> to vector<32x32xf32>
    %5 = arith.addf %2, %4 : vector<32x32xf32>
    %6 = arith.truncf %5 : vector<32x32xf32> to vector<32x32xbf16>
    %c0_5 = arith.constant 0 : index
    %c0_6 = arith.constant 0 : index
    %7 = vector.load %arg4[%c0_5, %c0_6] : memref<32x32xbf16, #tpu.memory_space<vmem>>, vector<32x32xbf16>
    tpu.vector_store %arg4[%c0_5, %c0_6], %6 {strides = array<i32>} : memref<32x32xbf16, #tpu.memory_space<vmem>>, vector<32x32xbf16>,
    return
  }
  func.func @transform_0(%arg0: i32) -> (i32, i32) {
    %c0_i32 = arith.constant 0 : i32
    %c0_i32_0 = arith.constant 0 : i32
    return %arg0, %c0_i32 : i32, i32
  }
  func.func @transform_1(%arg0: i32) -> (i32, i32) {
    %c0_i32 = arith.constant 0 : i32
    %c0_i32_0 = arith.constant 0 : i32
    %c0_i32_1 = arith.constant 0 : i32
    return %c0_i32, %c0_i32_0 : i32, i32
  }
  func.func @transform_2(%arg0: i32) -> (i32, i32) {
    %c0_i32 = arith.constant 0 : i32
    %c0_i32_0 = arith.constant 0 : i32
    %c0_i32_1 = arith.constant 0 : i32
    return %c0_i32, %c0_i32_0 : i32, i32
  }
  func.func @transform_3(%arg0: i32) -> (i32, i32) {
    %c0_i32 = arith.constant 0 : i32
    %c0_i32_0 = arith.constant 0 : i32
    return %arg0, %c0_i32 : i32, i32
  }
}

module attributes {stable_mosaic.version = 11 : i64} {
  func.func @_mm_kernel(%arg0: i32, %arg1: memref<32x32xbf16, #tpu.memory_space<vmem>>, %arg2: memref<32x32xbf16, #tpu.memory_space<vmem>>, %arg3: memref<1x32xf32, #tpu.memory_space<vmem>>, %arg4: memref<32x32xf32, #tpu.memory_space<vmem>>) attributes {dimension_semantics = [#tpu.dimension_semantics<parallel>], iteration_bounds = array<i64: 1>, scalar_prefetch = 0 : i64, scratch_operands = 0 : i64, tpu.core_type = #tpu.core_type<tc>, window_params = [{transform_indices = @transform_0, window_bounds = array<i64: 32, 32>}, {pipeline_mode = #tpu.pipeline_mode<synchronous>, transform_indices = @transform_1, window_bounds = array<i64: 32, 32>}, {pipeline_mode = #tpu.pipeline_mode<synchronous>, transform_indices = @transform_2, window_bounds = array<i64: 1, 32>}, {transform_indices = @transform_3, window_bounds = array<i64: 32, 32>}]} {
    %c0 = arith.constant 0 : index
    %c0_0 = arith.constant 0 : index
    %0 = vector.load %arg1[%c0, %c0_0] : memref<32x32xbf16, #tpu.memory_space<vmem>>, vector<32x32xbf16>
    %c0_1 = arith.constant 0 : index
    %c0_2 = arith.constant 0 : index
    %1 = vector.load %arg2[%c0_1, %c0_2] : memref<32x32xbf16, #tpu.memory_space<vmem>>, vector<32x32xbf16>
    %cst = arith.constant dense<0.000000e+00> : vector<32x32xf32>
    %2 = tpu.matmul %0, %1, %cst {dimension_numbers = #tpu.dot_dimension_numbers<[1], [0], [0], [1], [0, 0, 1, 1], [], []>} : vector<32x32xbf16>, vector<32x32xbf16>, vector<32x32xf32> -> vector<32x32xf32>
    %c0_3 = arith.constant 0 : index
    %c0_4 = arith.constant 0 : index
    %3 = vector.load %arg3[%c0_3, %c0_4] : memref<1x32xf32, #tpu.memory_space<vmem>>, vector<1x32xf32>
    %4 = vector.broadcast %3 : vector<1x32xf32> to vector<32x32xf32>
    %5 = arith.addf %2, %4 : vector<32x32xf32>
    %c0_5 = arith.constant 0 : index
    %c0_6 = arith.constant 0 : index
    %6 = vector.load %arg4[%c0_5, %c0_6] : memref<32x32xf32, #tpu.memory_space<vmem>>, vector<32x32xf32>
    tpu.vector_store %arg4[%c0_5, %c0_6], %5 {strides = array<i32>} : memref<32x32xf32, #tpu.memory_space<vmem>>, vector<32x32xf32>,
    return
  }
  func.func @transform_0(%arg0: i32) -> (i32, i32) {
    %c0_i32 = arith.constant 0 : i32
    %c0_i32_0 = arith.constant 0 : i32
    return %arg0, %c0_i32 : i32, i32
  }
  func.func @transform_1(%arg0: i32) -> (i32, i32) {
    %c0_i32 = arith.constant 0 : i32
    %c0_i32_0 = arith.constant 0 : i32
    %c0_i32_1 = arith.constant 0 : i32
    return %c0_i32, %c0_i32_0 : i32, i32
  }
  func.func @transform_2(%arg0: i32) -> (i32, i32) {
    %c0_i32 = arith.constant 0 : i32
    %c0_i32_0 = arith.constant 0 : i32
    %c0_i32_1 = arith.constant 0 : i32
    return %c0_i32, %c0_i32_0 : i32, i32
  }
  func.func @transform_3(%arg0: i32) -> (i32, i32) {
    %c0_i32 = arith.constant 0 : i32
    %c0_i32_0 = arith.constant 0 : i32
    return %arg0, %c0_i32 : i32, i32
  }
}

module attributes {stable_mosaic.version = 11 : i64} {
  func.func @_ln_mm_kernel(%arg0: i32, %arg1: memref<32x32xf32, #tpu.memory_space<vmem>>, %arg2: memref<1x32xf32, #tpu.memory_space<vmem>>, %arg3: memref<1x32xf32, #tpu.memory_space<vmem>>, %arg4: memref<32x64xbf16, #tpu.memory_space<vmem>>, %arg5: memref<1x64xf32, #tpu.memory_space<vmem>>, %arg6: memref<32x64xbf16, #tpu.memory_space<vmem>>) attributes {dimension_semantics = [#tpu.dimension_semantics<parallel>], iteration_bounds = array<i64: 1>, scalar_prefetch = 0 : i64, scratch_operands = 0 : i64, tpu.core_type = #tpu.core_type<tc>, window_params = [{transform_indices = @transform_0, window_bounds = array<i64: 32, 32>}, {pipeline_mode = #tpu.pipeline_mode<synchronous>, transform_indices = @transform_1, window_bounds = array<i64: 1, 32>}, {pipeline_mode = #tpu.pipeline_mode<synchronous>, transform_indices = @transform_2, window_bounds = array<i64: 1, 32>}, {pipeline_mode = #tpu.pipeline_mode<synchronous>, transform_indices = @transform_3, window_bounds = array<i64: 32, 64>}, {pipeline_mode = #tpu.pipeline_mode<synchronous>, transform_indices = @transform_4, window_bounds = array<i64: 1, 64>}, {transform_indices = @transform_5, window_bounds = array<i64: 32, 64>}]} {
    %c0 = arith.constant 0 : index
    %c0_0 = arith.constant 0 : index
    %0 = vector.load %arg1[%c0, %c0_0] : memref<32x32xf32, #tpu.memory_space<vmem>>, vector<32x32xf32>
    %c0_1 = arith.constant 0 : index
    %c0_2 = arith.constant 0 : index
    %1 = vector.load %arg2[%c0_1, %c0_2] : memref<1x32xf32, #tpu.memory_space<vmem>>, vector<1x32xf32>
    %c0_3 = arith.constant 0 : index
    %c0_4 = arith.constant 0 : index
    %2 = vector.load %arg3[%c0_3, %c0_4] : memref<1x32xf32, #tpu.memory_space<vmem>>, vector<1x32xf32>
    %cst = arith.constant dense<0.000000e+00> : vector<32xf32>
    %3 = vector.multi_reduction <add>, %0, %cst [1] : vector<32x32xf32> to vector<32xf32>
    %4 = vector.shape_cast %3 : vector<32xf32> to vector<32x1xf32>
    %cst_5 = arith.constant 3.200000e+01 : f32
    %5 = vector.broadcast %cst_5 : f32 to vector<32x1xf32>
    %6 = arith.divf %4, %5 : vector<32x1xf32>
    %7 = vector.broadcast %6 : vector<32x1xf32> to vector<32x32xf32>
    %8 = arith.subf %0, %7 : vector<32x32xf32>
    %9 = arith.mulf %8, %8 : vector<32x32xf32>
    %cst_6 = arith.constant dense<0.000000e+00> : vector<32xf32>
    %10 = vector.multi_reduction <add>, %9, %cst_6 [1] : vector<32x32xf32> to vector<32xf32>
    %11 = vector.shape_cast %10 : vector<32xf32> to vector<32x1xf32>
    %cst_7 = arith.constant 3.200000e+01 : f32
    %12 = vector.broadcast %cst_7 : f32 to vector<32x1xf32>
    %13 = arith.divf %11, %12 : vector<32x1xf32>
    %14 = vector.broadcast %6 : vector<32x1xf32> to vector<32x32xf32>
    %15 = arith.subf %0, %14 : vector<32x32xf32>
    %cst_8 = arith.constant 9.99999974E-6 : f32
    %16 = vector.broadcast %cst_8 : f32 to vector<32x1xf32>
    %17 = arith.addf %13, %16 : vector<32x1xf32>
    %18 = math.rsqrt %17 : vector<32x1xf32>
    %19 = vector.broadcast %18 : vector<32x1xf32> to vector<32x32xf32>
    %20 = arith.mulf %15, %19 : vector<32x32xf32>
    %21 = vector.broadcast %1 : vector<1x32xf32> to vector<32x32xf32>
    %22 = arith.mulf %20, %21 : vector<32x32xf32>
    %23 = vector.broadcast %2 : vector<1x32xf32> to vector<32x32xf32>
    %24 = arith.addf %22, %23 : vector<32x32xf32>
    %25 = arith.truncf %24 : vector<32x32xf32> to vector<32x32xbf16>
    %c0_9 = arith.constant 0 : index
    %c0_10 = arith.constant 0 : index
    %26 = vector.load %arg4[%c0_9, %c0_10] : memref<32x64xbf16, #tpu.memory_space<vmem>>, vector<32x64xbf16>
    %cst_11 = arith.constant dense<0.000000e+00> : vector<32x64xf32>
    %27 = tpu.matmul %25, %26, %cst_11 {dimension_numbers = #tpu.dot_dimension_numbers<[1], [0], [0], [1], [0, 0, 1, 1], [], []>} : vector<32x32xbf16>, vector<32x64xbf16>, vector<32x64xf32> -> vector<32x64xf32>
    %c0_12 = arith.constant 0 : index
    %c0_13 = arith.constant 0 : index
    %28 = vector.load %arg5[%c0_12, %c0_13] : memref<1x64xf32, #tpu.memory_space<vmem>>, vector<1x64xf32>
    %29 = vector.broadcast %28 : vector<1x64xf32> to vector<32x64xf32>
    %30 = arith.addf %27, %29 : vector<32x64xf32>
    %31 = arith.negf %30 : vector<32x64xf32>
    %32 = math.exp %31 : vector<32x64xf32>
    %cst_14 = arith.constant 1.000000e+00 : f32
    %33 = vector.broadcast %cst_14 : f32 to vector<32x64xf32>
    %34 = arith.addf %33, %32 : vector<32x64xf32>
    %35 = arith.divf %33, %34 : vector<32x64xf32>
    %36 = arith.mulf %30, %35 : vector<32x64xf32>
    %37 = arith.truncf %36 : vector<32x64xf32> to vector<32x64xbf16>
    %c0_15 = arith.constant 0 : index
    %c0_16 = arith.constant 0 : index
    %38 = vector.load %arg6[%c0_15, %c0_16] : memref<32x64xbf16, #tpu.memory_space<vmem>>, vector<32x64xbf16>
    tpu.vector_store %arg6[%c0_15, %c0_16], %37 {strides = array<i32>} : memref<32x64xbf16, #tpu.memory_space<vmem>>, vector<32x64xbf16>,
    return
  }
  func.func @transform_0(%arg0: i32) -> (i32, i32) {
    %c0_i32 = arith.constant 0 : i32
    %c0_i32_0 = arith.constant 0 : i32
    return %arg0, %c0_i32 : i32, i32
  }
  func.func @transform_1(%arg0: i32) -> (i32, i32) {
    %c0_i32 = arith.constant 0 : i32
    %c0_i32_0 = arith.constant 0 : i32
    %c0_i32_1 = arith.constant 0 : i32
    return %c0_i32, %c0_i32_0 : i32, i32
  }
  func.func @transform_2(%arg0: i32) -> (i32, i32) {
    %c0_i32 = arith.constant 0 : i32
    %c0_i32_0 = arith.constant 0 : i32
    %c0_i32_1 = arith.constant 0 : i32
    return %c0_i32, %c0_i32_0 : i32, i32
  }
  func.func @transform_3(%arg0: i32) -> (i32, i32) {
    %c0_i32 = arith.constant 0 : i32
    %c0_i32_0 = arith.constant 0 : i32
    %c0_i32_1 = arith.constant 0 : i32
    return %c0_i32, %c0_i32_0 : i32, i32
  }
  func.func @transform_4(%arg0: i32) -> (i32, i32) {
    %c0_i32 = arith.constant 0 : i32
    %c0_i32_0 = arith.constant 0 : i32
    %c0_i32_1 = arith.constant 0 : i32
    return %c0_i32, %c0_i32_0 : i32, i32
  }
  func.func @transform_5(%arg0: i32) -> (i32, i32) {
    %c0_i32 = arith.constant 0 : i32
    %c0_i32_0 = arith.constant 0 : i32
    return %arg0, %c0_i32 : i32, i32
  }
}

module attributes {stable_mosaic.version = 11 : i64} {
  func.func @_ln_mm_kernel(%arg0: i32, %arg1: memref<32x32xf32, #tpu.memory_space<vmem>>, %arg2: memref<1x32xf32, #tpu.memory_space<vmem>>, %arg3: memref<1x32xf32, #tpu.memory_space<vmem>>, %arg4: memref<32x96xbf16, #tpu.memory_space<vmem>>, %arg5: memref<1x96xf32, #tpu.memory_space<vmem>>, %arg6: memref<32x96xbf16, #tpu.memory_space<vmem>>) attributes {dimension_semantics = [#tpu.dimension_semantics<parallel>], iteration_bounds = array<i64: 1>, scalar_prefetch = 0 : i64, scratch_operands = 0 : i64, tpu.core_type = #tpu.core_type<tc>, window_params = [{transform_indices = @transform_0, window_bounds = array<i64: 32, 32>}, {pipeline_mode = #tpu.pipeline_mode<synchronous>, transform_indices = @transform_1, window_bounds = array<i64: 1, 32>}, {pipeline_mode = #tpu.pipeline_mode<synchronous>, transform_indices = @transform_2, window_bounds = array<i64: 1, 32>}, {pipeline_mode = #tpu.pipeline_mode<synchronous>, transform_indices = @transform_3, window_bounds = array<i64: 32, 96>}, {pipeline_mode = #tpu.pipeline_mode<synchronous>, transform_indices = @transform_4, window_bounds = array<i64: 1, 96>}, {transform_indices = @transform_5, window_bounds = array<i64: 32, 96>}]} {
    %c0 = arith.constant 0 : index
    %c0_0 = arith.constant 0 : index
    %0 = vector.load %arg1[%c0, %c0_0] : memref<32x32xf32, #tpu.memory_space<vmem>>, vector<32x32xf32>
    %c0_1 = arith.constant 0 : index
    %c0_2 = arith.constant 0 : index
    %1 = vector.load %arg2[%c0_1, %c0_2] : memref<1x32xf32, #tpu.memory_space<vmem>>, vector<1x32xf32>
    %c0_3 = arith.constant 0 : index
    %c0_4 = arith.constant 0 : index
    %2 = vector.load %arg3[%c0_3, %c0_4] : memref<1x32xf32, #tpu.memory_space<vmem>>, vector<1x32xf32>
    %cst = arith.constant dense<0.000000e+00> : vector<32xf32>
    %3 = vector.multi_reduction <add>, %0, %cst [1] : vector<32x32xf32> to vector<32xf32>
    %4 = vector.shape_cast %3 : vector<32xf32> to vector<32x1xf32>
    %cst_5 = arith.constant 3.200000e+01 : f32
    %5 = vector.broadcast %cst_5 : f32 to vector<32x1xf32>
    %6 = arith.divf %4, %5 : vector<32x1xf32>
    %7 = vector.broadcast %6 : vector<32x1xf32> to vector<32x32xf32>
    %8 = arith.subf %0, %7 : vector<32x32xf32>
    %9 = arith.mulf %8, %8 : vector<32x32xf32>
    %cst_6 = arith.constant dense<0.000000e+00> : vector<32xf32>
    %10 = vector.multi_reduction <add>, %9, %cst_6 [1] : vector<32x32xf32> to vector<32xf32>
    %11 = vector.shape_cast %10 : vector<32xf32> to vector<32x1xf32>
    %cst_7 = arith.constant 3.200000e+01 : f32
    %12 = vector.broadcast %cst_7 : f32 to vector<32x1xf32>
    %13 = arith.divf %11, %12 : vector<32x1xf32>
    %14 = vector.broadcast %6 : vector<32x1xf32> to vector<32x32xf32>
    %15 = arith.subf %0, %14 : vector<32x32xf32>
    %cst_8 = arith.constant 9.99999974E-6 : f32
    %16 = vector.broadcast %cst_8 : f32 to vector<32x1xf32>
    %17 = arith.addf %13, %16 : vector<32x1xf32>
    %18 = math.rsqrt %17 : vector<32x1xf32>
    %19 = vector.broadcast %18 : vector<32x1xf32> to vector<32x32xf32>
    %20 = arith.mulf %15, %19 : vector<32x32xf32>
    %21 = vector.broadcast %1 : vector<1x32xf32> to vector<32x32xf32>
    %22 = arith.mulf %20, %21 : vector<32x32xf32>
    %23 = vector.broadcast %2 : vector<1x32xf32> to vector<32x32xf32>
    %24 = arith.addf %22, %23 : vector<32x32xf32>
    %25 = arith.truncf %24 : vector<32x32xf32> to vector<32x32xbf16>
    %c0_9 = arith.constant 0 : index
    %c0_10 = arith.constant 0 : index
    %26 = vector.load %arg4[%c0_9, %c0_10] : memref<32x96xbf16, #tpu.memory_space<vmem>>, vector<32x96xbf16>
    %cst_11 = arith.constant dense<0.000000e+00> : vector<32x96xf32>
    %27 = tpu.matmul %25, %26, %cst_11 {dimension_numbers = #tpu.dot_dimension_numbers<[1], [0], [0], [1], [0, 0, 1, 1], [], []>} : vector<32x32xbf16>, vector<32x96xbf16>, vector<32x96xf32> -> vector<32x96xf32>
    %c0_12 = arith.constant 0 : index
    %c0_13 = arith.constant 0 : index
    %28 = vector.load %arg5[%c0_12, %c0_13] : memref<1x96xf32, #tpu.memory_space<vmem>>, vector<1x96xf32>
    %29 = vector.broadcast %28 : vector<1x96xf32> to vector<32x96xf32>
    %30 = arith.addf %27, %29 : vector<32x96xf32>
    %31 = arith.truncf %30 : vector<32x96xf32> to vector<32x96xbf16>
    %c0_14 = arith.constant 0 : index
    %c0_15 = arith.constant 0 : index
    %32 = vector.load %arg6[%c0_14, %c0_15] : memref<32x96xbf16, #tpu.memory_space<vmem>>, vector<32x96xbf16>
    tpu.vector_store %arg6[%c0_14, %c0_15], %31 {strides = array<i32>} : memref<32x96xbf16, #tpu.memory_space<vmem>>, vector<32x96xbf16>,
    return
  }
  func.func @transform_0(%arg0: i32) -> (i32, i32) {
    %c0_i32 = arith.constant 0 : i32
    %c0_i32_0 = arith.constant 0 : i32
    return %arg0, %c0_i32 : i32, i32
  }
  func.func @transform_1(%arg0: i32) -> (i32, i32) {
    %c0_i32 = arith.constant 0 : i32
    %c0_i32_0 = arith.constant 0 : i32
    %c0_i32_1 = arith.constant 0 : i32
    return %c0_i32, %c0_i32_0 : i32, i32
  }
  func.func @transform_2(%arg0: i32) -> (i32, i32) {
    %c0_i32 = arith.constant 0 : i32
    %c0_i32_0 = arith.constant 0 : i32
    %c0_i32_1 = arith.constant 0 : i32
    return %c0_i32, %c0_i32_0 : i32, i32
  }
  func.func @transform_3(%arg0: i32) -> (i32, i32) {
    %c0_i32 = arith.constant 0 : i32
    %c0_i32_0 = arith.constant 0 : i32
    %c0_i32_1 = arith.constant 0 : i32
    return %c0_i32, %c0_i32_0 : i32, i32
  }
  func.func @transform_4(%arg0: i32) -> (i32, i32) {
    %c0_i32 = arith.constant 0 : i32
    %c0_i32_0 = arith.constant 0 : i32
    %c0_i32_1 = arith.constant 0 : i32
    return %c0_i32, %c0_i32_0 : i32, i32
  }
  func.func @transform_5(%arg0: i32) -> (i32, i32) {
    %c0_i32 = arith.constant 0 : i32
    %c0_i32_0 = arith.constant 0 : i32
    return %arg0, %c0_i32 : i32, i32
  }
}

module attributes {stable_mosaic.version = 11 : i64} {
  func.func @_attn_kernel(%arg0: i32, %arg1: i32, %arg2: memref<1x1x16x8xbf16, #tpu.memory_space<vmem>>, %arg3: memref<1x1x16x8xbf16, #tpu.memory_space<vmem>>, %arg4: memref<1x1x16x8xbf16, #tpu.memory_space<vmem>>, %arg5: memref<1x1x16xf32, #tpu.memory_space<vmem>>, %arg6: memref<1x1x16x8xbf16, #tpu.memory_space<vmem>>) attributes {dimension_semantics = [#tpu.dimension_semantics<parallel>, #tpu.dimension_semantics<parallel>], iteration_bounds = array<i64: 2, 4>, scalar_prefetch = 0 : i64, scratch_operands = 0 : i64, tpu.core_type = #tpu.core_type<tc>, window_params = [{transform_indices = @transform_0, window_bounds = array<i64: 1, 1, 16, 8>}, {transform_indices = @transform_1, window_bounds = array<i64: 1, 1, 16, 8>}, {transform_indices = @transform_2, window_bounds = array<i64: 1, 1, 16, 8>}, {transform_indices = @transform_3, window_bounds = array<i64: 1, 1, 16>}, {transform_indices = @transform_4, window_bounds = array<i64: 1, 1, 16, 8>}]} {
    %c0 = arith.constant 0 : index
    %c0_0 = arith.constant 0 : index
    %c0_1 = arith.constant 0 : index
    %c0_2 = arith.constant 0 : index
    %0 = vector.load %arg2[%c0, %c0_0, %c0_1, %c0_2] : memref<1x1x16x8xbf16, #tpu.memory_space<vmem>>, vector<1x1x16x8xbf16>
    %1 = vector.shape_cast %0 : vector<1x1x16x8xbf16> to vector<16x8xbf16>
    %c0_3 = arith.constant 0 : index
    %c0_4 = arith.constant 0 : index
    %c0_5 = arith.constant 0 : index
    %c0_6 = arith.constant 0 : index
    %2 = vector.load %arg3[%c0_3, %c0_4, %c0_5, %c0_6] : memref<1x1x16x8xbf16, #tpu.memory_space<vmem>>, vector<1x1x16x8xbf16>
    %3 = vector.shape_cast %2 : vector<1x1x16x8xbf16> to vector<16x8xbf16>
    %c0_7 = arith.constant 0 : index
    %c0_8 = arith.constant 0 : index
    %c0_9 = arith.constant 0 : index
    %c0_10 = arith.constant 0 : index
    %4 = vector.load %arg4[%c0_7, %c0_8, %c0_9, %c0_10] : memref<1x1x16x8xbf16, #tpu.memory_space<vmem>>, vector<1x1x16x8xbf16>
    %5 = vector.shape_cast %4 : vector<1x1x16x8xbf16> to vector<16x8xbf16>
    %cst = arith.constant dense<0.000000e+00> : vector<16x16xf32>
    %6 = tpu.matmul %1, %3, %cst {dimension_numbers = #tpu.dot_dimension_numbers<[1], [1], [0], [0], [0, 0, 1, 0], [], []>} : vector<16x8xbf16>, vector<16x8xbf16>, vector<16x16xf32> -> vector<16x16xf32>
    %cst_11 = arith.constant 0.353553385 : f32
    %7 = vector.broadcast %cst_11 : f32 to vector<16x16xf32>
    %8 = arith.mulf %6, %7 : vector<16x16xf32>
    %c0_12 = arith.constant 0 : index
    %c0_13 = arith.constant 0 : index
    %c0_14 = arith.constant 0 : index
    %9 = vector.load %arg5[%c0_12, %c0_13, %c0_14] : memref<1x1x16xf32, #tpu.memory_space<vmem>>, vector<1x1x16xf32>
    %10 = vector.shape_cast %9 : vector<1x1x16xf32> to vector<1x16xf32>
    %11 = vector.broadcast %10 : vector<1x16xf32> to vector<16x16xf32>
    %12 = arith.addf %8, %11 : vector<16x16xf32>
    %cst_15 = arith.constant dense<0xFF800000> : vector<16xf32>
    %13 = vector.multi_reduction <maximumf>, %12, %cst_15 [1] : vector<16x16xf32> to vector<16xf32>
    %14 = vector.shape_cast %13 : vector<16xf32> to vector<16x1xf32>
    %15 = vector.broadcast %14 : vector<16x1xf32> to vector<16x16xf32>
    %16 = arith.subf %12, %15 : vector<16x16xf32>
    %17 = math.exp %16 : vector<16x16xf32>
    %cst_16 = arith.constant dense<0.000000e+00> : vector<16xf32>
    %18 = vector.multi_reduction <add>, %17, %cst_16 [1] : vector<16x16xf32> to vector<16xf32>
    %19 = vector.shape_cast %18 : vector<16xf32> to vector<16x1xf32>
    %20 = vector.broadcast %19 : vector<16x1xf32> to vector<16x16xf32>
    %21 = arith.divf %17, %20 : vector<16x16xf32>
    %22 = arith.truncf %21 : vector<16x16xf32> to vector<16x16xbf16>
    %cst_17 = arith.constant dense<0.000000e+00> : vector<16x8xf32>
    %23 = tpu.matmul %22, %5, %cst_17 {dimension_numbers = #tpu.dot_dimension_numbers<[1], [0], [0], [1], [0, 0, 1, 1], [], []>} : vector<16x16xbf16>, vector<16x8xbf16>, vector<16x8xf32> -> vector<16x8xf32>
    %24 = arith.truncf %23 : vector<16x8xf32> to vector<16x8xbf16>
    %c0_18 = arith.constant 0 : index
    %c0_19 = arith.constant 0 : index
    %c0_20 = arith.constant 0 : index
    %c0_21 = arith.constant 0 : index
    %25 = vector.load %arg6[%c0_18, %c0_19, %c0_20, %c0_21] : memref<1x1x16x8xbf16, #tpu.memory_space<vmem>>, vector<1x1x16x8xbf16>
    %26 = vector.shape_cast %25 : vector<1x1x16x8xbf16> to vector<16x8xbf16>
    %27 = vector.shape_cast %24 : vector<16x8xbf16> to vector<1x1x16x8xbf16>
    tpu.vector_store %arg6[%c0_18, %c0_19, %c0_20, %c0_21], %27 {strides = array<i32>} : memref<1x1x16x8xbf16, #tpu.memory_space<vmem>>, vector<1x1x16x8xbf16>,
    return
  }
  func.func @transform_0(%arg0: i32, %arg1: i32) -> (i32, i32, i32, i32) {
    %c0_i32 = arith.constant 0 : i32
    %c0_i32_0 = arith.constant 0 : i32
    %c0_i32_1 = arith.constant 0 : i32
    return %arg0, %arg1, %c0_i32, %c0_i32_0 : i32, i32, i32, i32
  }
  func.func @transform_1(%arg0: i32, %arg1: i32) -> (i32, i32, i32, i32) {
    %c0_i32 = arith.constant 0 : i32
    %c0_i32_0 = arith.constant 0 : i32
    %c0_i32_1 = arith.constant 0 : i32
    return %arg0, %arg1, %c0_i32, %c0_i32_0 : i32, i32, i32, i32
  }
  func.func @transform_2(%arg0: i32, %arg1: i32) -> (i32, i32, i32, i32) {
    %c0_i32 = arith.constant 0 : i32
    %c0_i32_0 = arith.constant 0 : i32
    %c0_i32_1 = arith.constant 0 : i32
    return %arg0, %arg1, %c0_i32, %c0_i32_0 : i32, i32, i32, i32
  }
  func.func @transform_3(%arg0: i32, %arg1: i32) -> (i32, i32, i32) {
    %c0_i32 = arith.constant 0 : i32
    %c0_i32_0 = arith.constant 0 : i32
    %c0_i32_1 = arith.constant 0 : i32
    return %arg0, %c0_i32, %c0_i32_0 : i32, i32, i32
  }
  func.func @transform_4(%arg0: i32, %arg1: i32) -> (i32, i32, i32, i32) {
    %c0_i32 = arith.constant 0 : i32
    %c0_i32_0 = arith.constant 0 : i32
    %c0_i32_1 = arith.constant 0 : i32
    return %arg0, %arg1, %c0_i32, %c0_i32_0 : i32, i32, i32, i32
  }
}

module attributes {stable_mosaic.version = 11 : i64} {
  func.func @_mm_res_kernel(%arg0: i32, %arg1: memref<32x32xbf16, #tpu.memory_space<vmem>>, %arg2: memref<32x32xbf16, #tpu.memory_space<vmem>>, %arg3: memref<1x32xf32, #tpu.memory_space<vmem>>, %arg4: memref<32x32xf32, #tpu.memory_space<vmem>>, %arg5: memref<32x32xf32, #tpu.memory_space<vmem>>) attributes {dimension_semantics = [#tpu.dimension_semantics<parallel>], iteration_bounds = array<i64: 1>, scalar_prefetch = 0 : i64, scratch_operands = 0 : i64, tpu.core_type = #tpu.core_type<tc>, window_params = [{transform_indices = @transform_0, window_bounds = array<i64: 32, 32>}, {pipeline_mode = #tpu.pipeline_mode<synchronous>, transform_indices = @transform_1, window_bounds = array<i64: 32, 32>}, {pipeline_mode = #tpu.pipeline_mode<synchronous>, transform_indices = @transform_2, window_bounds = array<i64: 1, 32>}, {transform_indices = @transform_3, window_bounds = array<i64: 32, 32>}, {transform_indices = @transform_4, window_bounds = array<i64: 32, 32>}]} {
    %c0 = arith.constant 0 : index
    %c0_0 = arith.constant 0 : index
    %0 = vector.load %arg1[%c0, %c0_0] : memref<32x32xbf16, #tpu.memory_space<vmem>>, vector<32x32xbf16>
    %c0_1 = arith.constant 0 : index
    %c0_2 = arith.constant 0 : index
    %1 = vector.load %arg2[%c0_1, %c0_2] : memref<32x32xbf16, #tpu.memory_space<vmem>>, vector<32x32xbf16>
    %cst = arith.constant dense<0.000000e+00> : vector<32x32xf32>
    %2 = tpu.matmul %0, %1, %cst {dimension_numbers = #tpu.dot_dimension_numbers<[1], [0], [0], [1], [0, 0, 1, 1], [], []>} : vector<32x32xbf16>, vector<32x32xbf16>, vector<32x32xf32> -> vector<32x32xf32>
    %c0_3 = arith.constant 0 : index
    %c0_4 = arith.constant 0 : index
    %3 = vector.load %arg3[%c0_3, %c0_4] : memref<1x32xf32, #tpu.memory_space<vmem>>, vector<1x32xf32>
    %4 = vector.broadcast %3 : vector<1x32xf32> to vector<32x32xf32>
    %5 = arith.addf %2, %4 : vector<32x32xf32>
    %c0_5 = arith.constant 0 : index
    %c0_6 = arith.constant 0 : index
    %6 = vector.load %arg4[%c0_5, %c0_6] : memref<32x32xf32, #tpu.memory_space<vmem>>, vector<32x32xf32>
    %cst_7 = arith.constant 1.000000e+00 : f32
    %7 = vector.broadcast %cst_7 : f32 to vector<32x32xf32>
    %8 = arith.mulf %7, %5 : vector<32x32xf32>
    %9 = arith.addf %6, %8 : vector<32x32xf32>
    %c0_8 = arith.constant 0 : index
    %c0_9 = arith.constant 0 : index
    %10 = vector.load %arg5[%c0_8, %c0_9] : memref<32x32xf32, #tpu.memory_space<vmem>>, vector<32x32xf32>
    tpu.vector_store %arg5[%c0_8, %c0_9], %9 {strides = array<i32>} : memref<32x32xf32, #tpu.memory_space<vmem>>, vector<32x32xf32>,
    return
  }
  func.func @transform_0(%arg0: i32) -> (i32, i32) {
    %c0_i32 = arith.constant 0 : i32
    %c0_i32_0 = arith.constant 0 : i32
    return %arg0, %c0_i32 : i32, i32
  }
  func.func @transform_1(%arg0: i32) -> (i32, i32) {
    %c0_i32 = arith.constant 0 : i32
    %c0_i32_0 = arith.constant 0 : i32
    %c0_i32_1 = arith.constant 0 : i32
    return %c0_i32, %c0_i32_0 : i32, i32
  }
  func.func @transform_2(%arg0: i32) -> (i32, i32) {
    %c0_i32 = arith.constant 0 : i32
    %c0_i32_0 = arith.constant 0 : i32
    %c0_i32_1 = arith.constant 0 : i32
    return %c0_i32, %c0_i32_0 : i32, i32
  }
  func.func @transform_3(%arg0: i32) -> (i32, i32) {
    %c0_i32 = arith.constant 0 : i32
    %c0_i32_0 = arith.constant 0 : i32
    return %arg0, %c0_i32 : i32, i32
  }
  func.func @transform_4(%arg0: i32) -> (i32, i32) {
    %c0_i32 = arith.constant 0 : i32
    %c0_i32_0 = arith.constant 0 : i32
    return %arg0, %c0_i32 : i32, i32
  }
}

module attributes {stable_mosaic.version = 11 : i64} {
  func.func @_ln_mm_glu_kernel(%arg0: i32, %arg1: memref<32x32xf32, #tpu.memory_space<vmem>>, %arg2: memref<1x32xf32, #tpu.memory_space<vmem>>, %arg3: memref<1x32xf32, #tpu.memory_space<vmem>>, %arg4: memref<32x32xbf16, #tpu.memory_space<vmem>>, %arg5: memref<1x32xf32, #tpu.memory_space<vmem>>, %arg6: memref<32x32xbf16, #tpu.memory_space<vmem>>, %arg7: memref<1x32xf32, #tpu.memory_space<vmem>>, %arg8: memref<32x32xbf16, #tpu.memory_space<vmem>>) attributes {dimension_semantics = [#tpu.dimension_semantics<parallel>], iteration_bounds = array<i64: 1>, scalar_prefetch = 0 : i64, scratch_operands = 0 : i64, tpu.core_type = #tpu.core_type<tc>, window_params = [{transform_indices = @transform_0, window_bounds = array<i64: 32, 32>}, {pipeline_mode = #tpu.pipeline_mode<synchronous>, transform_indices = @transform_1, window_bounds = array<i64: 1, 32>}, {pipeline_mode = #tpu.pipeline_mode<synchronous>, transform_indices = @transform_2, window_bounds = array<i64: 1, 32>}, {pipeline_mode = #tpu.pipeline_mode<synchronous>, transform_indices = @transform_3, window_bounds = array<i64: 32, 32>}, {pipeline_mode = #tpu.pipeline_mode<synchronous>, transform_indices = @transform_4, window_bounds = array<i64: 1, 32>}, {pipeline_mode = #tpu.pipeline_mode<synchronous>, transform_indices = @transform_5, window_bounds = array<i64: 32, 32>}, {pipeline_mode = #tpu.pipeline_mode<synchronous>, transform_indices = @transform_6, window_bounds = array<i64: 1, 32>}, {transform_indices = @transform_7, window_bounds = array<i64: 32, 32>}]} {
    %c0 = arith.constant 0 : index
    %c0_0 = arith.constant 0 : index
    %0 = vector.load %arg1[%c0, %c0_0] : memref<32x32xf32, #tpu.memory_space<vmem>>, vector<32x32xf32>
    %c0_1 = arith.constant 0 : index
    %c0_2 = arith.constant 0 : index
    %1 = vector.load %arg2[%c0_1, %c0_2] : memref<1x32xf32, #tpu.memory_space<vmem>>, vector<1x32xf32>
    %c0_3 = arith.constant 0 : index
    %c0_4 = arith.constant 0 : index
    %2 = vector.load %arg3[%c0_3, %c0_4] : memref<1x32xf32, #tpu.memory_space<vmem>>, vector<1x32xf32>
    %cst = arith.constant dense<0.000000e+00> : vector<32xf32>
    %3 = vector.multi_reduction <add>, %0, %cst [1] : vector<32x32xf32> to vector<32xf32>
    %4 = vector.shape_cast %3 : vector<32xf32> to vector<32x1xf32>
    %cst_5 = arith.constant 3.200000e+01 : f32
    %5 = vector.broadcast %cst_5 : f32 to vector<32x1xf32>
    %6 = arith.divf %4, %5 : vector<32x1xf32>
    %7 = vector.broadcast %6 : vector<32x1xf32> to vector<32x32xf32>
    %8 = arith.subf %0, %7 : vector<32x32xf32>
    %9 = arith.mulf %8, %8 : vector<32x32xf32>
    %cst_6 = arith.constant dense<0.000000e+00> : vector<32xf32>
    %10 = vector.multi_reduction <add>, %9, %cst_6 [1] : vector<32x32xf32> to vector<32xf32>
    %11 = vector.shape_cast %10 : vector<32xf32> to vector<32x1xf32>
    %cst_7 = arith.constant 3.200000e+01 : f32
    %12 = vector.broadcast %cst_7 : f32 to vector<32x1xf32>
    %13 = arith.divf %11, %12 : vector<32x1xf32>
    %14 = vector.broadcast %6 : vector<32x1xf32> to vector<32x32xf32>
    %15 = arith.subf %0, %14 : vector<32x32xf32>
    %cst_8 = arith.constant 9.99999974E-6 : f32
    %16 = vector.broadcast %cst_8 : f32 to vector<32x1xf32>
    %17 = arith.addf %13, %16 : vector<32x1xf32>
    %18 = math.rsqrt %17 : vector<32x1xf32>
    %19 = vector.broadcast %18 : vector<32x1xf32> to vector<32x32xf32>
    %20 = arith.mulf %15, %19 : vector<32x32xf32>
    %21 = vector.broadcast %1 : vector<1x32xf32> to vector<32x32xf32>
    %22 = arith.mulf %20, %21 : vector<32x32xf32>
    %23 = vector.broadcast %2 : vector<1x32xf32> to vector<32x32xf32>
    %24 = arith.addf %22, %23 : vector<32x32xf32>
    %25 = arith.truncf %24 : vector<32x32xf32> to vector<32x32xbf16>
    %c0_9 = arith.constant 0 : index
    %c0_10 = arith.constant 0 : index
    %26 = vector.load %arg4[%c0_9, %c0_10] : memref<32x32xbf16, #tpu.memory_space<vmem>>, vector<32x32xbf16>
    %cst_11 = arith.constant dense<0.000000e+00> : vector<32x32xf32>
    %27 = tpu.matmul %25, %26, %cst_11 {dimension_numbers = #tpu.dot_dimension_numbers<[1], [0], [0], [1], [0, 0, 1, 1], [], []>} : vector<32x32xbf16>, vector<32x32xbf16>, vector<32x32xf32> -> vector<32x32xf32>
    %c0_12 = arith.constant 0 : index
    %c0_13 = arith.constant 0 : index
    %28 = vector.load %arg5[%c0_12, %c0_13] : memref<1x32xf32, #tpu.memory_space<vmem>>, vector<1x32xf32>
    %29 = vector.broadcast %28 : vector<1x32xf32> to vector<32x32xf32>
    %30 = arith.addf %27, %29 : vector<32x32xf32>
    %c0_14 = arith.constant 0 : index
    %c0_15 = arith.constant 0 : index
    %31 = vector.load %arg6[%c0_14, %c0_15] : memref<32x32xbf16, #tpu.memory_space<vmem>>, vector<32x32xbf16>
    %cst_16 = arith.constant dense<0.000000e+00> : vector<32x32xf32>
    %32 = tpu.matmul %25, %31, %cst_16 {dimension_numbers = #tpu.dot_dimension_numbers<[1], [0], [0], [1], [0, 0, 1, 1], [], []>} : vector<32x32xbf16>, vector<32x32xbf16>, vector<32x32xf32> -> vector<32x32xf32>
    %c0_17 = arith.constant 0 : index
    %c0_18 = arith.constant 0 : index
    %33 = vector.load %arg7[%c0_17, %c0_18] : memref<1x32xf32, #tpu.memory_space<vmem>>, vector<1x32xf32>
    %34 = vector.broadcast %33 : vector<1x32xf32> to vector<32x32xf32>
    %35 = arith.addf %32, %34 : vector<32x32xf32>
    %36 = arith.negf %35 : vector<32x32xf32>
    %37 = math.exp %36 : vector<32x32xf32>
    %cst_19 = arith.constant 1.000000e+00 : f32
    %38 = vector.broadcast %cst_19 : f32 to vector<32x32xf32>
    %39 = arith.addf %38, %37 : vector<32x32xf32>
    %40 = arith.divf %38, %39 : vector<32x32xf32>
    %41 = arith.mulf %30, %40 : vector<32x32xf32>
    %42 = arith.truncf %41 : vector<32x32xf32> to vector<32x32xbf16>
    %c0_20 = arith.constant 0 : index
    %c0_21 = arith.constant 0 : index
    %43 = vector.load %arg8[%c0_20, %c0_21] : memref<32x32xbf16, #tpu.memory_space<vmem>>, vector<32x32xbf16>
    tpu.vector_store %arg8[%c0_20, %c0_21], %42 {strides = array<i32>} : memref<32x32xbf16, #tpu.memory_space<vmem>>, vector<32x32xbf16>,
    return
  }
  func.func @transform_0(%arg0: i32) -> (i32, i32) {
    %c0_i32 = arith.constant 0 : i32
    %c0_i32_0 = arith.constant 0 : i32
    return %arg0, %c0_i32 : i32, i32
  }
  func.func @transform_1(%arg0: i32) -> (i32, i32) {
    %c0_i32 = arith.constant 0 : i32
    %c0_i32_0 = arith.constant 0 : i32
    %c0_i32_1 = arith.constant 0 : i32
    return %c0_i32, %c0_i32_0 : i32, i32
  }
  func.func @transform_2(%arg0: i32) -> (i32, i32) {
    %c0_i32 = arith.constant 0 : i32
    %c0_i32_0 = arith.constant 0 : i32
    %c0_i32_1 = arith.constant 0 : i32
    return %c0_i32, %c0_i32_0 : i32, i32
  }
  func.func @transform_3(%arg0: i32) -> (i32, i32) {
    %c0_i32 = arith.constant 0 : i32
    %c0_i32_0 = arith.constant 0 : i32
    %c0_i32_1 = arith.constant 0 : i32
    return %c0_i32, %c0_i32_0 : i32, i32
  }
  func.func @transform_4(%arg0: i32) -> (i32, i32) {
    %c0_i32 = arith.constant 0 : i32
    %c0_i32_0 = arith.constant 0 : i32
    %c0_i32_1 = arith.constant 0 : i32
    return %c0_i32, %c0_i32_0 : i32, i32
  }
  func.func @transform_5(%arg0: i32) -> (i32, i32) {
    %c0_i32 = arith.constant 0 : i32
    %c0_i32_0 = arith.constant 0 : i32
    %c0_i32_1 = arith.constant 0 : i32
    return %c0_i32, %c0_i32_0 : i32, i32
  }
  func.func @transform_6(%arg0: i32) -> (i32, i32) {
    %c0_i32 = arith.constant 0 : i32
    %c0_i32_0 = arith.constant 0 : i32
    %c0_i32_1 = arith.constant 0 : i32
    return %c0_i32, %c0_i32_0 : i32, i32
  }
  func.func @transform_7(%arg0: i32) -> (i32, i32) {
    %c0_i32 = arith.constant 0 : i32
    %c0_i32_0 = arith.constant 0 : i32
    return %arg0, %c0_i32 : i32, i32
  }
}

module attributes {stable_mosaic.version = 11 : i64} {
  func.func @_ln_kernel(%arg0: i32, %arg1: memref<32x32xf32, #tpu.memory_space<vmem>>, %arg2: memref<1x32xf32, #tpu.memory_space<vmem>>, %arg3: memref<1x32xf32, #tpu.memory_space<vmem>>, %arg4: memref<32x32xf32, #tpu.memory_space<vmem>>) attributes {dimension_semantics = [#tpu.dimension_semantics<parallel>], iteration_bounds = array<i64: 1>, scalar_prefetch = 0 : i64, scratch_operands = 0 : i64, tpu.core_type = #tpu.core_type<tc>, window_params = [{transform_indices = @transform_0, window_bounds = array<i64: 32, 32>}, {pipeline_mode = #tpu.pipeline_mode<synchronous>, transform_indices = @transform_1, window_bounds = array<i64: 1, 32>}, {pipeline_mode = #tpu.pipeline_mode<synchronous>, transform_indices = @transform_2, window_bounds = array<i64: 1, 32>}, {transform_indices = @transform_3, window_bounds = array<i64: 32, 32>}]} {
    %c0 = arith.constant 0 : index
    %c0_0 = arith.constant 0 : index
    %0 = vector.load %arg1[%c0, %c0_0] : memref<32x32xf32, #tpu.memory_space<vmem>>, vector<32x32xf32>
    %c0_1 = arith.constant 0 : index
    %c0_2 = arith.constant 0 : index
    %1 = vector.load %arg2[%c0_1, %c0_2] : memref<1x32xf32, #tpu.memory_space<vmem>>, vector<1x32xf32>
    %c0_3 = arith.constant 0 : index
    %c0_4 = arith.constant 0 : index
    %2 = vector.load %arg3[%c0_3, %c0_4] : memref<1x32xf32, #tpu.memory_space<vmem>>, vector<1x32xf32>
    %cst = arith.constant dense<0.000000e+00> : vector<32xf32>
    %3 = vector.multi_reduction <add>, %0, %cst [1] : vector<32x32xf32> to vector<32xf32>
    %4 = vector.shape_cast %3 : vector<32xf32> to vector<32x1xf32>
    %cst_5 = arith.constant 3.200000e+01 : f32
    %5 = vector.broadcast %cst_5 : f32 to vector<32x1xf32>
    %6 = arith.divf %4, %5 : vector<32x1xf32>
    %7 = vector.broadcast %6 : vector<32x1xf32> to vector<32x32xf32>
    %8 = arith.subf %0, %7 : vector<32x32xf32>
    %9 = arith.mulf %8, %8 : vector<32x32xf32>
    %cst_6 = arith.constant dense<0.000000e+00> : vector<32xf32>
    %10 = vector.multi_reduction <add>, %9, %cst_6 [1] : vector<32x32xf32> to vector<32xf32>
    %11 = vector.shape_cast %10 : vector<32xf32> to vector<32x1xf32>
    %cst_7 = arith.constant 3.200000e+01 : f32
    %12 = vector.broadcast %cst_7 : f32 to vector<32x1xf32>
    %13 = arith.divf %11, %12 : vector<32x1xf32>
    %14 = vector.broadcast %6 : vector<32x1xf32> to vector<32x32xf32>
    %15 = arith.subf %0, %14 : vector<32x32xf32>
    %cst_8 = arith.constant 9.99999974E-6 : f32
    %16 = vector.broadcast %cst_8 : f32 to vector<32x1xf32>
    %17 = arith.addf %13, %16 : vector<32x1xf32>
    %18 = math.rsqrt %17 : vector<32x1xf32>
    %19 = vector.broadcast %18 : vector<32x1xf32> to vector<32x32xf32>
    %20 = arith.mulf %15, %19 : vector<32x32xf32>
    %21 = vector.broadcast %1 : vector<1x32xf32> to vector<32x32xf32>
    %22 = arith.mulf %20, %21 : vector<32x32xf32>
    %23 = vector.broadcast %2 : vector<1x32xf32> to vector<32x32xf32>
    %24 = arith.addf %22, %23 : vector<32x32xf32>
    %c0_9 = arith.constant 0 : index
    %c0_10 = arith.constant 0 : index
    %25 = vector.load %arg4[%c0_9, %c0_10] : memref<32x32xf32, #tpu.memory_space<vmem>>, vector<32x32xf32>
    tpu.vector_store %arg4[%c0_9, %c0_10], %24 {strides = array<i32>} : memref<32x32xf32, #tpu.memory_space<vmem>>, vector<32x32xf32>,
    return
  }
  func.func @transform_0(%arg0: i32) -> (i32, i32) {
    %c0_i32 = arith.constant 0 : i32
    %c0_i32_0 = arith.constant 0 : i32
    return %arg0, %c0_i32 : i32, i32
  }
  func.func @transform_1(%arg0: i32) -> (i32, i32) {
    %c0_i32 = arith.constant 0 : i32
    %c0_i32_0 = arith.constant 0 : i32
    %c0_i32_1 = arith.constant 0 : i32
    return %c0_i32, %c0_i32_0 : i32, i32
  }
  func.func @transform_2(%arg0: i32) -> (i32, i32) {
    %c0_i32 = arith.constant 0 : i32
    %c0_i32_0 = arith.constant 0 : i32
    %c0_i32_1 = arith.constant 0 : i32
    return %c0_i32, %c0_i32_0 : i32, i32
  }
  func.func @transform_3(%arg0: i32) -> (i32, i32) {
    %c0_i32 = arith.constant 0 : i32
    %c0_i32_0 = arith.constant 0 : i32
    return %arg0, %c0_i32 : i32, i32
  }
}

module attributes {stable_mosaic.version = 11 : i64} {
  func.func @_dwconv_bn_silu_kernel(%arg0: i32, %arg1: memref<1x18x32xbf16, #tpu.memory_space<vmem>>, %arg2: memref<3x32xf32, #tpu.memory_space<vmem>>, %arg3: memref<1x32xf32, #tpu.memory_space<vmem>>, %arg4: memref<1x32xf32, #tpu.memory_space<vmem>>, %arg5: memref<1x32xf32, #tpu.memory_space<vmem>>, %arg6: memref<1x16x32xbf16, #tpu.memory_space<vmem>>) attributes {dimension_semantics = [#tpu.dimension_semantics<parallel>], iteration_bounds = array<i64: 2>, scalar_prefetch = 0 : i64, scratch_operands = 0 : i64, tpu.core_type = #tpu.core_type<tc>, window_params = [{transform_indices = @transform_0, window_bounds = array<i64: 1, 18, 32>}, {pipeline_mode = #tpu.pipeline_mode<synchronous>, transform_indices = @transform_1, window_bounds = array<i64: 3, 32>}, {pipeline_mode = #tpu.pipeline_mode<synchronous>, transform_indices = @transform_2, window_bounds = array<i64: 1, 32>}, {pipeline_mode = #tpu.pipeline_mode<synchronous>, transform_indices = @transform_3, window_bounds = array<i64: 1, 32>}, {pipeline_mode = #tpu.pipeline_mode<synchronous>, transform_indices = @transform_4, window_bounds = array<i64: 1, 32>}, {transform_indices = @transform_5, window_bounds = array<i64: 1, 16, 32>}]} {
    %c0 = arith.constant 0 : index
    %c0_0 = arith.constant 0 : index
    %0 = vector.load %arg2[%c0, %c0_0] : memref<3x32xf32, #tpu.memory_space<vmem>>, vector<3x32xf32>
    %cst = arith.constant 0.000000e+00 : f32
    %1 = vector.broadcast %cst : f32 to vector<16x32xf32>
    %c0_1 = arith.constant 0 : index
    %c0_2 = arith.constant 0 : index
    %c0_3 = arith.constant 0 : index
    %2 = vector.load %arg1[%c0_1, %c0_2, %c0_3] : memref<1x18x32xbf16, #tpu.memory_space<vmem>>, vector<1x16x32xbf16>
    %3 = vector.shape_cast %2 : vector<1x16x32xbf16> to vector<16x32xbf16>
    %4 = arith.extf %3 : vector<16x32xbf16> to vector<16x32xf32>
    %5 = vector.extract_strided_slice %0 {offsets = [0, 0], sizes = [1, 32], strides = [1, 1]} : vector<3x32xf32> to vector<1x32xf32>
    %6 = vector.broadcast %5 : vector<1x32xf32> to vector<16x32xf32>
    %7 = arith.mulf %4, %6 : vector<16x32xf32>
    %8 = arith.addf %1, %7 : vector<16x32xf32>
    %c0_4 = arith.constant 0 : index
    %c1 = arith.constant 1 : index
    %c0_5 = arith.constant 0 : index
    %9 = vector.load %arg1[%c0_4, %c1, %c0_5] : memref<1x18x32xbf16, #tpu.memory_space<vmem>>, vector<1x16x32xbf16>
    %10 = vector.shape_cast %9 : vector<1x16x32xbf16> to vector<16x32xbf16>
    %11 = arith.extf %10 : vector<16x32xbf16> to vector<16x32xf32>
    %12 = vector.extract_strided_slice %0 {offsets = [1, 0], sizes = [1, 32], strides = [1, 1]} : vector<3x32xf32> to vector<1x32xf32>
    %13 = vector.broadcast %12 : vector<1x32xf32> to vector<16x32xf32>
    %14 = arith.mulf %11, %13 : vector<16x32xf32>
    %15 = arith.addf %8, %14 : vector<16x32xf32>
    %c0_6 = arith.constant 0 : index
    %c2 = arith.constant 2 : index
    %c0_7 = arith.constant 0 : index
    %16 = vector.load %arg1[%c0_6, %c2, %c0_7] : memref<1x18x32xbf16, #tpu.memory_space<vmem>>, vector<1x16x32xbf16>
    %17 = vector.shape_cast %16 : vector<1x16x32xbf16> to vector<16x32xbf16>
    %18 = arith.extf %17 : vector<16x32xbf16> to vector<16x32xf32>
    %19 = vector.extract_strided_slice %0 {offsets = [2, 0], sizes = [1, 32], strides = [1, 1]} : vector<3x32xf32> to vector<1x32xf32>
    %20 = vector.broadcast %19 : vector<1x32xf32> to vector<16x32xf32>
    %21 = arith.mulf %18, %20 : vector<16x32xf32>
    %22 = arith.addf %15, %21 : vector<16x32xf32>
    %c0_8 = arith.constant 0 : index
    %c0_9 = arith.constant 0 : index
    %23 = vector.load %arg3[%c0_8, %c0_9] : memref<1x32xf32, #tpu.memory_space<vmem>>, vector<1x32xf32>
    %24 = vector.broadcast %23 : vector<1x32xf32> to vector<16x32xf32>
    %25 = arith.addf %22, %24 : vector<16x32xf32>
    %c0_10 = arith.constant 0 : index
    %c0_11 = arith.constant 0 : index
    %26 = vector.load %arg4[%c0_10, %c0_11] : memref<1x32xf32, #tpu.memory_space<vmem>>, vector<1x32xf32>
    %27 = vector.broadcast %26 : vector<1x32xf32> to vector<16x32xf32>
    %28 = arith.mulf %25, %27 : vector<16x32xf32>
    %c0_12 = arith.constant 0 : index
    %c0_13 = arith.constant 0 : index
    %29 = vector.load %arg5[%c0_12, %c0_13] : memref<1x32xf32, #tpu.memory_space<vmem>>, vector<1x32xf32>
    %30 = vector.broadcast %29 : vector<1x32xf32> to vector<16x32xf32>
    %31 = arith.addf %28, %30 : vector<16x32xf32>
    %32 = arith.negf %31 : vector<16x32xf32>
    %33 = math.exp %32 : vector<16x32xf32>
    %cst_14 = arith.constant 1.000000e+00 : f32
    %34 = vector.broadcast %cst_14 : f32 to vector<16x32xf32>
    %35 = arith.addf %34, %33 : vector<16x32xf32>
    %36 = arith.divf %34, %35 : vector<16x32xf32>
    %37 = arith.mulf %31, %36 : vector<16x32xf32>
    %38 = arith.truncf %37 : vector<16x32xf32> to vector<16x32xbf16>
    %c0_15 = arith.constant 0 : index
    %c0_16 = arith.constant 0 : index
    %c0_17 = arith.constant 0 : index
    %39 = vector.load %arg6[%c0_15, %c0_16, %c0_17] : memref<1x16x32xbf16, #tpu.memory_space<vmem>>, vector<1x16x32xbf16>
    %40 = vector.shape_cast %39 : vector<1x16x32xbf16> to vector<16x32xbf16>
    %41 = vector.shape_cast %38 : vector<16x32xbf16> to vector<1x16x32xbf16>
    tpu.vector_store %arg6[%c0_15, %c0_16, %c0_17], %41 {strides = array<i32>} : memref<1x16x32xbf16, #tpu.memory_space<vmem>>, vector<1x16x32xbf16>,
    return
  }
  func.func @transform_0(%arg0: i32) -> (i32, i32, i32) {
    %c0_i32 = arith.constant 0 : i32
    %c0_i32_0 = arith.constant 0 : i32
    %c0_i32_1 = arith.constant 0 : i32
    return %arg0, %c0_i32, %c0_i32_0 : i32, i32, i32
  }
  func.func @transform_1(%arg0: i32) -> (i32, i32) {
    %c0_i32 = arith.constant 0 : i32
    %c0_i32_0 = arith.constant 0 : i32
    %c0_i32_1 = arith.constant 0 : i32
    return %c0_i32, %c0_i32_0 : i32, i32
  }
  func.func @transform_2(%arg0: i32) -> (i32, i32) {
    %c0_i32 = arith.constant 0 : i32
    %c0_i32_0 = arith.constant 0 : i32
    %c0_i32_1 = arith.constant 0 : i32
    return %c0_i32, %c0_i32_0 : i32, i32
  }
  func.func @transform_3(%arg0: i32) -> (i32, i32) {
    %c0_i32 = arith.constant 0 : i32
    %c0_i32_0 = arith.constant 0 : i32
    %c0_i32_1 = arith.constant 0 : i32
    return %c0_i32, %c0_i32_0 : i32, i32
  }
  func.func @transform_4(%arg0: i32) -> (i32, i32) {
    %c0_i32 = arith.constant 0 : i32
    %c0_i32_0 = arith.constant 0 : i32
    %c0_i32_1 = arith.constant 0 : i32
    return %c0_i32, %c0_i32_0 : i32, i32
  }
  func.func @transform_5(%arg0: i32) -> (i32, i32, i32) {
    %c0_i32 = arith.constant 0 : i32
    %c0_i32_0 = arith.constant 0 : i32
    %c0_i32_1 = arith.constant 0 : i32
    return %arg0, %c0_i32, %c0_i32_0 : i32, i32, i32
  }
}

module attributes {stable_mosaic.version = 11 : i64} {
  func.func @_ln_kernel(%arg0: i32, %arg1: memref<32x32xf32, #tpu.memory_space<vmem>>, %arg2: memref<1x32xf32, #tpu.memory_space<vmem>>, %arg3: memref<1x32xf32, #tpu.memory_space<vmem>>, %arg4: memref<32x32xf32, #tpu.memory_space<vmem>>) attributes {dimension_semantics = [#tpu.dimension_semantics<parallel>], iteration_bounds = array<i64: 1>, scalar_prefetch = 0 : i64, scratch_operands = 0 : i64, tpu.core_type = #tpu.core_type<tc>, window_params = [{transform_indices = @transform_0, window_bounds = array<i64: 32, 32>}, {pipeline_mode = #tpu.pipeline_mode<synchronous>, transform_indices = @transform_1, window_bounds = array<i64: 1, 32>}, {pipeline_mode = #tpu.pipeline_mode<synchronous>, transform_indices = @transform_2, window_bounds = array<i64: 1, 32>}, {transform_indices = @transform_3, window_bounds = array<i64: 32, 32>}]} {
    %c0 = arith.constant 0 : index
    %c0_0 = arith.constant 0 : index
    %0 = vector.load %arg1[%c0, %c0_0] : memref<32x32xf32, #tpu.memory_space<vmem>>, vector<32x32xf32>
    %c0_1 = arith.constant 0 : index
    %c0_2 = arith.constant 0 : index
    %1 = vector.load %arg2[%c0_1, %c0_2] : memref<1x32xf32, #tpu.memory_space<vmem>>, vector<1x32xf32>
    %c0_3 = arith.constant 0 : index
    %c0_4 = arith.constant 0 : index
    %2 = vector.load %arg3[%c0_3, %c0_4] : memref<1x32xf32, #tpu.memory_space<vmem>>, vector<1x32xf32>
    %cst = arith.constant dense<0.000000e+00> : vector<32xf32>
    %3 = vector.multi_reduction <add>, %0, %cst [1] : vector<32x32xf32> to vector<32xf32>
    %4 = vector.shape_cast %3 : vector<32xf32> to vector<32x1xf32>
    %cst_5 = arith.constant 3.200000e+01 : f32
    %5 = vector.broadcast %cst_5 : f32 to vector<32x1xf32>
    %6 = arith.divf %4, %5 : vector<32x1xf32>
    %7 = vector.broadcast %6 : vector<32x1xf32> to vector<32x32xf32>
    %8 = arith.subf %0, %7 : vector<32x32xf32>
    %9 = arith.mulf %8, %8 : vector<32x32xf32>
    %cst_6 = arith.constant dense<0.000000e+00> : vector<32xf32>
    %10 = vector.multi_reduction <add>, %9, %cst_6 [1] : vector<32x32xf32> to vector<32xf32>
    %11 = vector.shape_cast %10 : vector<32xf32> to vector<32x1xf32>
    %cst_7 = arith.constant 3.200000e+01 : f32
    %12 = vector.broadcast %cst_7 : f32 to vector<32x1xf32>
    %13 = arith.divf %11, %12 : vector<32x1xf32>
    %14 = vector.broadcast %6 : vector<32x1xf32> to vector<32x32xf32>
    %15 = arith.subf %0, %14 : vector<32x32xf32>
    %cst_8 = arith.constant 9.99999974E-6 : f32
    %16 = vector.broadcast %cst_8 : f32 to vector<32x1xf32>
    %17 = arith.addf %13, %16 : vector<32x1xf32>
    %18 = math.rsqrt %17 : vector<32x1xf32>
    %19 = vector.broadcast %18 : vector<32x1xf32> to vector<32x32xf32>
    %20 = arith.mulf %15, %19 : vector<32x32xf32>
    %21 = vector.broadcast %1 : vector<1x32xf32> to vector<32x32xf32>
    %22 = arith.mulf %20, %21 : vector<32x32xf32>
    %23 = vector.broadcast %2 : vector<1x32xf32> to vector<32x32xf32>
    %24 = arith.addf %22, %23 : vector<32x32xf32>
    %c0_9 = arith.constant 0 : index
    %c0_10 = arith.constant 0 : index
    %25 = vector.load %arg4[%c0_9, %c0_10] : memref<32x32xf32, #tpu.memory_space<vmem>>, vector<32x32xf32>
    tpu.vector_store %arg4[%c0_9, %c0_10], %24 {strides = array<i32>} : memref<32x32xf32, #tpu.memory_space<vmem>>, vector<32x32xf32>,
    return
  }
  func.func @transform_0(%arg0: i32) -> (i32, i32) {
    %c0_i32 = arith.constant 0 : i32
    %c0_i32_0 = arith.constant 0 : i32
    return %arg0, %c0_i32 : i32, i32
  }
  func.func @transform_1(%arg0: i32) -> (i32, i32) {
    %c0_i32 = arith.constant 0 : i32
    %c0_i32_0 = arith.constant 0 : i32
    %c0_i32_1 = arith.constant 0 : i32
    return %c0_i32, %c0_i32_0 : i32, i32
  }
  func.func @transform_2(%arg0: i32) -> (i32, i32) {
    %c0_i32 = arith.constant 0 : i32
    %c0_i32_0 = arith.constant 0 : i32
    %c0_i32_1 = arith.constant 0 : i32
    return %c0_i32, %c0_i32_0 : i32, i32
  }
  func.func @transform_3(%arg0: i32) -> (i32, i32) {
    %c0_i32 = arith.constant 0 : i32
    %c0_i32_0 = arith.constant 0 : i32
    return %arg0, %c0_i32 : i32, i32
  }
}

</mosaic_0001>

<llo_original>
// kernel: _conformer_forward_jit.25
$region0: #{_conformer_forward_jit.25}
  #allocation0 [shape = 'u32[]', space=smem, size = 0x4, offset = 0x4, fixed_abs, tag = 'smem constant byte address 0x4 - core index']
  #allocation1 [shape = 'u32[144,128]{1,0:T(1,128)}', space=vmem, size = 0x12000, scoped, tag = 'internal scratch']
  %s0 = inlined_call_operand.vmem [shape: bf16[32,32], index: 0, kind: input, shape index: {}]
  %s1 = inlined_call_operand.vmem [shape: bf16[32,32], index: 1, kind: input, shape index: {}]
  %s2 = inlined_call_operand.vmem [shape: f32[1,32], index: 2, kind: input, shape index: {}]
  %s3 = inlined_call_operand.vmem [shape: f32[32,32], index: 3, kind: output, shape index: {}]
  %s4 = sld [smem:[#allocation0]]
  $region22: #{_conformer_forward_jit.25} parent=0
    _
  %s6 = ssub.s32 1, %s4
  %s7 = scalar_select 0, %s6, %s4
  // Predicated region
  $region2: #{_conformer_forward_jit.25} parent=0 // pred_check
    _
  $region3: #{_conformer_forward_jit.25} parent=0 // pred_check_branch
    %9 = sbr.rel (0) target = $region5
  $region4: #{_conformer_forward_jit.25} parent=0 // pred_region
    _
  $region5: #{_conformer_forward_jit.25} parent=0 // pred_fallthru
    _
  // Predicated region
  $region6: #{_conformer_forward_jit.25} parent=0 // pred_check
    _
  $region7: #{_conformer_forward_jit.25} parent=0 // pred_check_branch
    %11 = sbr.rel (0) target = $region9
  $region8: #{_conformer_forward_jit.25} parent=0 // pred_region
    _
  $region9: #{_conformer_forward_jit.25} parent=0 // pred_fallthru
    _
  // Predicated region
  $region10: #{_conformer_forward_jit.25} parent=0 // pred_check
    _
  $region11: #{_conformer_forward_jit.25} parent=0 // pred_check_branch
    %13 = sbr.rel (0) target = $region13
  $region12: #{_conformer_forward_jit.25} parent=0 // pred_region
    _
  $region13: #{_conformer_forward_jit.25} parent=0 // pred_fallthru
    _
  %v15 = vld [vmem:[%s0] sm:$0xf]
  %v16 = vld [vmem:[%s0 + $0x4] sm:$0xf]
  %v17 = vld [vmem:[%s0 + $0x8] sm:$0xf]
  %v18 = vld [vmem:[%s0 + $0xc] sm:$0xf]
  %v19 = vld [vmem:[%s1] sm:$0xf]
  %v20 = vld [vmem:[%s1 + $0x4] sm:$0xf]
  %v21 = vld [vmem:[%s1 + $0x8] sm:$0xf]
  %v22 = vld [vmem:[%s1 + $0xc] sm:$0xf]
  %v23 = vld [vmem:[%s2] sm:$0x1]
  %v25 = vlaneseq
  %v26 = vshrl.u32 %v25, 7
  %v27 = vsub.s32 0, %v26
  %v28 = vrot.slane %v23, %v27
  %v34 = vunpack.c.l.b16 %v15
  %v35 = vunpack.c.l.b16 %v16
  %v36 = vunpack.c.l.b16 %v17
  %v37 = vunpack.c.l.b16 %v18
  %v38 = vpack.c.b16 %v35, %v34
  %v39 = vpack.c.b16 %v37, %v36
  %v44 = vunpack.c.l.b16 %v19
  %v45 = vunpack.c.l.b16 %v20
  %v46 = vunpack.c.l.b16 %v21
  %v47 = vunpack.c.l.b16 %v22
  %v48 = vpack.c.b16 %v45, %v44
  %v49 = vpack.c.b16 %v47, %v46
  %vm52 = vcmask 261120
  %v54 = vsel %vm52, %v38, 0
  %v57 = vsel %vm52, %v39, 0
  %59 = vmatprep.subr.bf16.mxu0 0
  %60 = vmatpush1.bf16.msra.mxu0 0
  %61 = vmatprep.subr.bf16.mxu0 0
  %62 = vmatpush1.bf16.msra.mxu0 0
  %63 = vmatprep.subr.bf16.mxu0 0
  %64 = vmatpush1.bf16.msra.mxu0 0
  %65 = vmatprep.subr.bf16.mxu0 0
  %66 = vmatpush1.bf16.msra.mxu0 0
  %67 = vmatprep.subr.bf16.mxu0 0
  %68 = vmatpush1.bf16.msra.mxu0 0
  %69 = vmatprep.subr.bf16.mxu0 0
  %70 = vmatpush1.bf16.msra.mxu0 0
  %71 = vmatprep.subr.bf16.mxu0 0
  %72 = vmatpush1.bf16.msra.mxu0 %v49
  %73 = vmatprep.subr.bf16.mxu0 0
  %74 = vmatpush1.bf16.msra.mxu0 %v48
  %75 = vmatprep.subr.bf16.mxu0 0
  %76 = vmatpush2.bf16.msra.mxu0 0
  %77 = vmatprep.subr.bf16.mxu0 0
  %78 = vmatpush2.bf16.msra.mxu0 0
  %79 = vmatprep.subr.bf16.mxu0 0
  %80 = vmatpush2.bf16.msra.mxu0 0
  %81 = vmatprep.subr.bf16.mxu0 0
  %82 = vmatpush2.bf16.msra.mxu0 0
  %83 = vmatprep.subr.bf16.mxu0 0
  %84 = vmatpush2.bf16.msra.mxu0 0
  %85 = vmatprep.subr.bf16.mxu0 0
  %86 = vmatpush2.bf16.msra.mxu0 0
  %87 = vmatprep.subr.bf16.mxu0 0
  %88 = vmatpush2.bf16.msra.mxu0 0
  %89 = vmatprep.subr.bf16.mxu0 0
  %90 = vmatpush2.bf16.msra.mxu0 0
  %91 = vmatprep.mubr.bf16.mxu0 0
  %92 = vmatmul.mubr.bf16.gmra.mxu0 %v54
  %v93 = vpop.f32.mrf.mxu0
  %v94 = vadd.f32 %v28, %v93
  %v95 = vpop.f32.mrf.mxu0
  %v96 = vpop.f32.mrf.mxu0
  %v97 = vadd.f32 %v28, %v96
  %v98 = vpop.f32.mrf.mxu0
  %99 = vmatprep.mubr.bf16.mxu0 0
  %100 = vmatmul.mubr.bf16.gmra.mxu0 %v57
  %v101 = vpop.f32.mrf.mxu0
  %v102 = vadd.f32 %v28, %v101
  %v103 = vpop.f32.mrf.mxu0
  %v104 = vpop.f32.mrf.mxu0
  %v105 = vadd.f32 %v28, %v104
  %v106 = vpop.f32.mrf.mxu0
  %107 = vdwg.mxu0
  %108 = vst.msk [vmem:[%s3] sm:$0xff] %vm52, %v94
  %109 = vst.msk [vmem:[%s3 + $0x8] sm:$0xff] %vm52, %v97
  %110 = vst.msk [vmem:[%s3 + $0x10] sm:$0xff] %vm52, %v102
  %111 = vst.msk [vmem:[%s3 + $0x18] sm:$0xff] %vm52, %v105
  // Predicated region
  $region14: #{_conformer_forward_jit.25} parent=0 // pred_check
    _
  $region15: #{_conformer_forward_jit.25} parent=0 // pred_check_branch
    %113 = sbr.rel (0) target = $region17
  $region16: #{_conformer_forward_jit.25} parent=0 // pred_region
    _
  $region17: #{_conformer_forward_jit.25} parent=0 // pred_fallthru
    _
  // Predicated region
  $region18: #{_conformer_forward_jit.25} parent=0 // pred_check
    _
  $region19: #{_conformer_forward_jit.25} parent=0 // pred_check_branch
    %115 = sbr.rel (0) target = $region21
  $region20: #{_conformer_forward_jit.25} parent=0 // pred_region
    _
  $region21: #{_conformer_forward_jit.25} parent=0 // pred_fallthru
    _

// kernel: _conformer_forward_jit.24
$region0: #{_conformer_forward_jit.24}
  #allocation0 [shape = 'u32[]', space=smem, size = 0x4, offset = 0x4, fixed_abs, tag = 'smem constant byte address 0x4 - core index']
  #allocation1 [shape = 'u32[144,128]{1,0:T(1,128)}', space=vmem, size = 0x12000, scoped, tag = 'internal scratch']
  %s0 = inlined_call_operand.vmem [shape: bf16[32,48], index: 0, kind: input, shape index: {}]
  %s1 = inlined_call_operand.vmem [shape: bf16[48,32], index: 1, kind: input, shape index: {}]
  %s2 = inlined_call_operand.vmem [shape: f32[1,32], index: 2, kind: input, shape index: {}]
  %s3 = inlined_call_operand.vmem [shape: bf16[32,32], index: 3, kind: output, shape index: {}]
  %s4 = sld [smem:[#allocation0]]
  $region22: #{_conformer_forward_jit.24} parent=0
    _
  %s6 = ssub.s32 1, %s4
  %s7 = scalar_select 0, %s6, %s4
  // Predicated region
  $region2: #{_conformer_forward_jit.24} parent=0 // pred_check
    _
  $region3: #{_conformer_forward_jit.24} parent=0 // pred_check_branch
    %9 = sbr.rel (0) target = $region5
  $region4: #{_conformer_forward_jit.24} parent=0 // pred_region
    _
  $region5: #{_conformer_forward_jit.24} parent=0 // pred_fallthru
    _
  // Predicated region
  $region6: #{_conformer_forward_jit.24} parent=0 // pred_check
    _
  $region7: #{_conformer_forward_jit.24} parent=0 // pred_check_branch
    %11 = sbr.rel (0) target = $region9
  $region8: #{_conformer_forward_jit.24} parent=0 // pred_region
    _
  $region9: #{_conformer_forward_jit.24} parent=0 // pred_fallthru
    _
  // Predicated region
  $region10: #{_conformer_forward_jit.24} parent=0 // pred_check
    _
  $region11: #{_conformer_forward_jit.24} parent=0 // pred_check_branch
    %13 = sbr.rel (0) target = $region13
  $region12: #{_conformer_forward_jit.24} parent=0 // pred_region
    _
  $region13: #{_conformer_forward_jit.24} parent=0 // pred_fallthru
    _
  %v15 = vld [vmem:[%s0] sm:$0xf]
  %v16 = vld [vmem:[%s0 + $0x4] sm:$0xf]
  %v17 = vld [vmem:[%s0 + $0x8] sm:$0xf]
  %v18 = vld [vmem:[%s0 + $0xc] sm:$0xf]
  %v19 = vld [vmem:[%s1] sm:$0xf]
  %v20 = vld [vmem:[%s1 + $0x4] sm:$0xf]
  %v21 = vld [vmem:[%s1 + $0x8] sm:$0xf]
  %v22 = vld [vmem:[%s1 + $0xc] sm:$0xf]
  %v23 = vld [vmem:[%s1 + $0x10] sm:$0xf]
  %v24 = vld [vmem:[%s1 + $0x14] sm:$0xf]
  %v25 = vld [vmem:[%s2] sm:$0x1]
  %v27 = vlaneseq
  %v28 = vshrl.u32 %v27, 7
  %v29 = vsub.s32 0, %v28
  %v30 = vrot.slane %v25, %v29
  %v36 = vunpack.c.l.b16 %v15
  %v37 = vunpack.c.l.b16 %v16
  %v38 = vunpack.c.l.b16 %v17
  %v39 = vunpack.c.l.b16 %v18
  %v40 = vpack.c.b16 %v37, %v36
  %v41 = vpack.c.b16 %v39, %v38
  %v48 = vunpack.c.l.b16 %v19
  %v49 = vunpack.c.l.b16 %v20
  %v50 = vunpack.c.l.b16 %v21
  %v51 = vunpack.c.l.b16 %v22
  %v52 = vunpack.c.l.b16 %v23
  %v53 = vunpack.c.l.b16 %v24
  %v54 = vpack.c.b16 %v49, %v48
  %v55 = vpack.c.b16 %v51, %v50
  %v56 = vpack.c.b16 %v53, %v52
  %vm60 = vcmask 392192
  %v62 = vsel %vm60, %v40, 0
  %v65 = vsel %vm60, %v41, 0
  %67 = vmatprep.subr.bf16.mxu0 0
  %68 = vmatpush1.bf16.msra.mxu0 0
  %69 = vmatprep.subr.bf16.mxu0 0
  %70 = vmatpush1.bf16.msra.mxu0 0
  %71 = vmatprep.subr.bf16.mxu0 0
  %72 = vmatpush1.bf16.msra.mxu0 0
  %73 = vmatprep.subr.bf16.mxu0 0
  %74 = vmatpush1.bf16.msra.mxu0 0
  %75 = vmatprep.subr.bf16.mxu0 0
  %76 = vmatpush1.bf16.msra.mxu0 0
  %77 = vmatprep.subr.bf16.mxu0 0
  %78 = vmatpush1.bf16.msra.mxu0 %v56
  %79 = vmatprep.subr.bf16.mxu0 0
  %80 = vmatpush1.bf16.msra.mxu0 %v55
  %81 = vmatprep.subr.bf16.mxu0 0
  %82 = vmatpush1.bf16.msra.mxu0 %v54
  %83 = vmatprep.subr.bf16.mxu0 0
  %84 = vmatpush2.bf16.msra.mxu0 0
  %85 = vmatprep.subr.bf16.mxu0 0
  %86 = vmatpush2.bf16.msra.mxu0 0
  %87 = vmatprep.subr.bf16.mxu0 0
  %88 = vmatpush2.bf16.msra.mxu0 0
  %89 = vmatprep.subr.bf16.mxu0 0
  %90 = vmatpush2.bf16.msra.mxu0 0
  %91 = vmatprep.subr.bf16.mxu0 0
  %92 = vmatpush2.bf16.msra.mxu0 0
  %93 = vmatprep.subr.bf16.mxu0 0
  %94 = vmatpush2.bf16.msra.mxu0 0
  %95 = vmatprep.subr.bf16.mxu0 0
  %96 = vmatpush2.bf16.msra.mxu0 0
  %97 = vmatprep.subr.bf16.mxu0 0
  %98 = vmatpush2.bf16.msra.mxu0 0
  %99 = vmatprep.mubr.bf16.mxu0 0
  %100 = vmatmul.mubr.bf16.gmra.mxu0 %v62
  %v101 = vpop.f32.mrf.mxu0
  %v102 = vadd.f32 %v30, %v101
  %v103 = vpop.f32.mrf.mxu0
  %v104 = vpop.f32.mrf.mxu0
  %v105 = vadd.f32 %v30, %v104
  %v106 = vpop.f32.mrf.mxu0
  %107 = vmatprep.mubr.bf16.mxu0 0
  %108 = vmatmul.mubr.bf16.gmra.mxu0 %v65
  %v109 = vpop.f32.mrf.mxu0
  %v110 = vadd.f32 %v30, %v109
  %v111 = vpop.f32.mrf.mxu0
  %v112 = vpop.f32.mrf.mxu0
  %v113 = vadd.f32 %v30, %v112
  %v114 = vpop.f32.mrf.mxu0
  %115 = vdwg.mxu0
  %v116 = vpack.c.bf16 %v105, %v102
  %v117 = vpack.c.bf16 %v113, %v110
  %v120 = vunpack.c.l.b16 %v116
  %v121 = vunpack.c.h.b16 %v116
  %v122 = vunpack.c.l.b16 %v117
  %v123 = vunpack.c.h.b16 %v117
  %v124 = vpack.c.b16 %v120, %v120
  %v125 = vpack.c.b16 %v121, %v121
  %v126 = vpack.c.b16 %v122, %v122
  %v127 = vpack.c.b16 %v123, %v123
  %vm132 = vcmask 257024
  %133 = vst.msk [vmem:[%s3] sm:$0xf] %vm132, %v124
  %134 = vst.msk [vmem:[%s3 + $0x4] sm:$0xf] %vm132, %v125
  %135 = vst.msk [vmem:[%s3 + $0x8] sm:$0xf] %vm132, %v126
  %136 = vst.msk [vmem:[%s3 + $0xc] sm:$0xf] %vm132, %v127
  // Predicated region
  $region14: #{_conformer_forward_jit.24} parent=0 // pred_check
    _
  $region15: #{_conformer_forward_jit.24} parent=0 // pred_check_branch
    %138 = sbr.rel (0) target = $region17
  $region16: #{_conformer_forward_jit.24} parent=0 // pred_region
    _
  $region17: #{_conformer_forward_jit.24} parent=0 // pred_fallthru
    _
  // Predicated region
  $region18: #{_conformer_forward_jit.24} parent=0 // pred_check
    _
  $region19: #{_conformer_forward_jit.24} parent=0 // pred_check_branch
    %140 = sbr.rel (0) target = $region21
  $region20: #{_conformer_forward_jit.24} parent=0 // pred_region
    _
  $region21: #{_conformer_forward_jit.24} parent=0 // pred_fallthru
    _

// kernel: _conformer_forward_jit.27
$region0: #{_conformer_forward_jit.27}
  #allocation0 [shape = 'u32[]', space=smem, size = 0x4, offset = 0x4, fixed_abs, tag = 'smem constant byte address 0x4 - core index']
  #allocation1 [shape = 'u32[144,128]{1,0:T(1,128)}', space=vmem, size = 0x12000, scoped, tag = 'internal scratch']
  %s0 = inlined_call_operand.vmem [shape: bf16[32,64], index: 0, kind: input, shape index: {}]
  %s1 = inlined_call_operand.vmem [shape: bf16[64,32], index: 1, kind: input, shape index: {}]
  %s2 = inlined_call_operand.vmem [shape: f32[1,32], index: 2, kind: input, shape index: {}]
  %s3 = inlined_call_operand.vmem [shape: f32[32,32], index: 3, kind: input, shape index: {}]
  %s4 = inlined_call_operand.vmem [shape: f32[32,32], index: 4, kind: output, shape index: {}]
  %s5 = sld [smem:[#allocation0]]
  $region26: #{_conformer_forward_jit.27} parent=0
    _
  %s7 = ssub.s32 1, %s5
  %s8 = scalar_select 0, %s7, %s5
  // Predicated region
  $region2: #{_conformer_forward_jit.27} parent=0 // pred_check
    _
  $region3: #{_conformer_forward_jit.27} parent=0 // pred_check_branch
    %10 = sbr.rel (0) target = $region5
  $region4: #{_conformer_forward_jit.27} parent=0 // pred_region
    _
  $region5: #{_conformer_forward_jit.27} parent=0 // pred_fallthru
    _
  // Predicated region
  $region6: #{_conformer_forward_jit.27} parent=0 // pred_check
    _
  $region7: #{_conformer_forward_jit.27} parent=0 // pred_check_branch
    %12 = sbr.rel (0) target = $region9
  $region8: #{_conformer_forward_jit.27} parent=0 // pred_region
    _
  $region9: #{_conformer_forward_jit.27} parent=0 // pred_fallthru
    _
  // Predicated region
  $region10: #{_conformer_forward_jit.27} parent=0 // pred_check
    _
  $region11: #{_conformer_forward_jit.27} parent=0 // pred_check_branch
    %14 = sbr.rel (0) target = $region13
  $region12: #{_conformer_forward_jit.27} parent=0 // pred_region
    _
  $region13: #{_conformer_forward_jit.27} parent=0 // pred_fallthru
    _
  // Predicated region
  $region14: #{_conformer_forward_jit.27} parent=0 // pred_check
    _
  $region15: #{_conformer_forward_jit.27} parent=0 // pred_check_branch
    %16 = sbr.rel (0) target = $region17
  $region16: #{_conformer_forward_jit.27} parent=0 // pred_region
    _
  $region17: #{_conformer_forward_jit.27} parent=0 // pred_fallthru
    _
  %v18 = vld [vmem:[%s0] sm:$0xf]
  %v19 = vld [vmem:[%s0 + $0x4] sm:$0xf]
  %v20 = vld [vmem:[%s0 + $0x8] sm:$0xf]
  %v21 = vld [vmem:[%s0 + $0xc] sm:$0xf]
  %v22 = vld [vmem:[%s1] sm:$0xf]
  %v23 = vld [vmem:[%s1 + $0x4] sm:$0xf]
  %v24 = vld [vmem:[%s1 + $0x8] sm:$0xf]
  %v25 = vld [vmem:[%s1 + $0xc] sm:$0xf]
  %v26 = vld [vmem:[%s1 + $0x10] sm:$0xf]
  %v27 = vld [vmem:[%s1 + $0x14] sm:$0xf]
  %v28 = vld [vmem:[%s1 + $0x18] sm:$0xf]
  %v29 = vld [vmem:[%s1 + $0x1c] sm:$0xf]
  %v30 = vld [vmem:[%s2] sm:$0x1]
  %v32 = vlaneseq
  %v33 = vshrl.u32 %v32, 7
  %v34 = vsub.s32 0, %v33
  %v35 = vrot.slane %v30, %v34
  %v41 = vunpack.c.l.b16 %v18
  %v42 = vunpack.c.l.b16 %v19
  %v43 = vunpack.c.l.b16 %v20
  %v44 = vunpack.c.l.b16 %v21
  %v45 = vpack.c.b16 %v42, %v41
  %v46 = vpack.c.b16 %v44, %v43
  %v55 = vunpack.c.l.b16 %v22
  %v56 = vunpack.c.l.b16 %v23
  %v57 = vunpack.c.l.b16 %v24
  %v58 = vunpack.c.l.b16 %v25
  %v59 = vunpack.c.l.b16 %v26
  %v60 = vunpack.c.l.b16 %v27
  %v61 = vunpack.c.l.b16 %v28
  %v62 = vunpack.c.l.b16 %v29
  %v63 = vpack.c.b16 %v56, %v55
  %v64 = vpack.c.b16 %v58, %v57
  %v65 = vpack.c.b16 %v60, %v59
  %v66 = vpack.c.b16 %v62, %v61
  %vm71 = vcmask 523264
  %v73 = vsel %vm71, %v45, 0
  %v76 = vsel %vm71, %v46, 0
  %78 = vmatprep.subr.bf16.mxu0 0
  %79 = vmatpush1.bf16.msra.mxu0 0
  %80 = vmatprep.subr.bf16.mxu0 0
  %81 = vmatpush1.bf16.msra.mxu0 0
  %82 = vmatprep.subr.bf16.mxu0 0
  %83 = vmatpush1.bf16.msra.mxu0 0
  %84 = vmatprep.subr.bf16.mxu0 0
  %85 = vmatpush1.bf16.msra.mxu0 0
  %86 = vmatprep.subr.bf16.mxu0 0
  %87 = vmatpush1.bf16.msra.mxu0 %v66
  %88 = vmatprep.subr.bf16.mxu0 0
  %89 = vmatpush1.bf16.msra.mxu0 %v65
  %90 = vmatprep.subr.bf16.mxu0 0
  %91 = vmatpush1.bf16.msra.mxu0 %v64
  %92 = vmatprep.subr.bf16.mxu0 0
  %93 = vmatpush1.bf16.msra.mxu0 %v63
  %94 = vmatprep.subr.bf16.mxu0 0
  %95 = vmatpush2.bf16.msra.mxu0 0
  %96 = vmatprep.subr.bf16.mxu0 0
  %97 = vmatpush2.bf16.msra.mxu0 0
  %98 = vmatprep.subr.bf16.mxu0 0
  %99 = vmatpush2.bf16.msra.mxu0 0
  %100 = vmatprep.subr.bf16.mxu0 0
  %101 = vmatpush2.bf16.msra.mxu0 0
  %102 = vmatprep.subr.bf16.mxu0 0
  %103 = vmatpush2.bf16.msra.mxu0 0
  %104 = vmatprep.subr.bf16.mxu0 0
  %105 = vmatpush2.bf16.msra.mxu0 0
  %106 = vmatprep.subr.bf16.mxu0 0
  %107 = vmatpush2.bf16.msra.mxu0 0
  %108 = vmatprep.subr.bf16.mxu0 0
  %109 = vmatpush2.bf16.msra.mxu0 0
  %110 = vmatprep.mubr.bf16.mxu0 0
  %111 = vmatmul.mubr.bf16.gmra.mxu0 %v73
  %v112 = vpop.f32.mrf.mxu0
  %v113 = vadd.f32 %v35, %v112
  %v114 = vpop.f32.mrf.mxu0
  %v115 = vpop.f32.mrf.mxu0
  %v116 = vadd.f32 %v35, %v115
  %v117 = vpop.f32.mrf.mxu0
  %118 = vmatprep.mubr.bf16.mxu0 0
  %119 = vmatmul.mubr.bf16.gmra.mxu0 %v76
  %v120 = vpop.f32.mrf.mxu0
  %v121 = vadd.f32 %v35, %v120
  %v122 = vpop.f32.mrf.mxu0
  %v123 = vpop.f32.mrf.mxu0
  %v124 = vadd.f32 %v35, %v123
  %v125 = vpop.f32.mrf.mxu0
  %126 = vdwg.mxu0
  %v127 = vld [vmem:[%s3] sm:$0xff]
  %v128 = vld [vmem:[%s3 + $0x8] sm:$0xff]
  %v129 = vld [vmem:[%s3 + $0x10] sm:$0xff]
  %v130 = vld [vmem:[%s3 + $0x18] sm:$0xff]
  %v131 = vmul.f32 %v113, 0.5
  %v132 = vmul.f32 %v116, 0.5
  %v133 = vmul.f32 %v121, 0.5
  %v134 = vmul.f32 %v124, 0.5
  %v135 = vadd.f32 %v127, %v131
  %v136 = vadd.f32 %v128, %v132
  %v137 = vadd.f32 %v129, %v133
  %v138 = vadd.f32 %v130, %v134
  %vm139 = vcmask 261120
  %140 = vst.msk [vmem:[%s4] sm:$0xff] %vm139, %v135
  %141 = vst.msk [vmem:[%s4 + $0x8] sm:$0xff] %vm139, %v136
  %142 = vst.msk [vmem:[%s4 + $0x10] sm:$0xff] %vm139, %v137
  %143 = vst.msk [vmem:[%s4 + $0x18] sm:$0xff] %vm139, %v138
  // Predicated region
  $region18: #{_conformer_forward_jit.27} parent=0 // pred_check
    _
  $region19: #{_conformer_forward_jit.27} parent=0 // pred_check_branch
    %145 = sbr.rel (0) target = $region21
  $region20: #{_conformer_forward_jit.27} parent=0 // pred_region
    _
  $region21: #{_conformer_forward_jit.27} parent=0 // pred_fallthru
    _
  // Predicated region
  $region22: #{_conformer_forward_jit.27} parent=0 // pred_check
    _
  $region23: #{_conformer_forward_jit.27} parent=0 // pred_check_branch
    %147 = sbr.rel (0) target = $region25
  $region24: #{_conformer_forward_jit.27} parent=0 // pred_region
    _
  $region25: #{_conformer_forward_jit.27} parent=0 // pred_fallthru
    _

// kernel: _conformer_forward_jit.26
$region0: #{_conformer_forward_jit.26}
  #allocation0 [shape = 'u32[]', space=smem, size = 0x4, offset = 0x4, fixed_abs, tag = 'smem constant byte address 0x4 - core index']
  #allocation1 [shape = 'u32[144,128]{1,0:T(1,128)}', space=vmem, size = 0x12000, scoped, tag = 'internal scratch']
  %s0 = inlined_call_operand.vmem [shape: f32[32,32], index: 0, kind: input, shape index: {}]
  %s1 = inlined_call_operand.vmem [shape: f32[1,32], index: 1, kind: input, shape index: {}]
  %s2 = inlined_call_operand.vmem [shape: f32[1,32], index: 2, kind: input, shape index: {}]
  %s3 = inlined_call_operand.vmem [shape: bf16[32,64], index: 3, kind: input, shape index: {}]
  %s4 = inlined_call_operand.vmem [shape: f32[1,64], index: 4, kind: input, shape index: {}]
  %s5 = inlined_call_operand.vmem [shape: bf16[32,64], index: 5, kind: output, shape index: {}]
  %s6 = sld [smem:[#allocation0]]
  $region30: #{_conformer_forward_jit.26} parent=0
    _
  %s8 = ssub.s32 1, %s6
  %s9 = scalar_select 0, %s8, %s6
  // Predicated region
  $region2: #{_conformer_forward_jit.26} parent=0 // pred_check
    _
  $region3: #{_conformer_forward_jit.26} parent=0 // pred_check_branch
    %11 = sbr.rel (0) target = $region5
  $region4: #{_conformer_forward_jit.26} parent=0 // pred_region
    _
  $region5: #{_conformer_forward_jit.26} parent=0 // pred_fallthru
    _
  // Predicated region
  $region6: #{_conformer_forward_jit.26} parent=0 // pred_check
    _
  $region7: #{_conformer_forward_jit.26} parent=0 // pred_check_branch
    %13 = sbr.rel (0) target = $region9
  $region8: #{_conformer_forward_jit.26} parent=0 // pred_region
    _
  $region9: #{_conformer_forward_jit.26} parent=0 // pred_fallthru
    _
  // Predicated region
  $region10: #{_conformer_forward_jit.26} parent=0 // pred_check
    _
  $region11: #{_conformer_forward_jit.26} parent=0 // pred_check_branch
    %15 = sbr.rel (0) target = $region13
  $region12: #{_conformer_forward_jit.26} parent=0 // pred_region
    _
  $region13: #{_conformer_forward_jit.26} parent=0 // pred_fallthru
    _
  // Predicated region
  $region14: #{_conformer_forward_jit.26} parent=0 // pred_check
    _
  $region15: #{_conformer_forward_jit.26} parent=0 // pred_check_branch
    %17 = sbr.rel (0) target = $region17
  $region16: #{_conformer_forward_jit.26} parent=0 // pred_region
    _
  $region17: #{_conformer_forward_jit.26} parent=0 // pred_fallthru
    _
  // Predicated region
  $region18: #{_conformer_forward_jit.26} parent=0 // pred_check
    _
  $region19: #{_conformer_forward_jit.26} parent=0 // pred_check_branch
    %19 = sbr.rel (0) target = $region21
  $region20: #{_conformer_forward_jit.26} parent=0 // pred_region
    _
  $region21: #{_conformer_forward_jit.26} parent=0 // pred_fallthru
    _
  %v21 = vld [vmem:[%s0] sm:$0xff]
  %v22 = vld [vmem:[%s0 + $0x8] sm:$0xff]
  %v23 = vld [vmem:[%s0 + $0x10] sm:$0xff]
  %v24 = vld [vmem:[%s0 + $0x18] sm:$0xff]
  %v25 = vld [vmem:[%s1] sm:$0x1]
  %v26 = vld [vmem:[%s2] sm:$0x1]
  %vm27 = vcmask 261120
  %v28 = vsel %vm27, %v21, 0.0
  %29 = vadd.xlane.f32.xlu0 %v28
  %v30 = vpop.xlane.xlu0 %29
  %v31 = vsel %vm27, %v22, 0.0
  %32 = vadd.xlane.f32.xlu0 %v31
  %v33 = vpop.xlane.xlu0 %32
  %v34 = vsel %vm27, %v23, 0.0
  %35 = vadd.xlane.f32.xlu0 %v34
  %v36 = vpop.xlane.xlu0 %35
  %v37 = vsel %vm27, %v24, 0.0
  %38 = vadd.xlane.f32.xlu0 %v37
  %v39 = vpop.xlane.xlu0 %38
  %v40 = vrcp.pop 32.0
  %v41 = vmul.f32 %v30, %v40
  %v42 = vmul.f32 %v33, %v40
  %v43 = vmul.f32 %v36, %v40
  %v44 = vmul.f32 %v39, %v40
  %v45 = vsub.f32 %v21, %v41
  %v46 = vsub.f32 %v22, %v42
  %v47 = vsub.f32 %v23, %v43
  %v48 = vsub.f32 %v24, %v44
  %v49 = vmul.f32 %v45, %v45
  %v50 = vmul.f32 %v46, %v46
  %v51 = vmul.f32 %v47, %v47
  %v52 = vmul.f32 %v48, %v48
  %v53 = vsel %vm27, %v49, 0.0
  %54 = vadd.xlane.f32.xlu0 %v53
  %v55 = vpop.xlane.xlu0 %54
  %v56 = vsel %vm27, %v50, 0.0
  %57 = vadd.xlane.f32.xlu0 %v56
  %v58 = vpop.xlane.xlu0 %57
  %v59 = vsel %vm27, %v51, 0.0
  %60 = vadd.xlane.f32.xlu0 %v59
  %v61 = vpop.xlane.xlu0 %60
  %v62 = vsel %vm27, %v52, 0.0
  %63 = vadd.xlane.f32.xlu0 %v62
  %v64 = vpop.xlane.xlu0 %63
  %v65 = vmul.f32 %v55, %v40
  %v66 = vmul.f32 %v58, %v40
  %v67 = vmul.f32 %v61, %v40
  %v68 = vmul.f32 %v64, %v40
  %v69 = vadd.f32 %v65, 1e-05
  %v70 = vadd.f32 %v66, 1e-05
  %v71 = vadd.f32 %v67, 1e-05
  %v72 = vadd.f32 %v68, 1e-05
  %v73 = vrsqrt.pop %v69
  %v74 = vrsqrt.pop %v70
  %v75 = vrsqrt.pop %v71
  %v76 = vrsqrt.pop %v72
  %v77 = vmul.f32 %v45, %v73
  %v78 = vmul.f32 %v46, %v74
  %v79 = vmul.f32 %v47, %v75
  %v80 = vmul.f32 %v48, %v76
  %v82 = vlaneseq
  %v83 = vshrl.u32 %v82, 7
  %v84 = vsub.s32 0, %v83
  %v85 = vrot.slane %v25, %v84
  %v87 = vmul.f32 %v77, %v85
  %v88 = vmul.f32 %v78, %v85
  %v89 = vmul.f32 %v79, %v85
  %v90 = vmul.f32 %v80, %v85
  %v92 = vlaneseq
  %v93 = vshrl.u32 %v92, 7
  %v94 = vsub.s32 0, %v93
  %v95 = vrot.slane %v26, %v94
  %v97 = vadd.f32 %v87, %v95
  %v98 = vadd.f32 %v88, %v95
  %v99 = vadd.f32 %v89, %v95
  %v100 = vadd.f32 %v90, %v95
  %v101 = vpack.c.bf16 %v98, %v97
  %v102 = vpack.c.bf16 %v100, %v99
  %v103 = vld [vmem:[%s3] sm:$0xf]
  %v104 = vld [vmem:[%s3 + $0x4] sm:$0xf]
  %v105 = vld [vmem:[%s3 + $0x8] sm:$0xf]
  %v106 = vld [vmem:[%s3 + $0xc] sm:$0xf]
  %v107 = vld [vmem:[%s4] sm:$0x1]
  %v109 = vlaneseq
  %v110 = vshrl.u32 %v109, 7
  %v111 = vsub.s32 0, %v110
  %v112 = vrot.slane %v107, %v111
  %v118 = vunpack.c.l.b16 %v103
  %v119 = vunpack.c.l.b16 %v104
  %v120 = vunpack.c.l.b16 %v105
  %v121 = vunpack.c.l.b16 %v106
  %v122 = vpack.c.b16 %v119, %v118
  %v123 = vpack.c.b16 %v121, %v120
  %v127 = vsel %vm27, %v101, 0
  %v130 = vsel %vm27, %v102, 0
  %132 = vmatprep.subr.bf16.mxu0 0
  %133 = vmatpush1.bf16.msra.mxu0 0
  %134 = vmatprep.subr.bf16.mxu0 0
  %135 = vmatpush1.bf16.msra.mxu0 0
  %136 = vmatprep.subr.bf16.mxu0 0
  %137 = vmatpush1.bf16.msra.mxu0 0
  %138 = vmatprep.subr.bf16.mxu0 0
  %139 = vmatpush1.bf16.msra.mxu0 0
  %140 = vmatprep.subr.bf16.mxu0 0
  %141 = vmatpush1.bf16.msra.mxu0 0
  %142 = vmatprep.subr.bf16.mxu0 0
  %143 = vmatpush1.bf16.msra.mxu0 0
  %144 = vmatprep.subr.bf16.mxu0 0
  %145 = vmatpush1.bf16.msra.mxu0 %v123
  %146 = vmatprep.subr.bf16.mxu0 0
  %147 = vmatpush1.bf16.msra.mxu0 %v122
  %148 = vmatprep.subr.bf16.mxu0 0
  %149 = vmatpush2.bf16.msra.mxu0 0
  %150 = vmatprep.subr.bf16.mxu0 0
  %151 = vmatpush2.bf16.msra.mxu0 0
  %152 = vmatprep.subr.bf16.mxu0 0
  %153 = vmatpush2.bf16.msra.mxu0 0
  %154 = vmatprep.subr.bf16.mxu0 0
  %155 = vmatpush2.bf16.msra.mxu0 0
  %156 = vmatprep.subr.bf16.mxu0 0
  %157 = vmatpush2.bf16.msra.mxu0 0
  %158 = vmatprep.subr.bf16.mxu0 0
  %159 = vmatpush2.bf16.msra.mxu0 0
  %160 = vmatprep.subr.bf16.mxu0 0
  %161 = vmatpush2.bf16.msra.mxu0 0
  %162 = vmatprep.subr.bf16.mxu0 0
  %163 = vmatpush2.bf16.msra.mxu0 0
  %164 = vmatprep.mubr.bf16.mxu0 0
  %165 = vmatmul.mubr.bf16.gmra.mxu0 %v127
  %v166 = vpop.f32.mrf.mxu0
  %v167 = vadd.f32 %v112, %v166
  %v168 = vpop.f32.mrf.mxu0
  %v169 = vpop.f32.mrf.mxu0
  %v170 = vadd.f32 %v112, %v169
  %v171 = vpop.f32.mrf.mxu0
  %172 = vmatprep.mubr.bf16.mxu0 0
  %173 = vmatmul.mubr.bf16.gmra.mxu0 %v130
  %v174 = vpop.f32.mrf.mxu0
  %v175 = vadd.f32 %v112, %v174
  %v176 = vpop.f32.mrf.mxu0
  %v177 = vpop.f32.mrf.mxu0
  %v178 = vadd.f32 %v112, %v177
  %v179 = vpop.f32.mrf.mxu0
  %180 = vdwg.mxu0
  %v181 = vxor.u32 %v167, 2147483648
  %v182 = vxor.u32 %v170, 2147483648
  %v183 = vxor.u32 %v175, 2147483648
  %v184 = vxor.u32 %v178, 2147483648
  %v185 = vmul.f32 %v181, 1.442695
  %v186 = vpow.pop %v185
  %v187 = vmul.f32 %v182, 1.442695
  %v188 = vpow.pop %v187
  %v189 = vmul.f32 %v183, 1.442695
  %v190 = vpow.pop %v189
  %v191 = vmul.f32 %v184, 1.442695
  %v192 = vpow.pop %v191
  %v193 = vadd.f32 %v186, 1.0
  %v194 = vadd.f32 %v188, 1.0
  %v195 = vadd.f32 %v190, 1.0
  %v196 = vadd.f32 %v192, 1.0
  %v197 = vrcp.pop %v193
  %v198 = vmul.f32 1.0, %v197
  %v199 = vrcp.pop %v194
  %v200 = vmul.f32 1.0, %v199
  %v201 = vrcp.pop %v195
  %v202 = vmul.f32 1.0, %v201
  %v203 = vrcp.pop %v196
  %v204 = vmul.f32 1.0, %v203
  %v205 = vmul.f32 %v167, %v198
  %v206 = vmul.f32 %v170, %v200
  %v207 = vmul.f32 %v175, %v202
  %v208 = vmul.f32 %v178, %v204
  %v209 = vpack.c.bf16 %v206, %v205
  %v210 = vpack.c.bf16 %v208, %v207
  %v213 = vunpack.c.l.b16 %v209
  %v214 = vunpack.c.h.b16 %v209
  %v215 = vunpack.c.l.b16 %v210
  %v216 = vunpack.c.h.b16 %v210
  %v217 = vpack.c.b16 %v213, %v213
  %v218 = vpack.c.b16 %v214, %v214
  %v219 = vpack.c.b16 %v215, %v215
  %v220 = vpack.c.b16 %v216, %v216
  %vm225 = vcmask 519168
  %226 = vst.msk [vmem:[%s5] sm:$0xf] %vm225, %v217
  %227 = vst.msk [vmem:[%s5 + $0x4] sm:$0xf] %vm225, %v218
  %228 = vst.msk [vmem:[%s5 + $0x8] sm:$0xf] %vm225, %v219
  %229 = vst.msk [vmem:[%s5 + $0xc] sm:$0xf] %vm225, %v220
  // Predicated region
  $region22: #{_conformer_forward_jit.26} parent=0 // pred_check
    _
  $region23: #{_conformer_forward_jit.26} parent=0 // pred_check_branch
    %231 = sbr.rel (0) target = $region25
  $region24: #{_conformer_forward_jit.26} parent=0 // pred_region
    _
  $region25: #{_conformer_forward_jit.26} parent=0 // pred_fallthru
    _
  // Predicated region
  $region26: #{_conformer_forward_jit.26} parent=0 // pred_check
    _
  $region27: #{_conformer_forward_jit.26} parent=0 // pred_check_branch
    %233 = sbr.rel (0) target = $region29
  $region28: #{_conformer_forward_jit.26} parent=0 // pred_region
    _
  $region29: #{_conformer_forward_jit.26} parent=0 // pred_fallthru
    _

// kernel: _conformer_forward_jit.28
$region0: #{_conformer_forward_jit.28}
  #allocation0 [shape = 'u32[]', space=smem, size = 0x4, offset = 0x4, fixed_abs, tag = 'smem constant byte address 0x4 - core index']
  #allocation1 [shape = 'u32[144,128]{1,0:T(1,128)}', space=vmem, size = 0x12000, scoped, tag = 'internal scratch']
  %s0 = inlined_call_operand.vmem [shape: f32[32,32], index: 0, kind: input, shape index: {}]
  %s1 = inlined_call_operand.vmem [shape: f32[1,32], index: 1, kind: input, shape index: {}]
  %s2 = inlined_call_operand.vmem [shape: f32[1,32], index: 2, kind: input, shape index: {}]
  %s3 = inlined_call_operand.vmem [shape: bf16[32,96], index: 3, kind: input, shape index: {}]
  %s4 = inlined_call_operand.vmem [shape: f32[1,96], index: 4, kind: input, shape index: {}]
  %s5 = inlined_call_operand.vmem [shape: bf16[32,96], index: 5, kind: output, shape index: {}]
  %s6 = sld [smem:[#allocation0]]
  $region30: #{_conformer_forward_jit.28} parent=0
    _
  %s8 = ssub.s32 1, %s6
  %s9 = scalar_select 0, %s8, %s6
  // Predicated region
  $region2: #{_conformer_forward_jit.28} parent=0 // pred_check
    _
  $region3: #{_conformer_forward_jit.28} parent=0 // pred_check_branch
    %11 = sbr.rel (0) target = $region5
  $region4: #{_conformer_forward_jit.28} parent=0 // pred_region
    _
  $region5: #{_conformer_forward_jit.28} parent=0 // pred_fallthru
    _
  // Predicated region
  $region6: #{_conformer_forward_jit.28} parent=0 // pred_check
    _
  $region7: #{_conformer_forward_jit.28} parent=0 // pred_check_branch
    %13 = sbr.rel (0) target = $region9
  $region8: #{_conformer_forward_jit.28} parent=0 // pred_region
    _
  $region9: #{_conformer_forward_jit.28} parent=0 // pred_fallthru
    _
  // Predicated region
  $region10: #{_conformer_forward_jit.28} parent=0 // pred_check
    _
  $region11: #{_conformer_forward_jit.28} parent=0 // pred_check_branch
    %15 = sbr.rel (0) target = $region13
  $region12: #{_conformer_forward_jit.28} parent=0 // pred_region
    _
  $region13: #{_conformer_forward_jit.28} parent=0 // pred_fallthru
    _
  // Predicated region
  $region14: #{_conformer_forward_jit.28} parent=0 // pred_check
    _
  $region15: #{_conformer_forward_jit.28} parent=0 // pred_check_branch
    %17 = sbr.rel (0) target = $region17
  $region16: #{_conformer_forward_jit.28} parent=0 // pred_region
    _
  $region17: #{_conformer_forward_jit.28} parent=0 // pred_fallthru
    _
  // Predicated region
  $region18: #{_conformer_forward_jit.28} parent=0 // pred_check
    _
  $region19: #{_conformer_forward_jit.28} parent=0 // pred_check_branch
    %19 = sbr.rel (0) target = $region21
  $region20: #{_conformer_forward_jit.28} parent=0 // pred_region
    _
  $region21: #{_conformer_forward_jit.28} parent=0 // pred_fallthru
    _
  %v21 = vld [vmem:[%s0] sm:$0xff]
  %v22 = vld [vmem:[%s0 + $0x8] sm:$0xff]
  %v23 = vld [vmem:[%s0 + $0x10] sm:$0xff]
  %v24 = vld [vmem:[%s0 + $0x18] sm:$0xff]
  %v25 = vld [vmem:[%s1] sm:$0x1]
  %v26 = vld [vmem:[%s2] sm:$0x1]
  %vm27 = vcmask 261120
  %v28 = vsel %vm27, %v21, 0.0
  %29 = vadd.xlane.f32.xlu0 %v28
  %v30 = vpop.xlane.xlu0 %29
  %v31 = vsel %vm27, %v22, 0.0
  %32 = vadd.xlane.f32.xlu0 %v31
  %v33 = vpop.xlane.xlu0 %32
  %v34 = vsel %vm27, %v23, 0.0
  %35 = vadd.xlane.f32.xlu0 %v34
  %v36 = vpop.xlane.xlu0 %35
  %v37 = vsel %vm27, %v24, 0.0
  %38 = vadd.xlane.f32.xlu0 %v37
  %v39 = vpop.xlane.xlu0 %38
  %v40 = vrcp.pop 32.0
  %v41 = vmul.f32 %v30, %v40
  %v42 = vmul.f32 %v33, %v40
  %v43 = vmul.f32 %v36, %v40
  %v44 = vmul.f32 %v39, %v40
  %v45 = vsub.f32 %v21, %v41
  %v46 = vsub.f32 %v22, %v42
  %v47 = vsub.f32 %v23, %v43
  %v48 = vsub.f32 %v24, %v44
  %v49 = vmul.f32 %v45, %v45
  %v50 = vmul.f32 %v46, %v46
  %v51 = vmul.f32 %v47, %v47
  %v52 = vmul.f32 %v48, %v48
  %v53 = vsel %vm27, %v49, 0.0
  %54 = vadd.xlane.f32.xlu0 %v53
  %v55 = vpop.xlane.xlu0 %54
  %v56 = vsel %vm27, %v50, 0.0
  %57 = vadd.xlane.f32.xlu0 %v56
  %v58 = vpop.xlane.xlu0 %57
  %v59 = vsel %vm27, %v51, 0.0
  %60 = vadd.xlane.f32.xlu0 %v59
  %v61 = vpop.xlane.xlu0 %60
  %v62 = vsel %vm27, %v52, 0.0
  %63 = vadd.xlane.f32.xlu0 %v62
  %v64 = vpop.xlane.xlu0 %63
  %v65 = vmul.f32 %v55, %v40
  %v66 = vmul.f32 %v58, %v40
  %v67 = vmul.f32 %v61, %v40
  %v68 = vmul.f32 %v64, %v40
  %v69 = vadd.f32 %v65, 1e-05
  %v70 = vadd.f32 %v66, 1e-05
  %v71 = vadd.f32 %v67, 1e-05
  %v72 = vadd.f32 %v68, 1e-05
  %v73 = vrsqrt.pop %v69
  %v74 = vrsqrt.pop %v70
  %v75 = vrsqrt.pop %v71
  %v76 = vrsqrt.pop %v72
  %v77 = vmul.f32 %v45, %v73
  %v78 = vmul.f32 %v46, %v74
  %v79 = vmul.f32 %v47, %v75
  %v80 = vmul.f32 %v48, %v76
  %v82 = vlaneseq
  %v83 = vshrl.u32 %v82, 7
  %v84 = vsub.s32 0, %v83
  %v85 = vrot.slane %v25, %v84
  %v87 = vmul.f32 %v77, %v85
  %v88 = vmul.f32 %v78, %v85
  %v89 = vmul.f32 %v79, %v85
  %v90 = vmul.f32 %v80, %v85
  %v92 = vlaneseq
  %v93 = vshrl.u32 %v92, 7
  %v94 = vsub.s32 0, %v93
  %v95 = vrot.slane %v26, %v94
  %v97 = vadd.f32 %v87, %v95
  %v98 = vadd.f32 %v88, %v95
  %v99 = vadd.f32 %v89, %v95
  %v100 = vadd.f32 %v90, %v95
  %v101 = vpack.c.bf16 %v98, %v97
  %v102 = vpack.c.bf16 %v100, %v99
  %v103 = vld [vmem:[%s3] sm:$0xf]
  %v104 = vld [vmem:[%s3 + $0x4] sm:$0xf]
  %v105 = vld [vmem:[%s3 + $0x8] sm:$0xf]
  %v106 = vld [vmem:[%s3 + $0xc] sm:$0xf]
  %v107 = vld [vmem:[%s4] sm:$0x1]
  %v109 = vlaneseq
  %v110 = vshrl.u32 %v109, 7
  %v111 = vsub.s32 0, %v110
  %v112 = vrot.slane %v107, %v111
  %v118 = vunpack.c.l.b16 %v103
  %v119 = vunpack.c.l.b16 %v104
  %v120 = vunpack.c.l.b16 %v105
  %v121 = vunpack.c.l.b16 %v106
  %v122 = vpack.c.b16 %v119, %v118
  %v123 = vpack.c.b16 %v121, %v120
  %v127 = vsel %vm27, %v101, 0
  %v130 = vsel %vm27, %v102, 0
  %132 = vmatprep.subr.bf16.mxu0 0
  %133 = vmatpush1.bf16.msra.mxu0 0
  %134 = vmatprep.subr.bf16.mxu0 0
  %135 = vmatpush1.bf16.msra.mxu0 0
  %136 = vmatprep.subr.bf16.mxu0 0
  %137 = vmatpush1.bf16.msra.mxu0 0
  %138 = vmatprep.subr.bf16.mxu0 0
  %139 = vmatpush1.bf16.msra.mxu0 0
  %140 = vmatprep.subr.bf16.mxu0 0
  %141 = vmatpush1.bf16.msra.mxu0 0
  %142 = vmatprep.subr.bf16.mxu0 0
  %143 = vmatpush1.bf16.msra.mxu0 0
  %144 = vmatprep.subr.bf16.mxu0 0
  %145 = vmatpush1.bf16.msra.mxu0 %v123
  %146 = vmatprep.subr.bf16.mxu0 0
  %147 = vmatpush1.bf16.msra.mxu0 %v122
  %148 = vmatprep.subr.bf16.mxu0 0
  %149 = vmatpush2.bf16.msra.mxu0 0
  %150 = vmatprep.subr.bf16.mxu0 0
  %151 = vmatpush2.bf16.msra.mxu0 0
  %152 = vmatprep.subr.bf16.mxu0 0
  %153 = vmatpush2.bf16.msra.mxu0 0
  %154 = vmatprep.subr.bf16.mxu0 0
  %155 = vmatpush2.bf16.msra.mxu0 0
  %156 = vmatprep.subr.bf16.mxu0 0
  %157 = vmatpush2.bf16.msra.mxu0 0
  %158 = vmatprep.subr.bf16.mxu0 0
  %159 = vmatpush2.bf16.msra.mxu0 0
  %160 = vmatprep.subr.bf16.mxu0 0
  %161 = vmatpush2.bf16.msra.mxu0 0
  %162 = vmatprep.subr.bf16.mxu0 0
  %163 = vmatpush2.bf16.msra.mxu0 0
  %164 = vmatprep.mubr.bf16.mxu0 0
  %165 = vmatmul.mubr.bf16.gmra.mxu0 %v127
  %v166 = vpop.f32.mrf.mxu0
  %v167 = vadd.f32 %v112, %v166
  %v168 = vpop.f32.mrf.mxu0
  %v169 = vpop.f32.mrf.mxu0
  %v170 = vadd.f32 %v112, %v169
  %v171 = vpop.f32.mrf.mxu0
  %172 = vmatprep.mubr.bf16.mxu0 0
  %173 = vmatmul.mubr.bf16.gmra.mxu0 %v130
  %v174 = vpop.f32.mrf.mxu0
  %v175 = vadd.f32 %v112, %v174
  %v176 = vpop.f32.mrf.mxu0
  %v177 = vpop.f32.mrf.mxu0
  %v178 = vadd.f32 %v112, %v177
  %v179 = vpop.f32.mrf.mxu0
  %180 = vdwg.mxu0
  %v181 = vpack.c.bf16 %v170, %v167
  %v182 = vpack.c.bf16 %v178, %v175
  %v185 = vunpack.c.l.b16 %v181
  %v186 = vunpack.c.h.b16 %v181
  %v187 = vunpack.c.l.b16 %v182
  %v188 = vunpack.c.h.b16 %v182
  %v189 = vpack.c.b16 %v185, %v185
  %v190 = vpack.c.b16 %v186, %v186
  %v191 = vpack.c.b16 %v187, %v187
  %v192 = vpack.c.b16 %v188, %v188
  %vm197 = vcmask 781312
  %198 = vst.msk [vmem:[%s5] sm:$0xf] %vm197, %v189
  %199 = vst.msk [vmem:[%s5 + $0x4] sm:$0xf] %vm197, %v190
  %200 = vst.msk [vmem:[%s5 + $0x8] sm:$0xf] %vm197, %v191
  %201 = vst.msk [vmem:[%s5 + $0xc] sm:$0xf] %vm197, %v192
  // Predicated region
  $region22: #{_conformer_forward_jit.28} parent=0 // pred_check
    _
  $region23: #{_conformer_forward_jit.28} parent=0 // pred_check_branch
    %203 = sbr.rel (0) target = $region25
  $region24: #{_conformer_forward_jit.28} parent=0 // pred_region
    _
  $region25: #{_conformer_forward_jit.28} parent=0 // pred_fallthru
    _
  // Predicated region
  $region26: #{_conformer_forward_jit.28} parent=0 // pred_check
    _
  $region27: #{_conformer_forward_jit.28} parent=0 // pred_check_branch
    %205 = sbr.rel (0) target = $region29
  $region28: #{_conformer_forward_jit.28} parent=0 // pred_region
    _
  $region29: #{_conformer_forward_jit.28} parent=0 // pred_fallthru
    _

// kernel: _conformer_forward_jit.29
$region0: #{_conformer_forward_jit.29}
  #allocation0 [shape = 'u32[]', space=smem, size = 0x4, offset = 0x4, fixed_abs, tag = 'smem constant byte address 0x4 - core index']
  #allocation1 [shape = 'u32[144,128]{1,0:T(1,128)}', space=vmem, size = 0x12000, scoped, tag = 'internal scratch']
  %s0 = inlined_call_operand.vmem [shape: bf16[2,4,16,8], index: 0, kind: input, shape index: {}]
  %s1 = inlined_call_operand.vmem [shape: bf16[2,4,16,8], index: 1, kind: input, shape index: {}]
  %s2 = inlined_call_operand.vmem [shape: bf16[2,4,16,8], index: 2, kind: input, shape index: {}]
  %s3 = inlined_call_operand.vmem [shape: f32[2,1,16], index: 3, kind: input, shape index: {}]
  %s4 = inlined_call_operand.vmem [shape: bf16[2,4,16,8], index: 4, kind: output, shape index: {}]
  %s5 = sld [smem:[#allocation0]]
  $region49: #{_conformer_forward_jit.29} parent=0
    _
  %s7 = ssub.s32 1, %s5
  %s8 = scalar_select 0, %s7, %s5
  loop: start=0, step=1, limit=10
  $region2: #{_conformer_forward_jit.29} parent=0 // loop_pre_header
    _
  $region3: #{_conformer_forward_jit.29} parent=0 // loop_header
    %s10 = sphi 0, %s14
    %p11 = scmp.ge.s32.totalorder %s10, 10
    %s17 = sphi 0, %s29
    %s18 = sphi 0, %s25
    %s19 = sphi 0, %s17
    %s20 = sphi 0, %s18
    %s21 = sphi 0, %s19
    %s22 = sphi 0, %s20
    %s34 = sphi 0, %s36
    %s37 = sphi 0, %s34
    %s38 = sphi 0, %s37
    %s54 = sphi 0, %s38
    %s62 = sphi 0, %s64
    %s65 = sphi 0, %s62
    %s66 = sphi 0, %s65
    %s82 = sphi 0, %s66
    %s90 = sphi 0, %s92
    %s93 = sphi 0, %s90
    %s94 = sphi 0, %s93
    %s110 = sphi 0, %s94
    %s116 = sphi 0, %s118
    %s119 = sphi 0, %s116
    %s120 = sphi 0, %s119
    %s136 = sphi 0, %s120
    %s144 = sphi 0, %s146
    %s147 = sphi 0, %s144
    %s148 = sphi 0, %s147
    %s164 = sphi 0, %s148
  $region4: #{_conformer_forward_jit.29} parent=0 // loop_header_branch
    %13 = sbr.rel (%p11) target = $region8
  $region5: #{_conformer_forward_jit.29} parent=0 // loop_body
    %s15 = ssub.s32 %s10, 1
    %s16 = ssub.s32 %s10, 2
    %s23 = sadd.s32 1, %s18
    %p24 = scmp.ge.s32.totalorder %s23, 4
    %s25 = scalar_select %p24, 0, %s23
    %s26 = sadd.s32 1, %s17
    %s27 = scalar_select %p24, %s26, %s17
    %p28 = scmp.ge.s32.totalorder %s27, 2
    %s29 = scalar_select %p28, 0, %s27
    %s30 = ssub.s32 %s17, %s29
    %s31 = ssub.s32 %s18, %s25
    %s32 = sor.u32 %s30, %s31
    %p33 = scmp.eq.s32.totalorder %s32, 0
    %s35 = sadd.s32 %s34, 1
    %s36 = scalar_select %p33, %s34, %s35
    %p39 = pneg %p33
    %p40 = scmp.eq.s32.totalorder %s10, 7
    %p41 = por %p39, %p40
    %p42 = scmp.ne.s32.totalorder %s34, %s37
    %p43 = scmp.eq.s32.totalorder %s10, 0
    %p44 = por %p42, %p43
    %p45 = scmp.ne.s32.totalorder %s34, %s37
    %p46 = scmp.eq.s32.totalorder %s15, 7
    %p47 = por %p45, %p46
    %p48 = scmp.ne.s32.totalorder %s37, %s38
    %p49 = scmp.eq.s32.totalorder %s15, 0
    %p50 = por %p48, %p49
    %p51 = scmp.ne.s32.totalorder %s37, %s38
    %p52 = scmp.eq.s32.totalorder %s16, 7
    %p53 = por %p51, %p52
    %p55 = scmp.ne.s32.totalorder %s38, %s54
    %p56 = scmp.eq.s32.totalorder %s16, 0
    %p57 = por %p55, %p56
    %s58 = ssub.s32 %s17, %s29
    %s59 = ssub.s32 %s18, %s25
    %s60 = sor.u32 %s58, %s59
    %p61 = scmp.eq.s32.totalorder %s60, 0
    %s63 = sadd.s32 %s62, 1
    %s64 = scalar_select %p61, %s62, %s63
    %p67 = pneg %p61
    %p68 = scmp.eq.s32.totalorder %s10, 7
    %p69 = por %p67, %p68
    %p70 = scmp.ne.s32.totalorder %s62, %s65
    %p71 = scmp.eq.s32.totalorder %s10, 0
    %p72 = por %p70, %p71
    %p73 = scmp.ne.s32.totalorder %s62, %s65
    %p74 = scmp.eq.s32.totalorder %s15, 7
    %p75 = por %p73, %p74
    %p76 = scmp.ne.s32.totalorder %s65, %s66
    %p77 = scmp.eq.s32.totalorder %s15, 0
    %p78 = por %p76, %p77
    %p79 = scmp.ne.s32.totalorder %s65, %s66
    %p80 = scmp.eq.s32.totalorder %s16, 7
    %p81 = por %p79, %p80
    %p83 = scmp.ne.s32.totalorder %s66, %s82
    %p84 = scmp.eq.s32.totalorder %s16, 0
    %p85 = por %p83, %p84
    %s86 = ssub.s32 %s17, %s29
    %s87 = ssub.s32 %s18, %s25
    %s88 = sor.u32 %s86, %s87
    %p89 = scmp.eq.s32.totalorder %s88, 0
    %s91 = sadd.s32 %s90, 1
    %s92 = scalar_select %p89, %s90, %s91
    %p95 = pneg %p89
    %p96 = scmp.eq.s32.totalorder %s10, 7
    %p97 = por %p95, %p96
    %p98 = scmp.ne.s32.totalorder %s90, %s93
    %p99 = scmp.eq.s32.totalorder %s10, 0
    %p100 = por %p98, %p99
    %p101 = scmp.ne.s32.totalorder %s90, %s93
    %p102 = scmp.eq.s32.totalorder %s15, 7
    %p103 = por %p101, %p102
    %p104 = scmp.ne.s32.totalorder %s93, %s94
    %p105 = scmp.eq.s32.totalorder %s15, 0
    %p106 = por %p104, %p105
    %p107 = scmp.ne.s32.totalorder %s93, %s94
    %p108 = scmp.eq.s32.totalorder %s16, 7
    %p109 = por %p107, %p108
    %p111 = scmp.ne.s32.totalorder %s94, %s110
    %p112 = scmp.eq.s32.totalorder %s16, 0
    %p113 = por %p111, %p112
    %s114 = ssub.s32 %s17, %s29
    %p115 = scmp.eq.s32.totalorder %s114, 0
    %s117 = sadd.s32 %s116, 1
    %s118 = scalar_select %p115, %s116, %s117
    %p121 = pneg %p115
    %p122 = scmp.eq.s32.totalorder %s10, 7
    %p123 = por %p121, %p122
    %p124 = scmp.ne.s32.totalorder %s116, %s119
    %p125 = scmp.eq.s32.totalorder %s10, 0
    %p126 = por %p124, %p125
    %p127 = scmp.ne.s32.totalorder %s116, %s119
    %p128 = scmp.eq.s32.totalorder %s15, 7
    %p129 = por %p127, %p128
    %p130 = scmp.ne.s32.totalorder %s119, %s120
    %p131 = scmp.eq.s32.totalorder %s15, 0
    %p132 = por %p130, %p131
    %p133 = scmp.ne.s32.totalorder %s119, %s120
    %p134 = scmp.eq.s32.totalorder %s16, 7
    %p135 = por %p133, %p134
    %p137 = scmp.ne.s32.totalorder %s120, %s136
    %p138 = scmp.eq.s32.totalorder %s16, 0
    %p139 = por %p137, %p138
    %s140 = ssub.s32 %s17, %s29
    %s141 = ssub.s32 %s18, %s25
    %s142 = sor.u32 %s140, %s141
    %p143 = scmp.eq.s32.totalorder %s142, 0
    %s145 = sadd.s32 %s144, 1
    %s146 = scalar_select %p143, %s144, %s145
    %p149 = pneg %p143
    %p150 = scmp.eq.s32.totalorder %s10, 7
    %p151 = por %p149, %p150
    %p152 = scmp.ne.s32.totalorder %s144, %s147
    %p153 = scmp.eq.s32.totalorder %s10, 0
    %p154 = por %p152, %p153
    %p155 = scmp.ne.s32.totalorder %s144, %s147
    %p156 = scmp.eq.s32.totalorder %s15, 7
    %p157 = por %p155, %p156
    %p158 = scmp.ne.s32.totalorder %s147, %s148
    %p159 = scmp.eq.s32.totalorder %s15, 0
    %p160 = por %p158, %p159
    %p161 = scmp.ne.s32.totalorder %s147, %s148
    %p162 = scmp.eq.s32.totalorder %s16, 7
    %p163 = por %p161, %p162
    %p165 = scmp.ne.s32.totalorder %s148, %s164
    %p166 = scmp.eq.s32.totalorder %s16, 0
    %p167 = por %p165, %p166
    %p168 = scmp.le.s32.totalorder 1, %s10
    %p169 = scmp.lt.s32.totalorder %s10, 9
    %p170 = pnand %p168, %p169
    %p171 = pneg %p170
    // Predicated region
    $region9: #{_conformer_forward_jit.29} parent=5 // pred_check
      _
    $region10: #{_conformer_forward_jit.29} parent=5 // pred_check_branch
      %173 = sbr.rel (%p170) target = $region12
    $region11: #{_conformer_forward_jit.29} parent=5 // pred_region
      %s174 = ssub.s32 %s10, 1
    $region12: #{_conformer_forward_jit.29} parent=5 // pred_fallthru
      _
    %p175 = scmp.lt.s32.totalorder %s10, 8
    // Predicated region
    $region13: #{_conformer_forward_jit.29} parent=5 // pred_check
      %p176 = pneg %p175
    $region14: #{_conformer_forward_jit.29} parent=5 // pred_check_branch
      %178 = sbr.rel (%p176) target = $region16
    $region15: #{_conformer_forward_jit.29} parent=5 // pred_region
      // Predicated region
      $region17: #{_conformer_forward_jit.29} parent=15 // pred_check
        %p179 = pneg %p44
      $region18: #{_conformer_forward_jit.29} parent=15 // pred_check_branch
        %181 = sbr.rel (%p179) target = $region20
      $region19: #{_conformer_forward_jit.29} parent=15 // pred_region
        %p182 = scmp.lt.s32.totalorder %s17, 1
        %s183 = scalar_select %p182, %s17, 1
        %p184 = scmp.lt.s32.totalorder %s18, 3
        %s185 = scalar_select %p184, %s18, 3
        %s186 = smul.addr %s185, 2
        %s187 = smul.addr %s183, 8
        %s188 = sadd.s32 %s186, %s187
        %s189 = smul.addr %s188, 4
        %s190 = scalar_lea.vmem %s0, %s189
      $region20: #{_conformer_forward_jit.29} parent=15 // pred_fallthru
        _
      // Predicated region
      $region21: #{_conformer_forward_jit.29} parent=15 // pred_check
        %p191 = pneg %p72
      $region22: #{_conformer_forward_jit.29} parent=15 // pred_check_branch
        %193 = sbr.rel (%p191) target = $region24
      $region23: #{_conformer_forward_jit.29} parent=15 // pred_region
        %p194 = scmp.lt.s32.totalorder %s17, 1
        %s195 = scalar_select %p194, %s17, 1
        %p196 = scmp.lt.s32.totalorder %s18, 3
        %s197 = scalar_select %p196, %s18, 3
        %s198 = smul.addr %s197, 2
        %s199 = smul.addr %s195, 8
        %s200 = sadd.s32 %s198, %s199
        %s201 = smul.addr %s200, 4
        %s202 = scalar_lea.vmem %s1, %s201
      $region24: #{_conformer_forward_jit.29} parent=15 // pred_fallthru
        _
      // Predicated region
      $region25: #{_conformer_forward_jit.29} parent=15 // pred_check
        %p203 = pneg %p100
      $region26: #{_conformer_forward_jit.29} parent=15 // pred_check_branch
        %205 = sbr.rel (%p203) target = $region28
      $region27: #{_conformer_forward_jit.29} parent=15 // pred_region
        %p206 = scmp.lt.s32.totalorder %s17, 1
        %s207 = scalar_select %p206, %s17, 1
        %p208 = scmp.lt.s32.totalorder %s18, 3
        %s209 = scalar_select %p208, %s18, 3
        %s210 = smul.addr %s209, 2
        %s211 = smul.addr %s207, 8
        %s212 = sadd.s32 %s210, %s211
        %s213 = smul.addr %s212, 4
        %s214 = scalar_lea.vmem %s2, %s213
      $region28: #{_conformer_forward_jit.29} parent=15 // pred_fallthru
        _
      // Predicated region
      $region29: #{_conformer_forward_jit.29} parent=15 // pred_check
        %p215 = pneg %p126
      $region30: #{_conformer_forward_jit.29} parent=15 // pred_check_branch
        %217 = sbr.rel (%p215) target = $region32
      $region31: #{_conformer_forward_jit.29} parent=15 // pred_region
        %p218 = scmp.lt.s32.totalorder %s17, 1
        %s219 = scalar_select %p218, %s17, 1
        %s220 = scalar_lea.vmem %s3, %s219
      $region32: #{_conformer_forward_jit.29} parent=15 // pred_fallthru
        _
    $region16: #{_conformer_forward_jit.29} parent=5 // pred_fallthru
      _
    %p221 = scmp.le.s32.totalorder 1, %s10
    %p222 = scmp.lt.s32.totalorder %s10, 9
    %p223 = pnand %p221, %p222
    %p224 = pneg %p223
    // Predicated region
    $region33: #{_conformer_forward_jit.29} parent=5 // pred_check
      _
    $region34: #{_conformer_forward_jit.29} parent=5 // pred_check_branch
      %226 = sbr.rel (%p223) target = $region36
    $region35: #{_conformer_forward_jit.29} parent=5 // pred_region
      %s227 = ssub.s32 %s10, 1
      %p228 = scmp.lt.s32.totalorder %s19, 1
      %s229 = scalar_select %p228, %s19, 1
      %p230 = scmp.lt.s32.totalorder %s20, 3
      %s231 = scalar_select %p230, %s20, 3
      %s232 = smul.addr %s231, 2
      %s233 = smul.addr %s229, 8
      %s234 = sadd.s32 %s232, %s233
      %s235 = smul.addr %s234, 4
      %s236 = scalar_lea.vmem %s0, %s235
      %p237 = pneg %p50
      %p238 = pneg %p47
      %p239 = scmp.lt.s32.totalorder %s19, 1
      %s240 = scalar_select %p239, %s19, 1
      %p241 = scmp.lt.s32.totalorder %s20, 3
      %s242 = scalar_select %p241, %s20, 3
      %s243 = smul.addr %s242, 2
      %s244 = smul.addr %s240, 8
      %s245 = sadd.s32 %s243, %s244
      %s246 = smul.addr %s245, 4
      %s247 = scalar_lea.vmem %s1, %s246
      %p248 = pneg %p78
      %p249 = pneg %p75
      %p250 = scmp.lt.s32.totalorder %s19, 1
      %s251 = scalar_select %p250, %s19, 1
      %p252 = scmp.lt.s32.totalorder %s20, 3
      %s253 = scalar_select %p252, %s20, 3
      %s254 = smul.addr %s253, 2
      %s255 = smul.addr %s251, 8
      %s256 = sadd.s32 %s254, %s255
      %s257 = smul.addr %s256, 4
      %s258 = scalar_lea.vmem %s2, %s257
      %p259 = pneg %p106
      %p260 = pneg %p103
      %p261 = scmp.lt.s32.totalorder %s19, 1
      %s262 = scalar_select %p261, %s19, 1
      %s263 = scalar_lea.vmem %s3, %s262
      %p264 = pneg %p132
      %p265 = pneg %p129
      %p266 = pneg %p160
      %p267 = pneg %p157
      %p268 = scmp.lt.s32.totalorder %s19, 1
      %s269 = scalar_select %p268, %s19, 1
      %p270 = scmp.lt.s32.totalorder %s20, 3
      %s271 = scalar_select %p270, %s20, 3
      %s272 = smul.addr %s271, 2
      %s273 = smul.addr %s269, 8
      %s274 = sadd.s32 %s272, %s273
      %s275 = smul.addr %s274, 4
      %s276 = scalar_lea.vmem %s4, %s275
      %p277 = scmp.lt.s32.totalorder %s19, 1
      %s278 = scalar_select %p277, %s19, 1
      %p279 = scmp.lt.s32.totalorder %s20, 3
      %s280 = scalar_select %p279, %s20, 3
      %s281 = smul.addr %s280, 2
      %s282 = smul.addr %s278, 8
      %s283 = sadd.s32 %s281, %s282
      %s284 = smul.addr %s283, 4
      %s285 = scalar_lea.vmem %s0, %s284
      %p286 = scmp.lt.s32.totalorder %s19, 1
      %s287 = scalar_select %p286, %s19, 1
      %p288 = scmp.lt.s32.totalorder %s20, 3
      %s289 = scalar_select %p288, %s20, 3
      %s290 = smul.addr %s289, 2
      %s291 = smul.addr %s287, 8
      %s292 = sadd.s32 %s290, %s291
      %s293 = smul.addr %s292, 4
      %s294 = scalar_lea.vmem %s1, %s293
      %p295 = scmp.lt.s32.totalorder %s19, 1
      %s296 = scalar_select %p295, %s19, 1
      %p297 = scmp.lt.s32.totalorder %s20, 3
      %s298 = scalar_select %p297, %s20, 3
      %s299 = smul.addr %s298, 2
      %s300 = smul.addr %s296, 8
      %s301 = sadd.s32 %s299, %s300
      %s302 = smul.addr %s301, 4
      %s303 = scalar_lea.vmem %s2, %s302
      %p304 = scmp.lt.s32.totalorder %s19, 1
      %s305 = scalar_select %p304, %s19, 1
      %s306 = scalar_lea.vmem %s3, %s305
      %p307 = scmp.lt.s32.totalorder %s19, 1
      %s308 = scalar_select %p307, %s19, 1
      %p309 = scmp.lt.s32.totalorder %s20, 3
      %s310 = scalar_select %p309, %s20, 3
      %s311 = smul.addr %s310, 2
      %s312 = smul.addr %s308, 8
      %s313 = sadd.s32 %s311, %s312
      %s314 = smul.addr %s313, 4
      %s315 = scalar_lea.vmem %s4, %s314
      %v317 = vld [vmem:[%s285] sm:$0xf]
      %v318 = vld [vmem:[%s285 + $0x4] sm:$0xf]
      %v319 = vld [vmem:[%s294] sm:$0xf]
      %v320 = vld [vmem:[%s294 + $0x4] sm:$0xf]
      %v321 = vld [vmem:[%s303] sm:$0xf]
      %v322 = vld [vmem:[%s303 + $0x4] sm:$0xf]
      %v325 = vunpack.c.l.b16 %v317
      %v326 = vunpack.c.l.b16 %v318
      %v327 = vpack.c.b16 %v326, %v325
      %v330 = vunpack.c.l.b16 %v319
      %v331 = vunpack.c.l.b16 %v320
      %v332 = vpack.c.b16 %v331, %v330
      %vm333 = vcmask 64512
      %v335 = vsel %vm333, %v327, 0
      %v338 = vsel %vm333, %v332, 0
      %340 = vmatprep.subr.bf16.mxu0 0
      %341 = vmatpush1.bf16.xpose.msra.mxu0 0
      %342 = vmatprep.subr.bf16.mxu0 0
      %343 = vmatpush1.bf16.xpose.msra.mxu0 0
      %344 = vmatprep.subr.bf16.mxu0 0
      %345 = vmatpush1.bf16.xpose.msra.mxu0 0
      %346 = vmatprep.subr.bf16.mxu0 0
      %347 = vmatpush1.bf16.xpose.msra.mxu0 0
      %348 = vmatprep.subr.bf16.mxu0 0
      %349 = vmatpush1.bf16.xpose.msra.mxu0 0
      %350 = vmatprep.subr.bf16.mxu0 0
      %351 = vmatpush1.bf16.xpose.msra.mxu0 0
      %352 = vmatprep.subr.bf16.mxu0 0
      %353 = vmatpush1.bf16.xpose.msra.mxu0 0
      %354 = vmatprep.subr.bf16.mxu0 0
      %355 = vmatpush1.bf16.xpose.msra.mxu0 %v338
      %356 = vmatprep.subr.bf16.mxu0 0
      %357 = vmatpush2.bf16.xpose.msra.mxu0 0
      %358 = vmatprep.subr.bf16.mxu0 0
      %359 = vmatpush2.bf16.xpose.msra.mxu0 0
      %360 = vmatprep.subr.bf16.mxu0 0
      %361 = vmatpush2.bf16.xpose.msra.mxu0 0
      %362 = vmatprep.subr.bf16.mxu0 0
      %363 = vmatpush2.bf16.xpose.msra.mxu0 0
      %364 = vmatprep.subr.bf16.mxu0 0
      %365 = vmatpush2.bf16.xpose.msra.mxu0 0
      %366 = vmatprep.subr.bf16.mxu0 0
      %367 = vmatpush2.bf16.xpose.msra.mxu0 0
      %368 = vmatprep.subr.bf16.mxu0 0
      %369 = vmatpush2.bf16.xpose.msra.mxu0 0
      %370 = vmatprep.subr.bf16.mxu0 0
      %371 = vmatpush2.bf16.xpose.msra.mxu0 0
      %372 = vmatprep.mubr.bf16.mxu0 0
      %373 = vmatmul.mubr.bf16.gmra.mxu0 %v335
      %v374 = vpop.f32.mrf.mxu0
      %v375 = vadd.f32 0.0, %v374
      %v376 = vpop.f32.mrf.mxu0
      %v377 = vpop.f32.mrf.mxu0
      %v378 = vadd.f32 0.0, %v377
      %v379 = vpop.f32.mrf.mxu0
      %380 = vdwg.mxu0
      %v381 = vmul.f32 %v375, 0.35355338
      %v382 = vmul.f32 %v378, 0.35355338
      %v383 = vld [vmem:[%s306] sm:$0x1]
      %v385 = vlaneseq
      %v386 = vshrl.u32 %v385, 7
      %v387 = vsub.s32 0, %v386
      %v388 = vrot.slane %v383, %v387
      %v390 = vadd.f32 %v381, %v388
      %v391 = vadd.f32 %v382, %v388
      %vm392 = vcmask 130048
      %v393 = vsel %vm392, %v390, -inf
      %394 = vmax.xlane.f32.xlu0 %v393
      %v395 = vpop.xlane.xlu0 %394
      %v396 = vsel %vm392, %v391, -inf
      %397 = vmax.xlane.f32.xlu0 %v396
      %v398 = vpop.xlane.xlu0 %397
      %v399 = vsub.f32 %v390, %v395
      %v400 = vsub.f32 %v391, %v398
      %v401 = vmul.f32 %v399, 1.442695
      %v402 = vpow.pop %v401
      %v403 = vmul.f32 %v400, 1.442695
      %v404 = vpow.pop %v403
      %v405 = vsel %vm392, %v402, 0.0
      %406 = vadd.xlane.f32.xlu0 %v405
      %v407 = vpop.xlane.xlu0 %406
      %v408 = vsel %vm392, %v404, 0.0
      %409 = vadd.xlane.f32.xlu0 %v408
      %v410 = vpop.xlane.xlu0 %409
      %v411 = vrcp.pop %v407
      %v412 = vmul.f32 %v402, %v411
      %v413 = vrcp.pop %v410
      %v414 = vmul.f32 %v404, %v413
      %v415 = vpack.c.bf16 %v414, %v412
      %v418 = vunpack.c.l.b16 %v321
      %v419 = vunpack.c.l.b16 %v322
      %v420 = vpack.c.b16 %v419, %v418
      %v423 = vsel %vm392, %v415, 0
      %425 = vmatprep.subr.bf16.mxu0 0
      %426 = vmatpush1.bf16.msra.mxu0 0
      %427 = vmatprep.subr.bf16.mxu0 0
      %428 = vmatpush1.bf16.msra.mxu0 0
      %429 = vmatprep.subr.bf16.mxu0 0
      %430 = vmatpush1.bf16.msra.mxu0 0
      %431 = vmatprep.subr.bf16.mxu0 0
      %432 = vmatpush1.bf16.msra.mxu0 0
      %433 = vmatprep.subr.bf16.mxu0 0
      %434 = vmatpush1.bf16.msra.mxu0 0
      %435 = vmatprep.subr.bf16.mxu0 0
      %436 = vmatpush1.bf16.msra.mxu0 0
      %437 = vmatprep.subr.bf16.mxu0 0
      %438 = vmatpush1.bf16.msra.mxu0 0
      %439 = vmatprep.subr.bf16.mxu0 0
      %440 = vmatpush1.bf16.msra.mxu0 %v420
      %441 = vmatprep.subr.bf16.mxu0 0
      %442 = vmatpush2.bf16.msra.mxu0 0
      %443 = vmatprep.subr.bf16.mxu0 0
      %444 = vmatpush2.bf16.msra.mxu0 0
      %445 = vmatprep.subr.bf16.mxu0 0
      %446 = vmatpush2.bf16.msra.mxu0 0
      %447 = vmatprep.subr.bf16.mxu0 0
      %448 = vmatpush2.bf16.msra.mxu0 0
      %449 = vmatprep.subr.bf16.mxu0 0
      %450 = vmatpush2.bf16.msra.mxu0 0
      %451 = vmatprep.subr.bf16.mxu0 0
      %452 = vmatpush2.bf16.msra.mxu0 0
      %453 = vmatprep.subr.bf16.mxu0 0
      %454 = vmatpush2.bf16.msra.mxu0 0
      %455 = vmatprep.subr.bf16.mxu0 0
      %456 = vmatpush2.bf16.msra.mxu0 0
      %457 = vmatprep.mubr.bf16.mxu0 0
      %458 = vmatmul.mubr.bf16.gmra.mxu0 %v423
      %v459 = vpop.f32.mrf.mxu0
      %v460 = vadd.f32 0.0, %v459
      %v461 = vpop.f32.mrf.mxu0
      %v462 = vpop.f32.mrf.mxu0
      %v463 = vadd.f32 0.0, %v462
      %v464 = vpop.f32.mrf.mxu0
      %465 = vdwg.mxu0
      %v466 = vpack.c.bf16 %v463, %v460
      %v468 = vunpack.c.l.b16 %v466
      %v469 = vunpack.c.h.b16 %v466
      %v470 = vpack.c.b16 %v468, %v468
      %v471 = vpack.c.b16 %v469, %v469
      %vm474 = vcmask 60416
      %475 = vst.msk [vmem:[%s315] sm:$0xf] %vm474, %v470
      %476 = vst.msk [vmem:[%s315 + $0x4] sm:$0xf] %vm474, %v471
      %p477 = scmp.lt.s32.totalorder %s19, 1
      %s478 = scalar_select %p477, %s19, 1
      %p479 = scmp.lt.s32.totalorder %s20, 3
      %s480 = scalar_select %p479, %s20, 3
      %s481 = smul.addr %s480, 2
      %s482 = smul.addr %s478, 8
      %s483 = sadd.s32 %s481, %s482
      %s484 = smul.addr %s483, 4
      %s485 = scalar_lea.vmem %s4, %s484
      // Predicated region
      $region37: #{_conformer_forward_jit.29} parent=35 // pred_check
        %p486 = pneg %p157
      $region38: #{_conformer_forward_jit.29} parent=35 // pred_check_branch
        %488 = sbr.rel (%p486) target = $region40
      $region39: #{_conformer_forward_jit.29} parent=35 // pred_region
        _
      $region40: #{_conformer_forward_jit.29} parent=35 // pred_fallthru
        _
    $region36: #{_conformer_forward_jit.29} parent=5 // pred_fallthru
      _
    %p489 = scmp.le.s32.totalorder 2, %s10
    // Predicated region
    $region41: #{_conformer_forward_jit.29} parent=5 // pred_check
      %p490 = pneg %p489
    $region42: #{_conformer_forward_jit.29} parent=5 // pred_check_branch
      %492 = sbr.rel (%p490) target = $region44
    $region43: #{_conformer_forward_jit.29} parent=5 // pred_region
      %s493 = ssub.s32 %s10, 2
      // Predicated region
      $region45: #{_conformer_forward_jit.29} parent=43 // pred_check
        %p494 = pneg %p163
      $region46: #{_conformer_forward_jit.29} parent=43 // pred_check_branch
        %496 = sbr.rel (%p494) target = $region48
      $region47: #{_conformer_forward_jit.29} parent=43 // pred_region
        %p497 = scmp.lt.s32.totalorder %s21, 1
        %s498 = scalar_select %p497, %s21, 1
        %p499 = scmp.lt.s32.totalorder %s22, 3
        %s500 = scalar_select %p499, %s22, 3
        %s501 = smul.addr %s500, 2
        %s502 = smul.addr %s498, 8
        %s503 = sadd.s32 %s501, %s502
        %s504 = smul.addr %s503, 4
        %s505 = scalar_lea.vmem %s4, %s504
      $region48: #{_conformer_forward_jit.29} parent=43 // pred_fallthru
        _
    $region44: #{_conformer_forward_jit.29} parent=5 // pred_fallthru
      _
  $region6: #{_conformer_forward_jit.29} parent=0 // loop_footer
    %s14 = sadd.s32 1, %s10
  $region7: #{_conformer_forward_jit.29} parent=0 // loop_footer_branch
    %9 = sbr.rel target = $region3
  $region8: #{_conformer_forward_jit.29} parent=0 // loop_exit
    _

// kernel: _conformer_forward_jit.30
$region0: #{_conformer_forward_jit.30}
  #allocation0 [shape = 'u32[]', space=smem, size = 0x4, offset = 0x4, fixed_abs, tag = 'smem constant byte address 0x4 - core index']
  #allocation1 [shape = 'u32[144,128]{1,0:T(1,128)}', space=vmem, size = 0x12000, scoped, tag = 'internal scratch']
  %s0 = inlined_call_operand.vmem [shape: bf16[32,32], index: 0, kind: input, shape index: {}]
  %s1 = inlined_call_operand.vmem [shape: bf16[32,32], index: 1, kind: input, shape index: {}]
  %s2 = inlined_call_operand.vmem [shape: f32[1,32], index: 2, kind: input, shape index: {}]
  %s3 = inlined_call_operand.vmem [shape: f32[32,32], index: 3, kind: input, shape index: {}]
  %s4 = inlined_call_operand.vmem [shape: f32[32,32], index: 4, kind: output, shape index: {}]
  %s5 = sld [smem:[#allocation0]]
  $region26: #{_conformer_forward_jit.30} parent=0
    _
  %s7 = ssub.s32 1, %s5
  %s8 = scalar_select 0, %s7, %s5
  // Predicated region
  $region2: #{_conformer_forward_jit.30} parent=0 // pred_check
    _
  $region3: #{_conformer_forward_jit.30} parent=0 // pred_check_branch
    %10 = sbr.rel (0) target = $region5
  $region4: #{_conformer_forward_jit.30} parent=0 // pred_region
    _
  $region5: #{_conformer_forward_jit.30} parent=0 // pred_fallthru
    _
  // Predicated region
  $region6: #{_conformer_forward_jit.30} parent=0 // pred_check
    _
  $region7: #{_conformer_forward_jit.30} parent=0 // pred_check_branch
    %12 = sbr.rel (0) target = $region9
  $region8: #{_conformer_forward_jit.30} parent=0 // pred_region
    _
  $region9: #{_conformer_forward_jit.30} parent=0 // pred_fallthru
    _
  // Predicated region
  $region10: #{_conformer_forward_jit.30} parent=0 // pred_check
    _
  $region11: #{_conformer_forward_jit.30} parent=0 // pred_check_branch
    %14 = sbr.rel (0) target = $region13
  $region12: #{_conformer_forward_jit.30} parent=0 // pred_region
    _
  $region13: #{_conformer_forward_jit.30} parent=0 // pred_fallthru
    _
  // Predicated region
  $region14: #{_conformer_forward_jit.30} parent=0 // pred_check
    _
  $region15: #{_conformer_forward_jit.30} parent=0 // pred_check_branch
    %16 = sbr.rel (0) target = $region17
  $region16: #{_conformer_forward_jit.30} parent=0 // pred_region
    _
  $region17: #{_conformer_forward_jit.30} parent=0 // pred_fallthru
    _
  %v18 = vld [vmem:[%s0] sm:$0xf]
  %v19 = vld [vmem:[%s0 + $0x4] sm:$0xf]
  %v20 = vld [vmem:[%s0 + $0x8] sm:$0xf]
  %v21 = vld [vmem:[%s0 + $0xc] sm:$0xf]
  %v22 = vld [vmem:[%s1] sm:$0xf]
  %v23 = vld [vmem:[%s1 + $0x4] sm:$0xf]
  %v24 = vld [vmem:[%s1 + $0x8] sm:$0xf]
  %v25 = vld [vmem:[%s1 + $0xc] sm:$0xf]
  %v26 = vld [vmem:[%s2] sm:$0x1]
  %v28 = vlaneseq
  %v29 = vshrl.u32 %v28, 7
  %v30 = vsub.s32 0, %v29
  %v31 = vrot.slane %v26, %v30
  %v37 = vunpack.c.l.b16 %v18
  %v38 = vunpack.c.l.b16 %v19
  %v39 = vunpack.c.l.b16 %v20
  %v40 = vunpack.c.l.b16 %v21
  %v41 = vpack.c.b16 %v38, %v37
  %v42 = vpack.c.b16 %v40, %v39
  %v47 = vunpack.c.l.b16 %v22
  %v48 = vunpack.c.l.b16 %v23
  %v49 = vunpack.c.l.b16 %v24
  %v50 = vunpack.c.l.b16 %v25
  %v51 = vpack.c.b16 %v48, %v47
  %v52 = vpack.c.b16 %v50, %v49
  %vm55 = vcmask 261120
  %v57 = vsel %vm55, %v41, 0
  %v60 = vsel %vm55, %v42, 0
  %62 = vmatprep.subr.bf16.mxu0 0
  %63 = vmatpush1.bf16.msra.mxu0 0
  %64 = vmatprep.subr.bf16.mxu0 0
  %65 = vmatpush1.bf16.msra.mxu0 0
  %66 = vmatprep.subr.bf16.mxu0 0
  %67 = vmatpush1.bf16.msra.mxu0 0
  %68 = vmatprep.subr.bf16.mxu0 0
  %69 = vmatpush1.bf16.msra.mxu0 0
  %70 = vmatprep.subr.bf16.mxu0 0
  %71 = vmatpush1.bf16.msra.mxu0 0
  %72 = vmatprep.subr.bf16.mxu0 0
  %73 = vmatpush1.bf16.msra.mxu0 0
  %74 = vmatprep.subr.bf16.mxu0 0
  %75 = vmatpush1.bf16.msra.mxu0 %v52
  %76 = vmatprep.subr.bf16.mxu0 0
  %77 = vmatpush1.bf16.msra.mxu0 %v51
  %78 = vmatprep.subr.bf16.mxu0 0
  %79 = vmatpush2.bf16.msra.mxu0 0
  %80 = vmatprep.subr.bf16.mxu0 0
  %81 = vmatpush2.bf16.msra.mxu0 0
  %82 = vmatprep.subr.bf16.mxu0 0
  %83 = vmatpush2.bf16.msra.mxu0 0
  %84 = vmatprep.subr.bf16.mxu0 0
  %85 = vmatpush2.bf16.msra.mxu0 0
  %86 = vmatprep.subr.bf16.mxu0 0
  %87 = vmatpush2.bf16.msra.mxu0 0
  %88 = vmatprep.subr.bf16.mxu0 0
  %89 = vmatpush2.bf16.msra.mxu0 0
  %90 = vmatprep.subr.bf16.mxu0 0
  %91 = vmatpush2.bf16.msra.mxu0 0
  %92 = vmatprep.subr.bf16.mxu0 0
  %93 = vmatpush2.bf16.msra.mxu0 0
  %94 = vmatprep.mubr.bf16.mxu0 0
  %95 = vmatmul.mubr.bf16.gmra.mxu0 %v57
  %v96 = vpop.f32.mrf.mxu0
  %v97 = vadd.f32 %v31, %v96
  %v98 = vpop.f32.mrf.mxu0
  %v99 = vpop.f32.mrf.mxu0
  %v100 = vadd.f32 %v31, %v99
  %v101 = vpop.f32.mrf.mxu0
  %102 = vmatprep.mubr.bf16.mxu0 0
  %103 = vmatmul.mubr.bf16.gmra.mxu0 %v60
  %v104 = vpop.f32.mrf.mxu0
  %v105 = vadd.f32 %v31, %v104
  %v106 = vpop.f32.mrf.mxu0
  %v107 = vpop.f32.mrf.mxu0
  %v108 = vadd.f32 %v31, %v107
  %v109 = vpop.f32.mrf.mxu0
  %110 = vdwg.mxu0
  %v111 = vld [vmem:[%s3] sm:$0xff]
  %v112 = vld [vmem:[%s3 + $0x8] sm:$0xff]
  %v113 = vld [vmem:[%s3 + $0x10] sm:$0xff]
  %v114 = vld [vmem:[%s3 + $0x18] sm:$0xff]
  %v115 = vadd.f32 %v111, %v97
  %v116 = vadd.f32 %v112, %v100
  %v117 = vadd.f32 %v113, %v105
  %v118 = vadd.f32 %v114, %v108
  %119 = vst.msk [vmem:[%s4] sm:$0xff] %vm55, %v115
  %120 = vst.msk [vmem:[%s4 + $0x8] sm:$0xff] %vm55, %v116
  %121 = vst.msk [vmem:[%s4 + $0x10] sm:$0xff] %vm55, %v117
  %122 = vst.msk [vmem:[%s4 + $0x18] sm:$0xff] %vm55, %v118
  // Predicated region
  $region18: #{_conformer_forward_jit.30} parent=0 // pred_check
    _
  $region19: #{_conformer_forward_jit.30} parent=0 // pred_check_branch
    %124 = sbr.rel (0) target = $region21
  $region20: #{_conformer_forward_jit.30} parent=0 // pred_region
    _
  $region21: #{_conformer_forward_jit.30} parent=0 // pred_fallthru
    _
  // Predicated region
  $region22: #{_conformer_forward_jit.30} parent=0 // pred_check
    _
  $region23: #{_conformer_forward_jit.30} parent=0 // pred_check_branch
    %126 = sbr.rel (0) target = $region25
  $region24: #{_conformer_forward_jit.30} parent=0 // pred_region
    _
  $region25: #{_conformer_forward_jit.30} parent=0 // pred_fallthru
    _

// kernel: _conformer_forward_jit.36
$region0: #{_conformer_forward_jit.36}
  #allocation0 [shape = 'u32[]', space=smem, size = 0x4, offset = 0x4, fixed_abs, tag = 'smem constant byte address 0x4 - core index']
  #allocation1 [shape = 'u32[144,128]{1,0:T(1,128)}', space=vmem, size = 0x12000, scoped, tag = 'internal scratch']
  %s0 = inlined_call_operand.vmem [shape: f32[32,32], index: 0, kind: input, shape index: {}]
  %s1 = inlined_call_operand.vmem [shape: f32[1,32], index: 1, kind: input, shape index: {}]
  %s2 = inlined_call_operand.vmem [shape: f32[1,32], index: 2, kind: input, shape index: {}]
  %s3 = inlined_call_operand.vmem [shape: f32[32,32], index: 3, kind: output, shape index: {}]
  %s4 = sld [smem:[#allocation0]]
  $region22: #{_conformer_forward_jit.36} parent=0
    _
  %s6 = ssub.s32 1, %s4
  %s7 = scalar_select 0, %s6, %s4
  // Predicated region
  $region2: #{_conformer_forward_jit.36} parent=0 // pred_check
    _
  $region3: #{_conformer_forward_jit.36} parent=0 // pred_check_branch
    %9 = sbr.rel (0) target = $region5
  $region4: #{_conformer_forward_jit.36} parent=0 // pred_region
    _
  $region5: #{_conformer_forward_jit.36} parent=0 // pred_fallthru
    _
  // Predicated region
  $region6: #{_conformer_forward_jit.36} parent=0 // pred_check
    _
  $region7: #{_conformer_forward_jit.36} parent=0 // pred_check_branch
    %11 = sbr.rel (0) target = $region9
  $region8: #{_conformer_forward_jit.36} parent=0 // pred_region
    _
  $region9: #{_conformer_forward_jit.36} parent=0 // pred_fallthru
    _
  // Predicated region
  $region10: #{_conformer_forward_jit.36} parent=0 // pred_check
    _
  $region11: #{_conformer_forward_jit.36} parent=0 // pred_check_branch
    %13 = sbr.rel (0) target = $region13
  $region12: #{_conformer_forward_jit.36} parent=0 // pred_region
    _
  $region13: #{_conformer_forward_jit.36} parent=0 // pred_fallthru
    _
  %v14 = vld [vmem:[%s0] sm:$0xff]
  %v15 = vld [vmem:[%s0 + $0x8] sm:$0xff]
  %v16 = vld [vmem:[%s0 + $0x10] sm:$0xff]
  %v17 = vld [vmem:[%s0 + $0x18] sm:$0xff]
  %v18 = vld [vmem:[%s1] sm:$0x1]
  %v19 = vld [vmem:[%s2] sm:$0x1]
  %vm20 = vcmask 261120
  %v21 = vsel %vm20, %v14, 0.0
  %22 = vadd.xlane.f32.xlu0 %v21
  %v23 = vpop.xlane.xlu0 %22
  %v24 = vsel %vm20, %v15, 0.0
  %25 = vadd.xlane.f32.xlu0 %v24
  %v26 = vpop.xlane.xlu0 %25
  %v27 = vsel %vm20, %v16, 0.0
  %28 = vadd.xlane.f32.xlu0 %v27
  %v29 = vpop.xlane.xlu0 %28
  %v30 = vsel %vm20, %v17, 0.0
  %31 = vadd.xlane.f32.xlu0 %v30
  %v32 = vpop.xlane.xlu0 %31
  %v33 = vrcp.pop 32.0
  %v34 = vmul.f32 %v23, %v33
  %v35 = vmul.f32 %v26, %v33
  %v36 = vmul.f32 %v29, %v33
  %v37 = vmul.f32 %v32, %v33
  %v38 = vsub.f32 %v14, %v34
  %v39 = vsub.f32 %v15, %v35
  %v40 = vsub.f32 %v16, %v36
  %v41 = vsub.f32 %v17, %v37
  %v42 = vmul.f32 %v38, %v38
  %v43 = vmul.f32 %v39, %v39
  %v44 = vmul.f32 %v40, %v40
  %v45 = vmul.f32 %v41, %v41
  %v46 = vsel %vm20, %v42, 0.0
  %47 = vadd.xlane.f32.xlu0 %v46
  %v48 = vpop.xlane.xlu0 %47
  %v49 = vsel %vm20, %v43, 0.0
  %50 = vadd.xlane.f32.xlu0 %v49
  %v51 = vpop.xlane.xlu0 %50
  %v52 = vsel %vm20, %v44, 0.0
  %53 = vadd.xlane.f32.xlu0 %v52
  %v54 = vpop.xlane.xlu0 %53
  %v55 = vsel %vm20, %v45, 0.0
  %56 = vadd.xlane.f32.xlu0 %v55
  %v57 = vpop.xlane.xlu0 %56
  %v58 = vmul.f32 %v48, %v33
  %v59 = vmul.f32 %v51, %v33
  %v60 = vmul.f32 %v54, %v33
  %v61 = vmul.f32 %v57, %v33
  %v62 = vadd.f32 %v58, 1e-05
  %v63 = vadd.f32 %v59, 1e-05
  %v64 = vadd.f32 %v60, 1e-05
  %v65 = vadd.f32 %v61, 1e-05
  %v66 = vrsqrt.pop %v62
  %v67 = vrsqrt.pop %v63
  %v68 = vrsqrt.pop %v64
  %v69 = vrsqrt.pop %v65
  %v70 = vmul.f32 %v38, %v66
  %v71 = vmul.f32 %v39, %v67
  %v72 = vmul.f32 %v40, %v68
  %v73 = vmul.f32 %v41, %v69
  %v75 = vlaneseq
  %v76 = vshrl.u32 %v75, 7
  %v77 = vsub.s32 0, %v76
  %v78 = vrot.slane %v18, %v77
  %v80 = vmul.f32 %v70, %v78
  %v81 = vmul.f32 %v71, %v78
  %v82 = vmul.f32 %v72, %v78
  %v83 = vmul.f32 %v73, %v78
  %v85 = vlaneseq
  %v86 = vshrl.u32 %v85, 7
  %v87 = vsub.s32 0, %v86
  %v88 = vrot.slane %v19, %v87
  %v90 = vadd.f32 %v80, %v88
  %v91 = vadd.f32 %v81, %v88
  %v92 = vadd.f32 %v82, %v88
  %v93 = vadd.f32 %v83, %v88
  %94 = vst.msk [vmem:[%s3] sm:$0xff] %vm20, %v90
  %95 = vst.msk [vmem:[%s3 + $0x8] sm:$0xff] %vm20, %v91
  %96 = vst.msk [vmem:[%s3 + $0x10] sm:$0xff] %vm20, %v92
  %97 = vst.msk [vmem:[%s3 + $0x18] sm:$0xff] %vm20, %v93
  // Predicated region
  $region14: #{_conformer_forward_jit.36} parent=0 // pred_check
    _
  $region15: #{_conformer_forward_jit.36} parent=0 // pred_check_branch
    %99 = sbr.rel (0) target = $region17
  $region16: #{_conformer_forward_jit.36} parent=0 // pred_region
    _
  $region17: #{_conformer_forward_jit.36} parent=0 // pred_fallthru
    _
  // Predicated region
  $region18: #{_conformer_forward_jit.36} parent=0 // pred_check
    _
  $region19: #{_conformer_forward_jit.36} parent=0 // pred_check_branch
    %101 = sbr.rel (0) target = $region21
  $region20: #{_conformer_forward_jit.36} parent=0 // pred_region
    _
  $region21: #{_conformer_forward_jit.36} parent=0 // pred_fallthru
    _

// kernel: _conformer_forward_jit.31
$region0: #{_conformer_forward_jit.31}
  #allocation0 [shape = 'u32[]', space=smem, size = 0x4, offset = 0x4, fixed_abs, tag = 'smem constant byte address 0x4 - core index']
  #allocation1 [shape = 'u32[144,128]{1,0:T(1,128)}', space=vmem, size = 0x12000, scoped, tag = 'internal scratch']
  %s0 = inlined_call_operand.vmem [shape: f32[32,32], index: 0, kind: input, shape index: {}]
  %s1 = inlined_call_operand.vmem [shape: f32[1,32], index: 1, kind: input, shape index: {}]
  %s2 = inlined_call_operand.vmem [shape: f32[1,32], index: 2, kind: input, shape index: {}]
  %s3 = inlined_call_operand.vmem [shape: bf16[32,32], index: 3, kind: input, shape index: {}]
  %s4 = inlined_call_operand.vmem [shape: f32[1,32], index: 4, kind: input, shape index: {}]
  %s5 = inlined_call_operand.vmem [shape: bf16[32,32], index: 5, kind: input, shape index: {}]
  %s6 = inlined_call_operand.vmem [shape: f32[1,32], index: 6, kind: input, shape index: {}]
  %s7 = inlined_call_operand.vmem [shape: bf16[32,32], index: 7, kind: output, shape index: {}]
  %s8 = sld [smem:[#allocation0]]
  $region38: #{_conformer_forward_jit.31} parent=0
    _
  %s10 = ssub.s32 1, %s8
  %s11 = scalar_select 0, %s10, %s8
  // Predicated region
  $region2: #{_conformer_forward_jit.31} parent=0 // pred_check
    _
  $region3: #{_conformer_forward_jit.31} parent=0 // pred_check_branch
    %13 = sbr.rel (0) target = $region5
  $region4: #{_conformer_forward_jit.31} parent=0 // pred_region
    _
  $region5: #{_conformer_forward_jit.31} parent=0 // pred_fallthru
    _
  // Predicated region
  $region6: #{_conformer_forward_jit.31} parent=0 // pred_check
    _
  $region7: #{_conformer_forward_jit.31} parent=0 // pred_check_branch
    %15 = sbr.rel (0) target = $region9
  $region8: #{_conformer_forward_jit.31} parent=0 // pred_region
    _
  $region9: #{_conformer_forward_jit.31} parent=0 // pred_fallthru
    _
  // Predicated region
  $region10: #{_conformer_forward_jit.31} parent=0 // pred_check
    _
  $region11: #{_conformer_forward_jit.31} parent=0 // pred_check_branch
    %17 = sbr.rel (0) target = $region13
  $region12: #{_conformer_forward_jit.31} parent=0 // pred_region
    _
  $region13: #{_conformer_forward_jit.31} parent=0 // pred_fallthru
    _
  // Predicated region
  $region14: #{_conformer_forward_jit.31} parent=0 // pred_check
    _
  $region15: #{_conformer_forward_jit.31} parent=0 // pred_check_branch
    %19 = sbr.rel (0) target = $region17
  $region16: #{_conformer_forward_jit.31} parent=0 // pred_region
    _
  $region17: #{_conformer_forward_jit.31} parent=0 // pred_fallthru
    _
  // Predicated region
  $region18: #{_conformer_forward_jit.31} parent=0 // pred_check
    _
  $region19: #{_conformer_forward_jit.31} parent=0 // pred_check_branch
    %21 = sbr.rel (0) target = $region21
  $region20: #{_conformer_forward_jit.31} parent=0 // pred_region
    _
  $region21: #{_conformer_forward_jit.31} parent=0 // pred_fallthru
    _
  // Predicated region
  $region22: #{_conformer_forward_jit.31} parent=0 // pred_check
    _
  $region23: #{_conformer_forward_jit.31} parent=0 // pred_check_branch
    %23 = sbr.rel (0) target = $region25
  $region24: #{_conformer_forward_jit.31} parent=0 // pred_region
    _
  $region25: #{_conformer_forward_jit.31} parent=0 // pred_fallthru
    _
  // Predicated region
  $region26: #{_conformer_forward_jit.31} parent=0 // pred_check
    _
  $region27: #{_conformer_forward_jit.31} parent=0 // pred_check_branch
    %25 = sbr.rel (0) target = $region29
  $region28: #{_conformer_forward_jit.31} parent=0 // pred_region
    _
  $region29: #{_conformer_forward_jit.31} parent=0 // pred_fallthru
    _
  %v27 = vld [vmem:[%s0] sm:$0xff]
  %v28 = vld [vmem:[%s0 + $0x8] sm:$0xff]
  %v29 = vld [vmem:[%s0 + $0x10] sm:$0xff]
  %v30 = vld [vmem:[%s0 + $0x18] sm:$0xff]
  %v31 = vld [vmem:[%s1] sm:$0x1]
  %v32 = vld [vmem:[%s2] sm:$0x1]
  %vm33 = vcmask 261120
  %v34 = vsel %vm33, %v27, 0.0
  %35 = vadd.xlane.f32.xlu0 %v34
  %v36 = vpop.xlane.xlu0 %35
  %v37 = vsel %vm33, %v28, 0.0
  %38 = vadd.xlane.f32.xlu0 %v37
  %v39 = vpop.xlane.xlu0 %38
  %v40 = vsel %vm33, %v29, 0.0
  %41 = vadd.xlane.f32.xlu0 %v40
  %v42 = vpop.xlane.xlu0 %41
  %v43 = vsel %vm33, %v30, 0.0
  %44 = vadd.xlane.f32.xlu0 %v43
  %v45 = vpop.xlane.xlu0 %44
  %v46 = vrcp.pop 32.0
  %v47 = vmul.f32 %v36, %v46
  %v48 = vmul.f32 %v39, %v46
  %v49 = vmul.f32 %v42, %v46
  %v50 = vmul.f32 %v45, %v46
  %v51 = vsub.f32 %v27, %v47
  %v52 = vsub.f32 %v28, %v48
  %v53 = vsub.f32 %v29, %v49
  %v54 = vsub.f32 %v30, %v50
  %v55 = vmul.f32 %v51, %v51
  %v56 = vmul.f32 %v52, %v52
  %v57 = vmul.f32 %v53, %v53
  %v58 = vmul.f32 %v54, %v54
  %v59 = vsel %vm33, %v55, 0.0
  %60 = vadd.xlane.f32.xlu0 %v59
  %v61 = vpop.xlane.xlu0 %60
  %v62 = vsel %vm33, %v56, 0.0
  %63 = vadd.xlane.f32.xlu0 %v62
  %v64 = vpop.xlane.xlu0 %63
  %v65 = vsel %vm33, %v57, 0.0
  %66 = vadd.xlane.f32.xlu0 %v65
  %v67 = vpop.xlane.xlu0 %66
  %v68 = vsel %vm33, %v58, 0.0
  %69 = vadd.xlane.f32.xlu0 %v68
  %v70 = vpop.xlane.xlu0 %69
  %v71 = vmul.f32 %v61, %v46
  %v72 = vmul.f32 %v64, %v46
  %v73 = vmul.f32 %v67, %v46
  %v74 = vmul.f32 %v70, %v46
  %v75 = vadd.f32 %v71, 1e-05
  %v76 = vadd.f32 %v72, 1e-05
  %v77 = vadd.f32 %v73, 1e-05
  %v78 = vadd.f32 %v74, 1e-05
  %v79 = vrsqrt.pop %v75
  %v80 = vrsqrt.pop %v76
  %v81 = vrsqrt.pop %v77
  %v82 = vrsqrt.pop %v78
  %v83 = vmul.f32 %v51, %v79
  %v84 = vmul.f32 %v52, %v80
  %v85 = vmul.f32 %v53, %v81
  %v86 = vmul.f32 %v54, %v82
  %v88 = vlaneseq
  %v89 = vshrl.u32 %v88, 7
  %v90 = vsub.s32 0, %v89
  %v91 = vrot.slane %v31, %v90
  %v93 = vmul.f32 %v83, %v91
  %v94 = vmul.f32 %v84, %v91
  %v95 = vmul.f32 %v85, %v91
  %v96 = vmul.f32 %v86, %v91
  %v98 = vlaneseq
  %v99 = vshrl.u32 %v98, 7
  %v100 = vsub.s32 0, %v99
  %v101 = vrot.slane %v32, %v100
  %v103 = vadd.f32 %v93, %v101
  %v104 = vadd.f32 %v94, %v101
  %v105 = vadd.f32 %v95, %v101
  %v106 = vadd.f32 %v96, %v101
  %v107 = vpack.c.bf16 %v104, %v103
  %v108 = vpack.c.bf16 %v106, %v105
  %v109 = vld [vmem:[%s3] sm:$0xf]
  %v110 = vld [vmem:[%s3 + $0x4] sm:$0xf]
  %v111 = vld [vmem:[%s3 + $0x8] sm:$0xf]
  %v112 = vld [vmem:[%s3 + $0xc] sm:$0xf]
  %v113 = vld [vmem:[%s4] sm:$0x1]
  %v115 = vlaneseq
  %v116 = vshrl.u32 %v115, 7
  %v117 = vsub.s32 0, %v116
  %v118 = vrot.slane %v113, %v117
  %v124 = vunpack.c.l.b16 %v109
  %v125 = vunpack.c.l.b16 %v110
  %v126 = vunpack.c.l.b16 %v111
  %v127 = vunpack.c.l.b16 %v112
  %v128 = vpack.c.b16 %v125, %v124
  %v129 = vpack.c.b16 %v127, %v126
  %v133 = vsel %vm33, %v107, 0
  %v136 = vsel %vm33, %v108, 0
  %138 = vmatprep.subr.bf16.mxu0 0
  %139 = vmatpush1.bf16.msra.mxu0 0
  %140 = vmatprep.subr.bf16.mxu0 0
  %141 = vmatpush1.bf16.msra.mxu0 0
  %142 = vmatprep.subr.bf16.mxu0 0
  %143 = vmatpush1.bf16.msra.mxu0 0
  %144 = vmatprep.subr.bf16.mxu0 0
  %145 = vmatpush1.bf16.msra.mxu0 0
  %146 = vmatprep.subr.bf16.mxu0 0
  %147 = vmatpush1.bf16.msra.mxu0 0
  %148 = vmatprep.subr.bf16.mxu0 0
  %149 = vmatpush1.bf16.msra.mxu0 0
  %150 = vmatprep.subr.bf16.mxu0 0
  %151 = vmatpush1.bf16.msra.mxu0 %v129
  %152 = vmatprep.subr.bf16.mxu0 0
  %153 = vmatpush1.bf16.msra.mxu0 %v128
  %154 = vmatprep.subr.bf16.mxu0 0
  %155 = vmatpush2.bf16.msra.mxu0 0
  %156 = vmatprep.subr.bf16.mxu0 0
  %157 = vmatpush2.bf16.msra.mxu0 0
  %158 = vmatprep.subr.bf16.mxu0 0
  %159 = vmatpush2.bf16.msra.mxu0 0
  %160 = vmatprep.subr.bf16.mxu0 0
  %161 = vmatpush2.bf16.msra.mxu0 0
  %162 = vmatprep.subr.bf16.mxu0 0
  %163 = vmatpush2.bf16.msra.mxu0 0
  %164 = vmatprep.subr.bf16.mxu0 0
  %165 = vmatpush2.bf16.msra.mxu0 0
  %166 = vmatprep.subr.bf16.mxu0 0
  %167 = vmatpush2.bf16.msra.mxu0 0
  %168 = vmatprep.subr.bf16.mxu0 0
  %169 = vmatpush2.bf16.msra.mxu0 0
  %170 = vmatprep.mubr.bf16.mxu0 0
  %171 = vmatmul.mubr.bf16.gmra.mxu0 %v133
  %v172 = vpop.f32.mrf.mxu0
  %v173 = vadd.f32 %v118, %v172
  %v174 = vpop.f32.mrf.mxu0
  %v175 = vpop.f32.mrf.mxu0
  %v176 = vadd.f32 %v118, %v175
  %v177 = vpop.f32.mrf.mxu0
  %178 = vmatprep.mubr.bf16.mxu0 0
  %179 = vmatmul.mubr.bf16.gmra.mxu0 %v136
  %v180 = vpop.f32.mrf.mxu0
  %v181 = vadd.f32 %v118, %v180
  %v182 = vpop.f32.mrf.mxu0
  %v183 = vpop.f32.mrf.mxu0
  %v184 = vadd.f32 %v118, %v183
  %v185 = vpop.f32.mrf.mxu0
  %186 = vdwg.mxu0
  %v187 = vld [vmem:[%s5] sm:$0xf]
  %v188 = vld [vmem:[%s5 + $0x4] sm:$0xf]
  %v189 = vld [vmem:[%s5 + $0x8] sm:$0xf]
  %v190 = vld [vmem:[%s5 + $0xc] sm:$0xf]
  %v191 = vld [vmem:[%s6] sm:$0x1]
  %v193 = vlaneseq
  %v194 = vshrl.u32 %v193, 7
  %v195 = vsub.s32 0, %v194
  %v196 = vrot.slane %v191, %v195
  %v202 = vunpack.c.l.b16 %v187
  %v203 = vunpack.c.l.b16 %v188
  %v204 = vunpack.c.l.b16 %v189
  %v205 = vunpack.c.l.b16 %v190
  %v206 = vpack.c.b16 %v203, %v202
  %v207 = vpack.c.b16 %v205, %v204
  %210 = vmatprep.subr.bf16.mxu0 0
  %211 = vmatpush1.bf16.msra.mxu0 0
  %212 = vmatprep.subr.bf16.mxu0 0
  %213 = vmatpush1.bf16.msra.mxu0 0
  %214 = vmatprep.subr.bf16.mxu0 0
  %215 = vmatpush1.bf16.msra.mxu0 0
  %216 = vmatprep.subr.bf16.mxu0 0
  %217 = vmatpush1.bf16.msra.mxu0 0
  %218 = vmatprep.subr.bf16.mxu0 0
  %219 = vmatpush1.bf16.msra.mxu0 0
  %220 = vmatprep.subr.bf16.mxu0 0
  %221 = vmatpush1.bf16.msra.mxu0 0
  %222 = vmatprep.subr.bf16.mxu0 0
  %223 = vmatpush1.bf16.msra.mxu0 %v207
  %224 = vmatprep.subr.bf16.mxu0 0
  %225 = vmatpush1.bf16.msra.mxu0 %v206
  %226 = vmatprep.subr.bf16.mxu0 0
  %227 = vmatpush2.bf16.msra.mxu0 0
  %228 = vmatprep.subr.bf16.mxu0 0
  %229 = vmatpush2.bf16.msra.mxu0 0
  %230 = vmatprep.subr.bf16.mxu0 0
  %231 = vmatpush2.bf16.msra.mxu0 0
  %232 = vmatprep.subr.bf16.mxu0 0
  %233 = vmatpush2.bf16.msra.mxu0 0
  %234 = vmatprep.subr.bf16.mxu0 0
  %235 = vmatpush2.bf16.msra.mxu0 0
  %236 = vmatprep.subr.bf16.mxu0 0
  %237 = vmatpush2.bf16.msra.mxu0 0
  %238 = vmatprep.subr.bf16.mxu0 0
  %239 = vmatpush2.bf16.msra.mxu0 0
  %240 = vmatprep.subr.bf16.mxu0 0
  %241 = vmatpush2.bf16.msra.mxu0 0
  %242 = vmatprep.mubr.bf16.mxu0 0
  %243 = vmatmul.mubr.bf16.gmra.mxu0 %v133
  %v244 = vpop.f32.mrf.mxu0
  %v245 = vadd.f32 %v196, %v244
  %v246 = vpop.f32.mrf.mxu0
  %v247 = vpop.f32.mrf.mxu0
  %v248 = vadd.f32 %v196, %v247
  %v249 = vpop.f32.mrf.mxu0
  %250 = vmatprep.mubr.bf16.mxu0 0
  %251 = vmatmul.mubr.bf16.gmra.mxu0 %v136
  %v252 = vpop.f32.mrf.mxu0
  %v253 = vadd.f32 %v196, %v252
  %v254 = vpop.f32.mrf.mxu0
  %v255 = vpop.f32.mrf.mxu0
  %v256 = vadd.f32 %v196, %v255
  %v257 = vpop.f32.mrf.mxu0
  %258 = vdwg.mxu0
  %v259 = vxor.u32 %v245, 2147483648
  %v260 = vxor.u32 %v248, 2147483648
  %v261 = vxor.u32 %v253, 2147483648
  %v262 = vxor.u32 %v256, 2147483648
  %v263 = vmul.f32 %v259, 1.442695
  %v264 = vpow.pop %v263
  %v265 = vmul.f32 %v260, 1.442695
  %v266 = vpow.pop %v265
  %v267 = vmul.f32 %v261, 1.442695
  %v268 = vpow.pop %v267
  %v269 = vmul.f32 %v262, 1.442695
  %v270 = vpow.pop %v269
  %v271 = vadd.f32 %v264, 1.0
  %v272 = vadd.f32 %v266, 1.0
  %v273 = vadd.f32 %v268, 1.0
  %v274 = vadd.f32 %v270, 1.0
  %v275 = vrcp.pop %v271
  %v276 = vmul.f32 1.0, %v275
  %v277 = vrcp.pop %v272
  %v278 = vmul.f32 1.0, %v277
  %v279 = vrcp.pop %v273
  %v280 = vmul.f32 1.0, %v279
  %v281 = vrcp.pop %v274
  %v282 = vmul.f32 1.0, %v281
  %v283 = vmul.f32 %v173, %v276
  %v284 = vmul.f32 %v176, %v278
  %v285 = vmul.f32 %v181, %v280
  %v286 = vmul.f32 %v184, %v282
  %v287 = vpack.c.bf16 %v284, %v283
  %v288 = vpack.c.bf16 %v286, %v285
  %v291 = vunpack.c.l.b16 %v287
  %v292 = vunpack.c.h.b16 %v287
  %v293 = vunpack.c.l.b16 %v288
  %v294 = vunpack.c.h.b16 %v288
  %v295 = vpack.c.b16 %v291, %v291
  %v296 = vpack.c.b16 %v292, %v292
  %v297 = vpack.c.b16 %v293, %v293
  %v298 = vpack.c.b16 %v294, %v294
  %vm303 = vcmask 257024
  %304 = vst.msk [vmem:[%s7] sm:$0xf] %vm303, %v295
  %305 = vst.msk [vmem:[%s7 + $0x4] sm:$0xf] %vm303, %v296
  %306 = vst.msk [vmem:[%s7 + $0x8] sm:$0xf] %vm303, %v297
  %307 = vst.msk [vmem:[%s7 + $0xc] sm:$0xf] %vm303, %v298
  // Predicated region
  $region30: #{_conformer_forward_jit.31} parent=0 // pred_check
    _
  $region31: #{_conformer_forward_jit.31} parent=0 // pred_check_branch
    %309 = sbr.rel (0) target = $region33
  $region32: #{_conformer_forward_jit.31} parent=0 // pred_region
    _
  $region33: #{_conformer_forward_jit.31} parent=0 // pred_fallthru
    _
  // Predicated region
  $region34: #{_conformer_forward_jit.31} parent=0 // pred_check
    _
  $region35: #{_conformer_forward_jit.31} parent=0 // pred_check_branch
    %311 = sbr.rel (0) target = $region37
  $region36: #{_conformer_forward_jit.31} parent=0 // pred_region
    _
  $region37: #{_conformer_forward_jit.31} parent=0 // pred_fallthru
    _

// kernel: _conformer_forward_jit.32
$region0: #{_conformer_forward_jit.32}
  #allocation0 [shape = 'u32[]', space=smem, size = 0x4, offset = 0x4, fixed_abs, tag = 'smem constant byte address 0x4 - core index']
  #allocation1 [shape = 'u32[144,128]{1,0:T(1,128)}', space=vmem, size = 0x12000, scoped, tag = 'internal scratch']
  %s0 = inlined_call_operand.vmem [shape: bf16[2,18,32], index: 0, kind: input, shape index: {}]
  %s1 = inlined_call_operand.vmem [shape: f32[3,32], index: 1, kind: input, shape index: {}]
  %s2 = inlined_call_operand.vmem [shape: f32[1,32], index: 2, kind: input, shape index: {}]
  %s3 = inlined_call_operand.vmem [shape: f32[1,32], index: 3, kind: input, shape index: {}]
  %s4 = inlined_call_operand.vmem [shape: f32[1,32], index: 4, kind: input, shape index: {}]
  %s5 = inlined_call_operand.vmem [shape: bf16[2,16,32], index: 5, kind: output, shape index: {}]
  %s6 = sld [smem:[#allocation0]]
  $region53: #{_conformer_forward_jit.32} parent=0
    _
  %s8 = ssub.s32 1, %s6
  %s9 = scalar_select 0, %s8, %s6
  loop: start=0, step=1, limit=4
  $region2: #{_conformer_forward_jit.32} parent=0 // loop_pre_header
    _
  $region3: #{_conformer_forward_jit.32} parent=0 // loop_header
    %s11 = sphi 0, %s15
    %p12 = scmp.ge.s32.totalorder %s11, 4
    %s21 = sphi 0, %s23
    %s24 = sphi 0, %s21
    %s25 = sphi 0, %s24
    %s41 = sphi 0, %s25
    %s45 = sphi 0, %s45
    %s47 = sphi 0, %s45
    %s48 = sphi 0, %s47
    %s62 = sphi 0, %s48
    %s66 = sphi 0, %s66
    %s68 = sphi 0, %s66
    %s69 = sphi 0, %s68
    %s83 = sphi 0, %s69
    %s87 = sphi 0, %s87
    %s89 = sphi 0, %s87
    %s90 = sphi 0, %s89
    %s104 = sphi 0, %s90
    %s108 = sphi 0, %s108
    %s110 = sphi 0, %s108
    %s111 = sphi 0, %s110
    %s125 = sphi 0, %s111
    %s131 = sphi 0, %s133
    %s134 = sphi 0, %s131
    %s135 = sphi 0, %s134
    %s151 = sphi 0, %s135
  $region4: #{_conformer_forward_jit.32} parent=0 // loop_header_branch
    %14 = sbr.rel (%p12) target = $region8
  $region5: #{_conformer_forward_jit.32} parent=0 // loop_body
    %s16 = ssub.s32 %s11, 1
    %s17 = ssub.s32 %s11, 2
    %s18 = sadd.s32 %s11, 1
    %s19 = ssub.s32 %s11, %s18
    %p20 = scmp.eq.s32.totalorder %s19, 0
    %s22 = sadd.s32 %s21, 1
    %s23 = scalar_select %p20, %s21, %s22
    %p26 = pneg %p20
    %p27 = scmp.eq.s32.totalorder %s11, 1
    %p28 = por %p26, %p27
    %p29 = scmp.ne.s32.totalorder %s21, %s24
    %p30 = scmp.eq.s32.totalorder %s11, 0
    %p31 = por %p29, %p30
    %p32 = scmp.ne.s32.totalorder %s21, %s24
    %p33 = scmp.eq.s32.totalorder %s16, 1
    %p34 = por %p32, %p33
    %p35 = scmp.ne.s32.totalorder %s24, %s25
    %p36 = scmp.eq.s32.totalorder %s16, 0
    %p37 = por %p35, %p36
    %p38 = scmp.ne.s32.totalorder %s24, %s25
    %p39 = scmp.eq.s32.totalorder %s17, 1
    %p40 = por %p38, %p39
    %p42 = scmp.ne.s32.totalorder %s25, %s41
    %p43 = scmp.eq.s32.totalorder %s17, 0
    %p44 = por %p42, %p43
    %s46 = sadd.s32 %s45, 1
    %p49 = scmp.eq.s32.totalorder %s11, 1
    %p50 = scmp.ne.s32.totalorder %s45, %s47
    %p51 = scmp.eq.s32.totalorder %s11, 0
    %p52 = por %p50, %p51
    %p53 = scmp.ne.s32.totalorder %s45, %s47
    %p54 = scmp.eq.s32.totalorder %s16, 1
    %p55 = por %p53, %p54
    %p56 = scmp.ne.s32.totalorder %s47, %s48
    %p57 = scmp.eq.s32.totalorder %s16, 0
    %p58 = por %p56, %p57
    %p59 = scmp.ne.s32.totalorder %s47, %s48
    %p60 = scmp.eq.s32.totalorder %s17, 1
    %p61 = por %p59, %p60
    %p63 = scmp.ne.s32.totalorder %s48, %s62
    %p64 = scmp.eq.s32.totalorder %s17, 0
    %p65 = por %p63, %p64
    %s67 = sadd.s32 %s66, 1
    %p70 = scmp.eq.s32.totalorder %s11, 1
    %p71 = scmp.ne.s32.totalorder %s66, %s68
    %p72 = scmp.eq.s32.totalorder %s11, 0
    %p73 = por %p71, %p72
    %p74 = scmp.ne.s32.totalorder %s66, %s68
    %p75 = scmp.eq.s32.totalorder %s16, 1
    %p76 = por %p74, %p75
    %p77 = scmp.ne.s32.totalorder %s68, %s69
    %p78 = scmp.eq.s32.totalorder %s16, 0
    %p79 = por %p77, %p78
    %p80 = scmp.ne.s32.totalorder %s68, %s69
    %p81 = scmp.eq.s32.totalorder %s17, 1
    %p82 = por %p80, %p81
    %p84 = scmp.ne.s32.totalorder %s69, %s83
    %p85 = scmp.eq.s32.totalorder %s17, 0
    %p86 = por %p84, %p85
    %s88 = sadd.s32 %s87, 1
    %p91 = scmp.eq.s32.totalorder %s11, 1
    %p92 = scmp.ne.s32.totalorder %s87, %s89
    %p93 = scmp.eq.s32.totalorder %s11, 0
    %p94 = por %p92, %p93
    %p95 = scmp.ne.s32.totalorder %s87, %s89
    %p96 = scmp.eq.s32.totalorder %s16, 1
    %p97 = por %p95, %p96
    %p98 = scmp.ne.s32.totalorder %s89, %s90
    %p99 = scmp.eq.s32.totalorder %s16, 0
    %p100 = por %p98, %p99
    %p101 = scmp.ne.s32.totalorder %s89, %s90
    %p102 = scmp.eq.s32.totalorder %s17, 1
    %p103 = por %p101, %p102
    %p105 = scmp.ne.s32.totalorder %s90, %s104
    %p106 = scmp.eq.s32.totalorder %s17, 0
    %p107 = por %p105, %p106
    %s109 = sadd.s32 %s108, 1
    %p112 = scmp.eq.s32.totalorder %s11, 1
    %p113 = scmp.ne.s32.totalorder %s108, %s110
    %p114 = scmp.eq.s32.totalorder %s11, 0
    %p115 = por %p113, %p114
    %p116 = scmp.ne.s32.totalorder %s108, %s110
    %p117 = scmp.eq.s32.totalorder %s16, 1
    %p118 = por %p116, %p117
    %p119 = scmp.ne.s32.totalorder %s110, %s111
    %p120 = scmp.eq.s32.totalorder %s16, 0
    %p121 = por %p119, %p120
    %p122 = scmp.ne.s32.totalorder %s110, %s111
    %p123 = scmp.eq.s32.totalorder %s17, 1
    %p124 = por %p122, %p123
    %p126 = scmp.ne.s32.totalorder %s111, %s125
    %p127 = scmp.eq.s32.totalorder %s17, 0
    %p128 = por %p126, %p127
    %s129 = ssub.s32 %s11, %s18
    %p130 = scmp.eq.s32.totalorder %s129, 0
    %s132 = sadd.s32 %s131, 1
    %s133 = scalar_select %p130, %s131, %s132
    %p136 = pneg %p130
    %p137 = scmp.eq.s32.totalorder %s11, 1
    %p138 = por %p136, %p137
    %p139 = scmp.ne.s32.totalorder %s131, %s134
    %p140 = scmp.eq.s32.totalorder %s11, 0
    %p141 = por %p139, %p140
    %p142 = scmp.ne.s32.totalorder %s131, %s134
    %p143 = scmp.eq.s32.totalorder %s16, 1
    %p144 = por %p142, %p143
    %p145 = scmp.ne.s32.totalorder %s134, %s135
    %p146 = scmp.eq.s32.totalorder %s16, 0
    %p147 = por %p145, %p146
    %p148 = scmp.ne.s32.totalorder %s134, %s135
    %p149 = scmp.eq.s32.totalorder %s17, 1
    %p150 = por %p148, %p149
    %p152 = scmp.ne.s32.totalorder %s135, %s151
    %p153 = scmp.eq.s32.totalorder %s17, 0
    %p154 = por %p152, %p153
    %p155 = scmp.le.s32.totalorder 1, %s11
    %p156 = scmp.lt.s32.totalorder %s11, 3
    %p157 = pnand %p155, %p156
    %p158 = pneg %p157
    // Predicated region
    $region9: #{_conformer_forward_jit.32} parent=5 // pred_check
      _
    $region10: #{_conformer_forward_jit.32} parent=5 // pred_check_branch
      %160 = sbr.rel (%p157) target = $region12
    $region11: #{_conformer_forward_jit.32} parent=5 // pred_region
      %s161 = ssub.s32 %s11, 1
      // Predicated region
      $region13: #{_conformer_forward_jit.32} parent=11 // pred_check
        %p162 = pneg %p58
      $region14: #{_conformer_forward_jit.32} parent=11 // pred_check_branch
        %164 = sbr.rel (%p162) target = $region16
      $region15: #{_conformer_forward_jit.32} parent=11 // pred_region
        _
      $region16: #{_conformer_forward_jit.32} parent=11 // pred_fallthru
        _
      // Predicated region
      $region17: #{_conformer_forward_jit.32} parent=11 // pred_check
        %p165 = pneg %p79
      $region18: #{_conformer_forward_jit.32} parent=11 // pred_check_branch
        %167 = sbr.rel (%p165) target = $region20
      $region19: #{_conformer_forward_jit.32} parent=11 // pred_region
        _
      $region20: #{_conformer_forward_jit.32} parent=11 // pred_fallthru
        _
      // Predicated region
      $region21: #{_conformer_forward_jit.32} parent=11 // pred_check
        %p168 = pneg %p100
      $region22: #{_conformer_forward_jit.32} parent=11 // pred_check_branch
        %170 = sbr.rel (%p168) target = $region24
      $region23: #{_conformer_forward_jit.32} parent=11 // pred_region
        _
      $region24: #{_conformer_forward_jit.32} parent=11 // pred_fallthru
        _
      // Predicated region
      $region25: #{_conformer_forward_jit.32} parent=11 // pred_check
        %p171 = pneg %p121
      $region26: #{_conformer_forward_jit.32} parent=11 // pred_check_branch
        %173 = sbr.rel (%p171) target = $region28
      $region27: #{_conformer_forward_jit.32} parent=11 // pred_region
        _
      $region28: #{_conformer_forward_jit.32} parent=11 // pred_fallthru
        _
    $region12: #{_conformer_forward_jit.32} parent=5 // pred_fallthru
      _
    %p174 = scmp.lt.s32.totalorder %s11, 2
    // Predicated region
    $region29: #{_conformer_forward_jit.32} parent=5 // pred_check
      %p175 = pneg %p174
    $region30: #{_conformer_forward_jit.32} parent=5 // pred_check_branch
      %177 = sbr.rel (%p175) target = $region32
    $region31: #{_conformer_forward_jit.32} parent=5 // pred_region
      // Predicated region
      $region33: #{_conformer_forward_jit.32} parent=31 // pred_check
        %p178 = pneg %p31
      $region34: #{_conformer_forward_jit.32} parent=31 // pred_check_branch
        %180 = sbr.rel (%p178) target = $region36
      $region35: #{_conformer_forward_jit.32} parent=31 // pred_region
        %p181 = scmp.lt.s32.totalorder %s11, 1
        %s182 = scalar_select %p181, %s11, 1
        %s183 = smul.addr %s182, 3
        %s184 = smul.addr %s183, 4
        %s185 = scalar_lea.vmem %s0, %s184
      $region36: #{_conformer_forward_jit.32} parent=31 // pred_fallthru
        _
    $region32: #{_conformer_forward_jit.32} parent=5 // pred_fallthru
      _
    %p186 = scmp.le.s32.totalorder 1, %s11
    %p187 = scmp.lt.s32.totalorder %s11, 3
    %p188 = pnand %p186, %p187
    %p189 = pneg %p188
    // Predicated region
    $region37: #{_conformer_forward_jit.32} parent=5 // pred_check
      _
    $region38: #{_conformer_forward_jit.32} parent=5 // pred_check_branch
      %191 = sbr.rel (%p188) target = $region40
    $region39: #{_conformer_forward_jit.32} parent=5 // pred_region
      %s192 = ssub.s32 %s11, 1
      %p193 = scmp.lt.s32.totalorder %s16, 1
      %s194 = scalar_select %p193, %s16, 1
      %s195 = smul.addr %s194, 3
      %s196 = smul.addr %s195, 4
      %s197 = scalar_lea.vmem %s0, %s196
      %p198 = pneg %p37
      %p199 = pneg %p34
      %p200 = pneg %p58
      %p201 = pneg %p55
      %p202 = pneg %p79
      %p203 = pneg %p76
      %p204 = pneg %p100
      %p205 = pneg %p97
      %p206 = pneg %p121
      %p207 = pneg %p118
      %p208 = pneg %p147
      %p209 = pneg %p144
      %p210 = scmp.lt.s32.totalorder %s16, 1
      %s211 = scalar_select %p210, %s16, 1
      %s212 = smul.addr %s211, 2
      %s213 = smul.addr %s212, 4
      %s214 = scalar_lea.vmem %s5, %s213
      %p215 = scmp.lt.s32.totalorder %s16, 1
      %s216 = scalar_select %p215, %s16, 1
      %s217 = smul.addr %s216, 3
      %s218 = smul.addr %s217, 4
      %s219 = scalar_lea.vmem %s0, %s218
      %p220 = scmp.lt.s32.totalorder %s16, 1
      %s221 = scalar_select %p220, %s16, 1
      %s222 = smul.addr %s221, 2
      %s223 = smul.addr %s222, 4
      %s224 = scalar_lea.vmem %s5, %s223
      %v225 = vld [vmem:[%s1] sm:$0x7]
      %v226 = vld [vmem:[%s219] sm:$0xf]
      %v227 = vld [vmem:[%s219 + $0x4] sm:$0xf]
      %v228 = vunpack.c.l.bf16 %v226
      %v229 = vunpack.c.l.bf16 %v227
      %v230 = vlaneseq
      %v231 = vshrl.u32 %v230, 7
      %v232 = vsub.s32 0, %v231
      %v233 = vrot.slane %v225, %v232
      %v234 = vmul.f32 %v228, %v233
      %v235 = vmul.f32 %v229, %v233
      %v236 = vadd.f32 %v234, 0.0
      %v237 = vadd.f32 %v235, 0.0
      %v238 = vld [vmem:[%s219 + $0x8] sm:$0x1]
      %v239 = vunpack.c.l.bf16 %v238
      %v240 = vlaneseq
      %v241 = vshrl.u32 %v240, 7
      %v242 = vsub.s32 1, %v241
      %v243 = vrot.slane %v225, %v242
      %v244 = vmul.f32 %v228, %v243
      %v245 = vmul.f32 %v229, %v243
      %v246 = vmul.f32 %v239, %v243
      %vm250 = vcmask 1046528
      %v251 = vrot.slane %v244, 1
      %v252 = vrot.slane %v245, 1
      %v253 = vsel %vm250, %v251, %v252
      %v254 = vrot.slane %v246, 1
      %v255 = vsel %vm250, %v252, %v254
      %v258 = vadd.f32 %v236, %v253
      %v259 = vadd.f32 %v237, %v255
      %v260 = vld [vmem:[%s219] sm:$0xe]
      %v261 = vunpack.c.l.bf16 %v260
      %v262 = vlaneseq
      %v263 = vshrl.u32 %v262, 7
      %v264 = vsub.s32 2, %v263
      %v265 = vrot.slane %v225, %v264
      %v266 = vmul.f32 %v261, %v265
      %v267 = vmul.f32 %v229, %v265
      %v268 = vmul.f32 %v239, %v265
      %vm272 = vcmask 1045504
      %v273 = vrot.slane %v266, 2
      %v274 = vrot.slane %v267, 2
      %v275 = vsel %vm272, %v273, %v274
      %v276 = vrot.slane %v268, 2
      %v277 = vsel %vm272, %v274, %v276
      %v280 = vadd.f32 %v258, %v275
      %v281 = vadd.f32 %v259, %v277
      %v282 = vld [vmem:[%s2] sm:$0x1]
      %v284 = vlaneseq
      %v285 = vshrl.u32 %v284, 7
      %v286 = vsub.s32 0, %v285
      %v287 = vrot.slane %v282, %v286
      %v289 = vadd.f32 %v280, %v287
      %v290 = vadd.f32 %v281, %v287
      %v291 = vld [vmem:[%s3] sm:$0x1]
      %v293 = vlaneseq
      %v294 = vshrl.u32 %v293, 7
      %v295 = vsub.s32 0, %v294
      %v296 = vrot.slane %v291, %v295
      %v298 = vmul.f32 %v289, %v296
      %v299 = vmul.f32 %v290, %v296
      %v300 = vld [vmem:[%s4] sm:$0x1]
      %v302 = vlaneseq
      %v303 = vshrl.u32 %v302, 7
      %v304 = vsub.s32 0, %v303
      %v305 = vrot.slane %v300, %v304
      %v307 = vadd.f32 %v298, %v305
      %v308 = vadd.f32 %v299, %v305
      %v309 = vxor.u32 %v307, 2147483648
      %v310 = vxor.u32 %v308, 2147483648
      %v311 = vmul.f32 %v309, 1.442695
      %v312 = vpow.pop %v311
      %v313 = vmul.f32 %v310, 1.442695
      %v314 = vpow.pop %v313
      %v315 = vadd.f32 %v312, 1.0
      %v316 = vadd.f32 %v314, 1.0
      %v317 = vrcp.pop %v315
      %v318 = vmul.f32 1.0, %v317
      %v319 = vrcp.pop %v316
      %v320 = vmul.f32 1.0, %v319
      %v321 = vmul.f32 %v307, %v318
      %v322 = vmul.f32 %v308, %v320
      %v323 = vpack.c.bf16 %v322, %v321
      %v325 = vunpack.c.l.b16 %v323
      %v326 = vunpack.c.h.b16 %v323
      %v327 = vpack.c.b16 %v325, %v325
      %v328 = vpack.c.b16 %v326, %v326
      %vm331 = vcmask 257024
      %332 = vst.msk [vmem:[%s224] sm:$0xf] %vm331, %v327
      %333 = vst.msk [vmem:[%s224 + $0x4] sm:$0xf] %vm331, %v328
      %p334 = scmp.lt.s32.totalorder %s16, 1
      %s335 = scalar_select %p334, %s16, 1
      %s336 = smul.addr %s335, 2
      %s337 = smul.addr %s336, 4
      %s338 = scalar_lea.vmem %s5, %s337
      // Predicated region
      $region41: #{_conformer_forward_jit.32} parent=39 // pred_check
        %p339 = pneg %p144
      $region42: #{_conformer_forward_jit.32} parent=39 // pred_check_branch
        %341 = sbr.rel (%p339) target = $region44
      $region43: #{_conformer_forward_jit.32} parent=39 // pred_region
        _
      $region44: #{_conformer_forward_jit.32} parent=39 // pred_fallthru
        _
    $region40: #{_conformer_forward_jit.32} parent=5 // pred_fallthru
      _
    %p342 = scmp.le.s32.totalorder 2, %s11
    // Predicated region
    $region45: #{_conformer_forward_jit.32} parent=5 // pred_check
      %p343 = pneg %p342
    $region46: #{_conformer_forward_jit.32} parent=5 // pred_check_branch
      %345 = sbr.rel (%p343) target = $region48
    $region47: #{_conformer_forward_jit.32} parent=5 // pred_region
      %s346 = ssub.s32 %s11, 2
      // Predicated region
      $region49: #{_conformer_forward_jit.32} parent=47 // pred_check
        %p347 = pneg %p150
      $region50: #{_conformer_forward_jit.32} parent=47 // pred_check_branch
        %349 = sbr.rel (%p347) target = $region52
      $region51: #{_conformer_forward_jit.32} parent=47 // pred_region
        %p350 = scmp.lt.s32.totalorder %s17, 1
        %s351 = scalar_select %p350, %s17, 1
        %s352 = smul.addr %s351, 2
        %s353 = smul.addr %s352, 4
        %s354 = scalar_lea.vmem %s5, %s353
      $region52: #{_conformer_forward_jit.32} parent=47 // pred_fallthru
        _
    $region48: #{_conformer_forward_jit.32} parent=5 // pred_fallthru
      _
  $region6: #{_conformer_forward_jit.32} parent=0 // loop_footer
    %s15 = sadd.s32 1, %s11
  $region7: #{_conformer_forward_jit.32} parent=0 // loop_footer_branch
    %10 = sbr.rel target = $region3
  $region8: #{_conformer_forward_jit.32} parent=0 // loop_exit
    _

// kernel: _conformer_forward_jit.47
$region0: #{_conformer_forward_jit.47}
  #allocation0 [shape = 'u32[]', space=smem, size = 0x4, offset = 0x4, fixed_abs, tag = 'smem constant byte address 0x4 - core index']
  #allocation1 [shape = 'u32[144,128]{1,0:T(1,128)}', space=vmem, size = 0x12000, scoped, tag = 'internal scratch']
  %s0 = inlined_call_operand.vmem [shape: f32[32,32], index: 0, kind: input, shape index: {}]
  %s1 = inlined_call_operand.vmem [shape: f32[1,32], index: 1, kind: input, shape index: {}]
  %s2 = inlined_call_operand.vmem [shape: f32[1,32], index: 2, kind: input, shape index: {}]
  %s3 = inlined_call_operand.hbm [shape: f32[32,32], index: 3, kind: output, shape index: {}]
  %s4 = sld [smem:[#allocation0]]
  $region22: #{_conformer_forward_jit.47} parent=0
    _
  %s6 = ssub.s32 1, %s4
  %s7 = scalar_select 0, %s6, %s4
  $region1: #{_conformer_forward_jit.47} parent=0
    #allocation2 [shape = 'u8[16384]{0}', space=vmem, size = 0x4000, scoped, tag = 'output window, operand 0, single buffered']
    #allocation3 [shape = 's32[1]{0}', space=sflag, size = 0x4, scoped, tag = 'scoped memory for _conformer_forward_jit.47']
    %8 = vsyncpa [#allocation3], 0
    // Predicated region
    $region2: #{_conformer_forward_jit.47} parent=1 // pred_check
      _
    $region3: #{_conformer_forward_jit.47} parent=1 // pred_check_branch
      %10 = sbr.rel (0) target = $region5
    $region4: #{_conformer_forward_jit.47} parent=1 // pred_region
      _
    $region5: #{_conformer_forward_jit.47} parent=1 // pred_fallthru
      _
    // Predicated region
    $region6: #{_conformer_forward_jit.47} parent=1 // pred_check
      _
    $region7: #{_conformer_forward_jit.47} parent=1 // pred_check_branch
      %12 = sbr.rel (0) target = $region9
    $region8: #{_conformer_forward_jit.47} parent=1 // pred_region
      _
    $region9: #{_conformer_forward_jit.47} parent=1 // pred_fallthru
      _
    // Predicated region
    $region10: #{_conformer_forward_jit.47} parent=1 // pred_check
      _
    $region11: #{_conformer_forward_jit.47} parent=1 // pred_check_branch
      %14 = sbr.rel (0) target = $region13
    $region12: #{_conformer_forward_jit.47} parent=1 // pred_region
      _
    $region13: #{_conformer_forward_jit.47} parent=1 // pred_fallthru
      _
    %v15 = vld [vmem:[%s0] sm:$0xff]
    %v16 = vld [vmem:[%s0 + $0x8] sm:$0xff]
    %v17 = vld [vmem:[%s0 + $0x10] sm:$0xff]
    %v18 = vld [vmem:[%s0 + $0x18] sm:$0xff]
    %v19 = vld [vmem:[%s1] sm:$0x1]
    %v20 = vld [vmem:[%s2] sm:$0x1]
    %vm21 = vcmask 261120
    %v22 = vsel %vm21, %v15, 0.0
    %23 = vadd.xlane.f32.xlu0 %v22
    %v24 = vpop.xlane.xlu0 %23
    %v25 = vsel %vm21, %v16, 0.0
    %26 = vadd.xlane.f32.xlu0 %v25
    %v27 = vpop.xlane.xlu0 %26
    %v28 = vsel %vm21, %v17, 0.0
    %29 = vadd.xlane.f32.xlu0 %v28
    %v30 = vpop.xlane.xlu0 %29
    %v31 = vsel %vm21, %v18, 0.0
    %32 = vadd.xlane.f32.xlu0 %v31
    %v33 = vpop.xlane.xlu0 %32
    %v34 = vrcp.pop 32.0
    %v35 = vmul.f32 %v24, %v34
    %v36 = vmul.f32 %v27, %v34
    %v37 = vmul.f32 %v30, %v34
    %v38 = vmul.f32 %v33, %v34
    %v39 = vsub.f32 %v15, %v35
    %v40 = vsub.f32 %v16, %v36
    %v41 = vsub.f32 %v17, %v37
    %v42 = vsub.f32 %v18, %v38
    %v43 = vmul.f32 %v39, %v39
    %v44 = vmul.f32 %v40, %v40
    %v45 = vmul.f32 %v41, %v41
    %v46 = vmul.f32 %v42, %v42
    %v47 = vsel %vm21, %v43, 0.0
    %48 = vadd.xlane.f32.xlu0 %v47
    %v49 = vpop.xlane.xlu0 %48
    %v50 = vsel %vm21, %v44, 0.0
    %51 = vadd.xlane.f32.xlu0 %v50
    %v52 = vpop.xlane.xlu0 %51
    %v53 = vsel %vm21, %v45, 0.0
    %54 = vadd.xlane.f32.xlu0 %v53
    %v55 = vpop.xlane.xlu0 %54
    %v56 = vsel %vm21, %v46, 0.0
    %57 = vadd.xlane.f32.xlu0 %v56
    %v58 = vpop.xlane.xlu0 %57
    %v59 = vmul.f32 %v49, %v34
    %v60 = vmul.f32 %v52, %v34
    %v61 = vmul.f32 %v55, %v34
    %v62 = vmul.f32 %v58, %v34
    %v63 = vadd.f32 %v59, 1e-05
    %v64 = vadd.f32 %v60, 1e-05
    %v65 = vadd.f32 %v61, 1e-05
    %v66 = vadd.f32 %v62, 1e-05
    %v67 = vrsqrt.pop %v63
    %v68 = vrsqrt.pop %v64
    %v69 = vrsqrt.pop %v65
    %v70 = vrsqrt.pop %v66
    %v71 = vmul.f32 %v39, %v67
    %v72 = vmul.f32 %v40, %v68
    %v73 = vmul.f32 %v41, %v69
    %v74 = vmul.f32 %v42, %v70
    %v76 = vlaneseq
    %v77 = vshrl.u32 %v76, 7
    %v78 = vsub.s32 0, %v77
    %v79 = vrot.slane %v19, %v78
    %v81 = vmul.f32 %v71, %v79
    %v82 = vmul.f32 %v72, %v79
    %v83 = vmul.f32 %v73, %v79
    %v84 = vmul.f32 %v74, %v79
    %v86 = vlaneseq
    %v87 = vshrl.u32 %v86, 7
    %v88 = vsub.s32 0, %v87
    %v89 = vrot.slane %v20, %v88
    %v91 = vadd.f32 %v81, %v89
    %v92 = vadd.f32 %v82, %v89
    %v93 = vadd.f32 %v83, %v89
    %v94 = vadd.f32 %v84, %v89
    %95 = vst.msk [vmem:[#allocation2] sm:$0xff] %vm21, %v91
    %96 = vst.msk [vmem:[#allocation2 + $0x8] sm:$0xff] %vm21, %v92
    %97 = vst.msk [vmem:[#allocation2 + $0x10] sm:$0xff] %vm21, %v93
    %98 = vst.msk [vmem:[#allocation2 + $0x18] sm:$0xff] %vm21, %v94
    // Predicated region
    $region14: #{_conformer_forward_jit.47} parent=1 // pred_check
      _
    $region15: #{_conformer_forward_jit.47} parent=1 // pred_check_branch
      %100 = sbr.rel (0) target = $region17
    $region16: #{_conformer_forward_jit.47} parent=1 // pred_region
      %s102 = ssub.s32 512, 512
      %103 = vsyncadd [#allocation3], %s102
      %s104 = sshll.u32 [#allocation2], 4
      %s105 = int_to_ptr.vmem [resolvable:$true] %s104
      %110 = dma.vmem_to_hbm [thread:$0]  %s105, 512, %s3, [#allocation3], 128, 128, 8
    $region17: #{_conformer_forward_jit.47} parent=1 // pred_fallthru
      _
    // Predicated region
    $region18: #{_conformer_forward_jit.47} parent=1 // pred_check
      _
    $region19: #{_conformer_forward_jit.47} parent=1 // pred_check_branch
      %112 = sbr.rel (0) target = $region21
    $region20: #{_conformer_forward_jit.47} parent=1 // pred_region
      %113 = dma.done [#allocation3], 512
    $region21: #{_conformer_forward_jit.47} parent=1 // pred_fallthru
      _
    %114 = vsyncpa [#allocation3], 1

</llo_original>
